<compile_context>
chip_gen: v7x
topology: tpu7x:2x2x1
jax: 0.10.0
libtpu: 0.0.40
codegen_flags: <defaults>
</compile_context>

<pallas_src>
import jax
import jax.numpy as jnp
from jax.experimental import pallas as pl
from jax.experimental.pallas import tpu as pltpu


def _se_gate_pointwise_conv_kernel(gate_ref, x_ref, w_ref, o_ref):
    # gate_ref: (1, 1, C)    f32  lane-major pre-sigmoid gate for this sample
    # x_ref:    (1, C, P)    f32  channel-major activations
    # w_ref:    (Cout, C)    bf16 1x1 conv weight, PyTorch (out, in) layout
    # o_ref:    (1, Cout, P) f32  output block
    g = jax.nn.sigmoid(gate_ref[0])                    # (1, C)  lane-dense, EUP
    # Fold the per-input-channel gate into the weight: W[o, c] * g[c].
    # (1, C) broadcasts over the Cout sublanes -- cheap, always lowerable.
    wg = w_ref[...] * g.astype(w_ref.dtype)            # (Cout, C)  bf16, VPU
    xb = x_ref[0].astype(jnp.bfloat16)                 # (C, P)     bf16
    # (Cout, P) = (Cout, C) @ (C, P), f32 accumulation on the MXU.
    o_ref[0] = jax.lax.dot_general(
        wg, xb,
        dimension_numbers=(((1,), (0,)), ((), ())),
        preferred_element_type=jnp.float32,
    )


def prepare_weight(weight):
    """One-time (model-load) transform of the PyTorch Conv2d weight.

    weight: (Cout, C, 1, 1) float32  ->  (Cout, C) bfloat16
    """
    cout, c = weight.shape[0], weight.shape[1]
    return jnp.asarray(weight).reshape(cout, c).astype(jnp.bfloat16)


@jax.jit
def se_gate_pointwise_conv(x564, x568, w_prepped):
    """
    x564:      (N, C, H, W)  float32   activations (NCHW, PyTorch convention)
    x568:      (N, C, 1, 1)  float32   gate logits (per-sample, per-channel)
    w_prepped: (Cout, C)     bfloat16  from prepare_weight()
    returns    (N, Cout, H, W) float32
    """
    N, C, H, W = x564.shape
    Cout = w_prepped.shape[0]
    P = H * W

    # Pure reshapes (same flat element order): no relayout / transpose.
    x_cm = x564.reshape(N, C, P)      # channel-major activations
    gate = x568.reshape(N, 1, C)      # lane-major gate

    out_cm = pl.pallas_call(
        _se_gate_pointwise_conv_kernel,
        out_shape=jax.ShapeDtypeStruct((N, Cout, P), jnp.float32),
        grid_spec=pltpu.PrefetchScalarGridSpec(
            num_scalar_prefetch=0,
            grid=(N,),
            in_specs=[
                pl.BlockSpec((1, 1, C), lambda n: (n, 0, 0)),    # gate (lane-major)
                pl.BlockSpec((1, C, P), lambda n: (n, 0, 0)),    # activations
                pl.BlockSpec((Cout, C), lambda n: (0, 0)),       # weight (constant)
            ],
            out_specs=pl.BlockSpec((1, Cout, P), lambda n: (n, 0, 0)),
        ),
        compiler_params=pltpu.CompilerParams(
            dimension_semantics=("arbitrary",),
        ),
    )(gate, x_cm, w_prepped)

    # (N, Cout, P) -> NCHW: free reshape, no transpose.
    return out_cm.reshape(N, Cout, H, W)


if __name__ == "__main__":
    key = jax.random.PRNGKey(0)
    k1, k2, k3 = jax.random.split(key, 3)

    # Shapes implied by the module: Conv2d(2064 -> 344, 1x1),
    # inputs (1, 2064, 7, 7) and (1, 2064, 1, 1).
    N, C, H, W = 1, 2064, 7, 7
    Cout = 344

    x564 = jax.random.normal(k1, (N, C, H, W), dtype=jnp.float32)
    x568 = jax.random.normal(k2, (N, C, 1, 1), dtype=jnp.float32)
    # Deterministic synthetic conv weight (PyTorch layout: (Cout, Cin, 1, 1)).
    weight = jax.random.normal(k3, (Cout, C, 1, 1), dtype=jnp.float32) * 0.02

    w_prepped = prepare_weight(weight)          # one-time model-load transform
    out = se_gate_pointwise_conv(x564, x568, w_prepped)
    out = jax.block_until_ready(out)

    # Pure f32 JAX reference.  The kernel uses bf16 weight/gate/activation
    # operands with f32 accumulation over K=2064 -> loosened tolerance.
    gated = jax.nn.sigmoid(x568) * x564                           # (N, C, H, W)
    ref = jnp.einsum("nchw,oc->nohw", gated, weight.reshape(Cout, C))
    assert out.shape == (N, Cout, H, W), out.shape
    max_err = float(jnp.max(jnp.abs(out - ref)))
    assert jnp.allclose(out, ref, atol=3e-2, rtol=3e-2), max_err

    print("KERNEL_OK")
</pallas_src>

<mosaic_0001>
module attributes {stable_mosaic.version = 11 : i64} {
  func.func @_se_gate_pointwise_conv_kernel(%arg0: i32, %arg1: memref<1x1x2064xf32, #tpu.memory_space<vmem>>, %arg2: memref<1x2064x49xf32, #tpu.memory_space<vmem>>, %arg3: memref<344x2064xbf16, #tpu.memory_space<vmem>>, %arg4: memref<1x344x49xf32, #tpu.memory_space<vmem>>) attributes {dimension_semantics = [#tpu.dimension_semantics<arbitrary>], iteration_bounds = array<i64: 1>, scalar_prefetch = 0 : i64, scratch_operands = 0 : i64, tpu.core_type = #tpu.core_type<tc>, window_params = [{transform_indices = @transform_0, window_bounds = array<i64: 1, 1, 2064>}, {transform_indices = @transform_1, window_bounds = array<i64: 1, 2064, 49>}, {pipeline_mode = #tpu.pipeline_mode<synchronous>, transform_indices = @transform_2, window_bounds = array<i64: 344, 2064>}, {transform_indices = @transform_3, window_bounds = array<i64: 1, 344, 49>}]} {
    %c0 = arith.constant 0 : index
    %c0_0 = arith.constant 0 : index
    %c0_1 = arith.constant 0 : index
    %0 = vector.load %arg1[%c0, %c0_0, %c0_1] : memref<1x1x2064xf32, #tpu.memory_space<vmem>>, vector<1x1x2064xf32>
    %1 = vector.shape_cast %0 : vector<1x1x2064xf32> to vector<1x2064xf32>
    %2 = arith.negf %1 : vector<1x2064xf32>
    %3 = math.exp %2 : vector<1x2064xf32>
    %cst = arith.constant 1.000000e+00 : f32
    %4 = vector.broadcast %cst : f32 to vector<1x2064xf32>
    %5 = arith.addf %4, %3 : vector<1x2064xf32>
    %6 = arith.divf %4, %5 : vector<1x2064xf32>
    %c0_2 = arith.constant 0 : index
    %c0_3 = arith.constant 0 : index
    %7 = vector.load %arg3[%c0_2, %c0_3] : memref<344x2064xbf16, #tpu.memory_space<vmem>>, vector<344x2064xbf16>
    %8 = arith.truncf %6 : vector<1x2064xf32> to vector<1x2064xbf16>
    %9 = vector.broadcast %8 : vector<1x2064xbf16> to vector<344x2064xbf16>
    %10 = arith.mulf %7, %9 : vector<344x2064xbf16>
    %c0_4 = arith.constant 0 : index
    %c0_5 = arith.constant 0 : index
    %c0_6 = arith.constant 0 : index
    %11 = vector.load %arg2[%c0_4, %c0_5, %c0_6] : memref<1x2064x49xf32, #tpu.memory_space<vmem>>, vector<1x2064x49xf32>
    %12 = vector.shape_cast %11 : vector<1x2064x49xf32> to vector<2064x49xf32>
    %13 = arith.truncf %12 : vector<2064x49xf32> to vector<2064x49xbf16>
    %cst_7 = arith.constant dense<0.000000e+00> : vector<344x49xf32>
    %14 = tpu.matmul %10, %13, %cst_7 {dimension_numbers = #tpu.dot_dimension_numbers<[1], [0], [0], [1], [0, 0, 1, 1], [], []>} : vector<344x2064xbf16>, vector<2064x49xbf16>, vector<344x49xf32> -> vector<344x49xf32>
    %c0_8 = arith.constant 0 : index
    %c0_9 = arith.constant 0 : index
    %c0_10 = arith.constant 0 : index
    %15 = vector.load %arg4[%c0_8, %c0_9, %c0_10] : memref<1x344x49xf32, #tpu.memory_space<vmem>>, vector<1x344x49xf32>
    %16 = vector.shape_cast %15 : vector<1x344x49xf32> to vector<344x49xf32>
    %17 = vector.shape_cast %14 : vector<344x49xf32> to vector<1x344x49xf32>
    tpu.vector_store %arg4[%c0_8, %c0_9, %c0_10], %17 {strides = array<i32>} : memref<1x344x49xf32, #tpu.memory_space<vmem>>, vector<1x344x49xf32>,
    return
  }
  func.func @transform_0(%arg0: i32) -> (i32, i32, i32) {
    %c0_i32 = arith.constant 0 : i32
    %c0_i32_0 = arith.constant 0 : i32
    %c0_i32_1 = arith.constant 0 : i32
    return %arg0, %c0_i32, %c0_i32_0 : i32, i32, i32
  }
  func.func @transform_1(%arg0: i32) -> (i32, i32, i32) {
    %c0_i32 = arith.constant 0 : i32
    %c0_i32_0 = arith.constant 0 : i32
    %c0_i32_1 = arith.constant 0 : i32
    return %arg0, %c0_i32, %c0_i32_0 : i32, i32, i32
  }
  func.func @transform_2(%arg0: i32) -> (i32, i32) {
    %c0_i32 = arith.constant 0 : i32
    %c0_i32_0 = arith.constant 0 : i32
    %c0_i32_1 = arith.constant 0 : i32
    return %c0_i32, %c0_i32_0 : i32, i32
  }
  func.func @transform_3(%arg0: i32) -> (i32, i32, i32) {
    %c0_i32 = arith.constant 0 : i32
    %c0_i32_0 = arith.constant 0 : i32
    %c0_i32_1 = arith.constant 0 : i32
    return %arg0, %c0_i32, %c0_i32_0 : i32, i32, i32
  }
}

</mosaic_0001>

<llo_original>
// kernel: se_gate_pointwise_conv.1
$region0: #{se_gate_pointwise_conv.1}
  #allocation0 [shape = 'u32[]', space=smem, size = 0x4, offset = 0x4, fixed_abs, tag = 'smem constant byte address 0x4 - core index']
  #allocation1 [shape = 'u32[144,128]{1,0:T(1,128)}', space=vmem, size = 0x12000, scoped, tag = 'internal scratch']
  %s0 = inlined_call_operand.hbm [shape: f32[1,1,2064], index: 0, kind: input, shape index: {}]
  %s1 = inlined_call_operand.vmem [shape: f32[1,2064,49], index: 1, kind: input, shape index: {}]
  %s2 = inlined_call_operand.hbm [shape: bf16[344,2064], index: 2, kind: input, shape index: {}]
  %s3 = inlined_call_operand.vmem [shape: f32[1,344,49], index: 3, kind: output, shape index: {}]
  %s4 = sld [smem:[#allocation0]]
  $region30: #{se_gate_pointwise_conv.1} parent=0
    _
  %s6 = ssub.s32 1, %s4
  %s7 = scalar_select 0, %s6, %s4
  $region1: #{se_gate_pointwise_conv.1} parent=0
    #allocation2 [shape = 'u8[8704]{0}', space=vmem, size = 0x2400, scoped, tag = 'input window, operand 0, single buffered']
    #allocation3 [shape = 's32[1]{0}', space=sflag, size = 0x4, scoped, tag = 'scoped memory for se_gate_pointwise_conv.1']
    #allocation4 [shape = 'u8[1497088]{0}', space=vmem, size = 0x16d800, scoped, tag = 'input window, operand 2, single buffered']
    #allocation5 [shape = 's32[1]{0}', space=sflag, size = 0x4, scoped, tag = 'scoped memory for se_gate_pointwise_conv.1']
    %8 = vsyncpa [#allocation3], 0
    %9 = vsyncpa [#allocation5], 0
    // Predicated region
    $region2: #{se_gate_pointwise_conv.1} parent=1 // pred_check
      _
    $region3: #{se_gate_pointwise_conv.1} parent=1 // pred_check_branch
      %11 = sbr.rel (0) target = $region5
    $region4: #{se_gate_pointwise_conv.1} parent=1 // pred_region
      %s13 = ssub.s32 272, 272
      %14 = vsyncadd [#allocation3], %s13
      %s16 = sshll.u32 [#allocation2], 4
      %s17 = int_to_ptr.vmem [resolvable:$true] %s16
      %19 = dma.hbm_to_vmem [thread:$0]  %s0, 272, %s17, [#allocation3]
    $region5: #{se_gate_pointwise_conv.1} parent=1 // pred_fallthru
      _
    // Predicated region
    $region6: #{se_gate_pointwise_conv.1} parent=1 // pred_check
      _
    $region7: #{se_gate_pointwise_conv.1} parent=1 // pred_check_branch
      %21 = sbr.rel (0) target = $region9
    $region8: #{se_gate_pointwise_conv.1} parent=1 // pred_region
      _
    $region9: #{se_gate_pointwise_conv.1} parent=1 // pred_fallthru
      _
    // Predicated region
    $region10: #{se_gate_pointwise_conv.1} parent=1 // pred_check
      _
    $region11: #{se_gate_pointwise_conv.1} parent=1 // pred_check_branch
      %23 = sbr.rel (0) target = $region13
    $region12: #{se_gate_pointwise_conv.1} parent=1 // pred_region
      %s25 = ssub.s32 46784, 46784
      %26 = vsyncadd [#allocation5], %s25
      %s27 = sshll.u32 [#allocation4], 4
      %s28 = int_to_ptr.vmem [resolvable:$true] %s27
      %33 = dma.hbm_to_vmem [thread:$0]  %s2, 46784, %s28, [#allocation5], 1088, 1088, 68
    $region13: #{se_gate_pointwise_conv.1} parent=1 // pred_fallthru
      _
    // Predicated region
    $region14: #{se_gate_pointwise_conv.1} parent=1 // pred_check
      _
    $region15: #{se_gate_pointwise_conv.1} parent=1 // pred_check_branch
      %35 = sbr.rel (0) target = $region17
    $region16: #{se_gate_pointwise_conv.1} parent=1 // pred_region
      %36 = dma.done [#allocation3], 272
    $region17: #{se_gate_pointwise_conv.1} parent=1 // pred_fallthru
      _
    // Predicated region
    $region18: #{se_gate_pointwise_conv.1} parent=1 // pred_check
      _
    $region19: #{se_gate_pointwise_conv.1} parent=1 // pred_check_branch
      %38 = sbr.rel (0) target = $region21
    $region20: #{se_gate_pointwise_conv.1} parent=1 // pred_region
      %39 = dma.done [#allocation5], 46784
    $region21: #{se_gate_pointwise_conv.1} parent=1 // pred_fallthru
      _
    %v41 = vld [vmem:[#allocation2] sm:$0xff]
    %v42 = vld [vmem:[#allocation2 + $0x8] sm:$0xff]
    %v43 = vld [vmem:[#allocation2 + $0x10] sm:$0x1]
    %v44 = vxor.u32 %v41, 2147483648
    %v45 = vxor.u32 %v42, 2147483648
    %v46 = vxor.u32 %v43, 2147483648
    %v47 = vmul.f32 %v44, 1.442695
    %v48 = vpow.pop %v47
    %v49 = vmul.f32 %v45, 1.442695
    %v50 = vpow.pop %v49
    %v51 = vmul.f32 %v46, 1.442695
    %v52 = vpow.pop %v51
    %v53 = vadd.f32 %v48, 1.0
    %v54 = vadd.f32 %v50, 1.0
    %v55 = vadd.f32 %v52, 1.0
    %v56 = vrcp.pop %v53
    %v57 = vmul.f32 1.0, %v56
    %v58 = vrcp.pop %v54
    %v59 = vmul.f32 1.0, %v58
    %v60 = vrcp.pop %v55
    %v61 = vmul.f32 1.0, %v60
    %v62 = vld [vmem:[#allocation4] sm:$0xff]
    %v63 = vld [vmem:[#allocation4 + $0x8] sm:$0xff]
    %v64 = vld [vmem:[#allocation4 + $0x10] sm:$0xff]
    %v65 = vld [vmem:[#allocation4 + $0x18] sm:$0xff]
    %v66 = vld [vmem:[#allocation4 + $0x20] sm:$0xff]
    %v67 = vld [vmem:[#allocation4 + $0x28] sm:$0xff]
    %v68 = vld [vmem:[#allocation4 + $0x30] sm:$0xff]
    %v69 = vld [vmem:[#allocation4 + $0x38] sm:$0xff]
    %v70 = vld [vmem:[#allocation4 + $0x40] sm:$0xf]
    %v71 = vld [vmem:[#allocation4 + $0x44] sm:$0xff]
    %v72 = vld [vmem:[#allocation4 + $0x4c] sm:$0xff]
    %v73 = vld [vmem:[#allocation4 + $0x54] sm:$0xff]
    %v74 = vld [vmem:[#allocation4 + $0x5c] sm:$0xff]
    %v75 = vld [vmem:[#allocation4 + $0x64] sm:$0xff]
    %v76 = vld [vmem:[#allocation4 + $0x6c] sm:$0xff]
    %v77 = vld [vmem:[#allocation4 + $0x74] sm:$0xff]
    %v78 = vld [vmem:[#allocation4 + $0x7c] sm:$0xff]
    %v79 = vld [vmem:[#allocation4 + $0x84] sm:$0xf]
    %v80 = vld [vmem:[#allocation4 + $0x88] sm:$0xff]
    %v81 = vld [vmem:[#allocation4 + $0x90] sm:$0xff]
    %v82 = vld [vmem:[#allocation4 + $0x98] sm:$0xff]
    %v83 = vld [vmem:[#allocation4 + $0xa0] sm:$0xff]
    %v84 = vld [vmem:[#allocation4 + $0xa8] sm:$0xff]
    %v85 = vld [vmem:[#allocation4 + $0xb0] sm:$0xff]
    %v86 = vld [vmem:[#allocation4 + $0xb8] sm:$0xff]
    %v87 = vld [vmem:[#allocation4 + $0xc0] sm:$0xff]
    %v88 = vld [vmem:[#allocation4 + $0xc8] sm:$0xf]
    %v89 = vld [vmem:[#allocation4 + $0xcc] sm:$0xff]
    %v90 = vld [vmem:[#allocation4 + $0xd4] sm:$0xff]
    %v91 = vld [vmem:[#allocation4 + $0xdc] sm:$0xff]
    %v92 = vld [vmem:[#allocation4 + $0xe4] sm:$0xff]
    %v93 = vld [vmem:[#allocation4 + $0xec] sm:$0xff]
    %v94 = vld [vmem:[#allocation4 + $0xf4] sm:$0xff]
    %v95 = vld [vmem:[#allocation4 + $0xfc] sm:$0xff]
    %v96 = vld [vmem:[#allocation4 + $0x104] sm:$0xff]
    %v97 = vld [vmem:[#allocation4 + $0x10c] sm:$0xf]
    %v98 = vld [vmem:[#allocation4 + $0x110] sm:$0xff]
    %v99 = vld [vmem:[#allocation4 + $0x118] sm:$0xff]
    %v100 = vld [vmem:[#allocation4 + $0x120] sm:$0xff]
    %v101 = vld [vmem:[#allocation4 + $0x128] sm:$0xff]
    %v102 = vld [vmem:[#allocation4 + $0x130] sm:$0xff]
    %v103 = vld [vmem:[#allocation4 + $0x138] sm:$0xff]
    %v104 = vld [vmem:[#allocation4 + $0x140] sm:$0xff]
    %v105 = vld [vmem:[#allocation4 + $0x148] sm:$0xff]
    %v106 = vld [vmem:[#allocation4 + $0x150] sm:$0xf]
    %v107 = vld [vmem:[#allocation4 + $0x154] sm:$0xff]
    %v108 = vld [vmem:[#allocation4 + $0x15c] sm:$0xff]
    %v109 = vld [vmem:[#allocation4 + $0x164] sm:$0xff]
    %v110 = vld [vmem:[#allocation4 + $0x16c] sm:$0xff]
    %v111 = vld [vmem:[#allocation4 + $0x174] sm:$0xff]
    %v112 = vld [vmem:[#allocation4 + $0x17c] sm:$0xff]
    %v113 = vld [vmem:[#allocation4 + $0x184] sm:$0xff]
    %v114 = vld [vmem:[#allocation4 + $0x18c] sm:$0xff]
    %v115 = vld [vmem:[#allocation4 + $0x194] sm:$0xf]
    %v116 = vld [vmem:[#allocation4 + $0x198] sm:$0xff]
    %v117 = vld [vmem:[#allocation4 + $0x1a0] sm:$0xff]
    %v118 = vld [vmem:[#allocation4 + $0x1a8] sm:$0xff]
    %v119 = vld [vmem:[#allocation4 + $0x1b0] sm:$0xff]
    %v120 = vld [vmem:[#allocation4 + $0x1b8] sm:$0xff]
    %v121 = vld [vmem:[#allocation4 + $0x1c0] sm:$0xff]
    %v122 = vld [vmem:[#allocation4 + $0x1c8] sm:$0xff]
    %v123 = vld [vmem:[#allocation4 + $0x1d0] sm:$0xff]
    %v124 = vld [vmem:[#allocation4 + $0x1d8] sm:$0xf]
    %v125 = vld [vmem:[#allocation4 + $0x1dc] sm:$0xff]
    %v126 = vld [vmem:[#allocation4 + $0x1e4] sm:$0xff]
    %v127 = vld [vmem:[#allocation4 + $0x1ec] sm:$0xff]
    %v128 = vld [vmem:[#allocation4 + $0x1f4] sm:$0xff]
    %v129 = vld [vmem:[#allocation4 + $0x1fc] sm:$0xff]
    %v130 = vld [vmem:[#allocation4 + $0x204] sm:$0xff]
    %v131 = vld [vmem:[#allocation4 + $0x20c] sm:$0xff]
    %v132 = vld [vmem:[#allocation4 + $0x214] sm:$0xff]
    %v133 = vld [vmem:[#allocation4 + $0x21c] sm:$0xf]
    %v134 = vld [vmem:[#allocation4 + $0x220] sm:$0xff]
    %v135 = vld [vmem:[#allocation4 + $0x228] sm:$0xff]
    %v136 = vld [vmem:[#allocation4 + $0x230] sm:$0xff]
    %v137 = vld [vmem:[#allocation4 + $0x238] sm:$0xff]
    %v138 = vld [vmem:[#allocation4 + $0x240] sm:$0xff]
    %v139 = vld [vmem:[#allocation4 + $0x248] sm:$0xff]
    %v140 = vld [vmem:[#allocation4 + $0x250] sm:$0xff]
    %v141 = vld [vmem:[#allocation4 + $0x258] sm:$0xff]
    %v142 = vld [vmem:[#allocation4 + $0x260] sm:$0xf]
    %v143 = vld [vmem:[#allocation4 + $0x264] sm:$0xff]
    %v144 = vld [vmem:[#allocation4 + $0x26c] sm:$0xff]
    %v145 = vld [vmem:[#allocation4 + $0x274] sm:$0xff]
    %v146 = vld [vmem:[#allocation4 + $0x27c] sm:$0xff]
    %v147 = vld [vmem:[#allocation4 + $0x284] sm:$0xff]
    %v148 = vld [vmem:[#allocation4 + $0x28c] sm:$0xff]
    %v149 = vld [vmem:[#allocation4 + $0x294] sm:$0xff]
    %v150 = vld [vmem:[#allocation4 + $0x29c] sm:$0xff]
    %v151 = vld [vmem:[#allocation4 + $0x2a4] sm:$0xf]
    %v152 = vld [vmem:[#allocation4 + $0x2a8] sm:$0xff]
    %v153 = vld [vmem:[#allocation4 + $0x2b0] sm:$0xff]
    %v154 = vld [vmem:[#allocation4 + $0x2b8] sm:$0xff]
    %v155 = vld [vmem:[#allocation4 + $0x2c0] sm:$0xff]
    %v156 = vld [vmem:[#allocation4 + $0x2c8] sm:$0xff]
    %v157 = vld [vmem:[#allocation4 + $0x2d0] sm:$0xff]
    %v158 = vld [vmem:[#allocation4 + $0x2d8] sm:$0xff]
    %v159 = vld [vmem:[#allocation4 + $0x2e0] sm:$0xff]
    %v160 = vld [vmem:[#allocation4 + $0x2e8] sm:$0xf]
    %v161 = vld [vmem:[#allocation4 + $0x2ec] sm:$0xff]
    %v162 = vld [vmem:[#allocation4 + $0x2f4] sm:$0xff]
    %v163 = vld [vmem:[#allocation4 + $0x2fc] sm:$0xff]
    %v164 = vld [vmem:[#allocation4 + $0x304] sm:$0xff]
    %v165 = vld [vmem:[#allocation4 + $0x30c] sm:$0xff]
    %v166 = vld [vmem:[#allocation4 + $0x314] sm:$0xff]
    %v167 = vld [vmem:[#allocation4 + $0x31c] sm:$0xff]
    %v168 = vld [vmem:[#allocation4 + $0x324] sm:$0xff]
    %v169 = vld [vmem:[#allocation4 + $0x32c] sm:$0xf]
    %v170 = vld [vmem:[#allocation4 + $0x330] sm:$0xff]
    %v171 = vld [vmem:[#allocation4 + $0x338] sm:$0xff]
    %v172 = vld [vmem:[#allocation4 + $0x340] sm:$0xff]
    %v173 = vld [vmem:[#allocation4 + $0x348] sm:$0xff]
    %v174 = vld [vmem:[#allocation4 + $0x350] sm:$0xff]
    %v175 = vld [vmem:[#allocation4 + $0x358] sm:$0xff]
    %v176 = vld [vmem:[#allocation4 + $0x360] sm:$0xff]
    %v177 = vld [vmem:[#allocation4 + $0x368] sm:$0xff]
    %v178 = vld [vmem:[#allocation4 + $0x370] sm:$0xf]
    %v179 = vld [vmem:[#allocation4 + $0x374] sm:$0xff]
    %v180 = vld [vmem:[#allocation4 + $0x37c] sm:$0xff]
    %v181 = vld [vmem:[#allocation4 + $0x384] sm:$0xff]
    %v182 = vld [vmem:[#allocation4 + $0x38c] sm:$0xff]
    %v183 = vld [vmem:[#allocation4 + $0x394] sm:$0xff]
    %v184 = vld [vmem:[#allocation4 + $0x39c] sm:$0xff]
    %v185 = vld [vmem:[#allocation4 + $0x3a4] sm:$0xff]
    %v186 = vld [vmem:[#allocation4 + $0x3ac] sm:$0xff]
    %v187 = vld [vmem:[#allocation4 + $0x3b4] sm:$0xf]
    %v188 = vld [vmem:[#allocation4 + $0x3b8] sm:$0xff]
    %v189 = vld [vmem:[#allocation4 + $0x3c0] sm:$0xff]
    %v190 = vld [vmem:[#allocation4 + $0x3c8] sm:$0xff]
    %v191 = vld [vmem:[#allocation4 + $0x3d0] sm:$0xff]
    %v192 = vld [vmem:[#allocation4 + $0x3d8] sm:$0xff]
    %v193 = vld [vmem:[#allocation4 + $0x3e0] sm:$0xff]
    %v194 = vld [vmem:[#allocation4 + $0x3e8] sm:$0xff]
    %v195 = vld [vmem:[#allocation4 + $0x3f0] sm:$0xff]
    %v196 = vld [vmem:[#allocation4 + $0x3f8] sm:$0xf]
    %v197 = vld [vmem:[#allocation4 + $0x3fc] sm:$0xff]
    %v198 = vld [vmem:[#allocation4 + $0x404] sm:$0xff]
    %v199 = vld [vmem:[#allocation4 + $0x40c] sm:$0xff]
    %v200 = vld [vmem:[#allocation4 + $0x414] sm:$0xff]
    %v201 = vld [vmem:[#allocation4 + $0x41c] sm:$0xff]
    %v202 = vld [vmem:[#allocation4 + $0x424] sm:$0xff]
    %v203 = vld [vmem:[#allocation4 + $0x42c] sm:$0xff]
    %v204 = vld [vmem:[#allocation4 + $0x434] sm:$0xff]
    %v205 = vld [vmem:[#allocation4 + $0x43c] sm:$0xf]
    %v206 = vld [vmem:[#allocation4 + $0x440] sm:$0xff]
    %v207 = vld [vmem:[#allocation4 + $0x448] sm:$0xff]
    %v208 = vld [vmem:[#allocation4 + $0x450] sm:$0xff]
    %v209 = vld [vmem:[#allocation4 + $0x458] sm:$0xff]
    %v210 = vld [vmem:[#allocation4 + $0x460] sm:$0xff]
    %v211 = vld [vmem:[#allocation4 + $0x468] sm:$0xff]
    %v212 = vld [vmem:[#allocation4 + $0x470] sm:$0xff]
    %v213 = vld [vmem:[#allocation4 + $0x478] sm:$0xff]
    %v214 = vld [vmem:[#allocation4 + $0x480] sm:$0xf]
    %v215 = vld [vmem:[#allocation4 + $0x484] sm:$0xff]
    %v216 = vld [vmem:[#allocation4 + $0x48c] sm:$0xff]
    %v217 = vld [vmem:[#allocation4 + $0x494] sm:$0xff]
    %v218 = vld [vmem:[#allocation4 + $0x49c] sm:$0xff]
    %v219 = vld [vmem:[#allocation4 + $0x4a4] sm:$0xff]
    %v220 = vld [vmem:[#allocation4 + $0x4ac] sm:$0xff]
    %v221 = vld [vmem:[#allocation4 + $0x4b4] sm:$0xff]
    %v222 = vld [vmem:[#allocation4 + $0x4bc] sm:$0xff]
    %v223 = vld [vmem:[#allocation4 + $0x4c4] sm:$0xf]
    %v224 = vld [vmem:[#allocation4 + $0x4c8] sm:$0xff]
    %v225 = vld [vmem:[#allocation4 + $0x4d0] sm:$0xff]
    %v226 = vld [vmem:[#allocation4 + $0x4d8] sm:$0xff]
    %v227 = vld [vmem:[#allocation4 + $0x4e0] sm:$0xff]
    %v228 = vld [vmem:[#allocation4 + $0x4e8] sm:$0xff]
    %v229 = vld [vmem:[#allocation4 + $0x4f0] sm:$0xff]
    %v230 = vld [vmem:[#allocation4 + $0x4f8] sm:$0xff]
    %v231 = vld [vmem:[#allocation4 + $0x500] sm:$0xff]
    %v232 = vld [vmem:[#allocation4 + $0x508] sm:$0xf]
    %v233 = vld [vmem:[#allocation4 + $0x50c] sm:$0xff]
    %v234 = vld [vmem:[#allocation4 + $0x514] sm:$0xff]
    %v235 = vld [vmem:[#allocation4 + $0x51c] sm:$0xff]
    %v236 = vld [vmem:[#allocation4 + $0x524] sm:$0xff]
    %v237 = vld [vmem:[#allocation4 + $0x52c] sm:$0xff]
    %v238 = vld [vmem:[#allocation4 + $0x534] sm:$0xff]
    %v239 = vld [vmem:[#allocation4 + $0x53c] sm:$0xff]
    %v240 = vld [vmem:[#allocation4 + $0x544] sm:$0xff]
    %v241 = vld [vmem:[#allocation4 + $0x54c] sm:$0xf]
    %v242 = vld [vmem:[#allocation4 + $0x550] sm:$0xff]
    %v243 = vld [vmem:[#allocation4 + $0x558] sm:$0xff]
    %v244 = vld [vmem:[#allocation4 + $0x560] sm:$0xff]
    %v245 = vld [vmem:[#allocation4 + $0x568] sm:$0xff]
    %v246 = vld [vmem:[#allocation4 + $0x570] sm:$0xff]
    %v247 = vld [vmem:[#allocation4 + $0x578] sm:$0xff]
    %v248 = vld [vmem:[#allocation4 + $0x580] sm:$0xff]
    %v249 = vld [vmem:[#allocation4 + $0x588] sm:$0xff]
    %v250 = vld [vmem:[#allocation4 + $0x590] sm:$0xf]
    %v251 = vld [vmem:[#allocation4 + $0x594] sm:$0xff]
    %v252 = vld [vmem:[#allocation4 + $0x59c] sm:$0xff]
    %v253 = vld [vmem:[#allocation4 + $0x5a4] sm:$0xff]
    %v254 = vld [vmem:[#allocation4 + $0x5ac] sm:$0xff]
    %v255 = vld [vmem:[#allocation4 + $0x5b4] sm:$0xff]
    %v256 = vld [vmem:[#allocation4 + $0x5bc] sm:$0xff]
    %v257 = vld [vmem:[#allocation4 + $0x5c4] sm:$0xff]
    %v258 = vld [vmem:[#allocation4 + $0x5cc] sm:$0xff]
    %v259 = vld [vmem:[#allocation4 + $0x5d4] sm:$0xf]
    %v260 = vld [vmem:[#allocation4 + $0x5d8] sm:$0xff]
    %v261 = vld [vmem:[#allocation4 + $0x5e0] sm:$0xff]
    %v262 = vld [vmem:[#allocation4 + $0x5e8] sm:$0xff]
    %v263 = vld [vmem:[#allocation4 + $0x5f0] sm:$0xff]
    %v264 = vld [vmem:[#allocation4 + $0x5f8] sm:$0xff]
    %v265 = vld [vmem:[#allocation4 + $0x600] sm:$0xff]
    %v266 = vld [vmem:[#allocation4 + $0x608] sm:$0xff]
    %v267 = vld [vmem:[#allocation4 + $0x610] sm:$0xff]
    %v268 = vld [vmem:[#allocation4 + $0x618] sm:$0xf]
    %v269 = vld [vmem:[#allocation4 + $0x61c] sm:$0xff]
    %v270 = vld [vmem:[#allocation4 + $0x624] sm:$0xff]
    %v271 = vld [vmem:[#allocation4 + $0x62c] sm:$0xff]
    %v272 = vld [vmem:[#allocation4 + $0x634] sm:$0xff]
    %v273 = vld [vmem:[#allocation4 + $0x63c] sm:$0xff]
    %v274 = vld [vmem:[#allocation4 + $0x644] sm:$0xff]
    %v275 = vld [vmem:[#allocation4 + $0x64c] sm:$0xff]
    %v276 = vld [vmem:[#allocation4 + $0x654] sm:$0xff]
    %v277 = vld [vmem:[#allocation4 + $0x65c] sm:$0xf]
    %v278 = vld [vmem:[#allocation4 + $0x660] sm:$0xff]
    %v279 = vld [vmem:[#allocation4 + $0x668] sm:$0xff]
    %v280 = vld [vmem:[#allocation4 + $0x670] sm:$0xff]
    %v281 = vld [vmem:[#allocation4 + $0x678] sm:$0xff]
    %v282 = vld [vmem:[#allocation4 + $0x680] sm:$0xff]
    %v283 = vld [vmem:[#allocation4 + $0x688] sm:$0xff]
    %v284 = vld [vmem:[#allocation4 + $0x690] sm:$0xff]
    %v285 = vld [vmem:[#allocation4 + $0x698] sm:$0xff]
    %v286 = vld [vmem:[#allocation4 + $0x6a0] sm:$0xf]
    %v287 = vld [vmem:[#allocation4 + $0x6a4] sm:$0xff]
    %v288 = vld [vmem:[#allocation4 + $0x6ac] sm:$0xff]
    %v289 = vld [vmem:[#allocation4 + $0x6b4] sm:$0xff]
    %v290 = vld [vmem:[#allocation4 + $0x6bc] sm:$0xff]
    %v291 = vld [vmem:[#allocation4 + $0x6c4] sm:$0xff]
    %v292 = vld [vmem:[#allocation4 + $0x6cc] sm:$0xff]
    %v293 = vld [vmem:[#allocation4 + $0x6d4] sm:$0xff]
    %v294 = vld [vmem:[#allocation4 + $0x6dc] sm:$0xff]
    %v295 = vld [vmem:[#allocation4 + $0x6e4] sm:$0xf]
    %v296 = vld [vmem:[#allocation4 + $0x6e8] sm:$0xff]
    %v297 = vld [vmem:[#allocation4 + $0x6f0] sm:$0xff]
    %v298 = vld [vmem:[#allocation4 + $0x6f8] sm:$0xff]
    %v299 = vld [vmem:[#allocation4 + $0x700] sm:$0xff]
    %v300 = vld [vmem:[#allocation4 + $0x708] sm:$0xff]
    %v301 = vld [vmem:[#allocation4 + $0x710] sm:$0xff]
    %v302 = vld [vmem:[#allocation4 + $0x718] sm:$0xff]
    %v303 = vld [vmem:[#allocation4 + $0x720] sm:$0xff]
    %v304 = vld [vmem:[#allocation4 + $0x728] sm:$0xf]
    %v305 = vld [vmem:[#allocation4 + $0x72c] sm:$0xff]
    %v306 = vld [vmem:[#allocation4 + $0x734] sm:$0xff]
    %v307 = vld [vmem:[#allocation4 + $0x73c] sm:$0xff]
    %v308 = vld [vmem:[#allocation4 + $0x744] sm:$0xff]
    %v309 = vld [vmem:[#allocation4 + $0x74c] sm:$0xff]
    %v310 = vld [vmem:[#allocation4 + $0x754] sm:$0xff]
    %v311 = vld [vmem:[#allocation4 + $0x75c] sm:$0xff]
    %v312 = vld [vmem:[#allocation4 + $0x764] sm:$0xff]
    %v313 = vld [vmem:[#allocation4 + $0x76c] sm:$0xf]
    %v314 = vld [vmem:[#allocation4 + $0x770] sm:$0xff]
    %v315 = vld [vmem:[#allocation4 + $0x778] sm:$0xff]
    %v316 = vld [vmem:[#allocation4 + $0x780] sm:$0xff]
    %v317 = vld [vmem:[#allocation4 + $0x788] sm:$0xff]
    %v318 = vld [vmem:[#allocation4 + $0x790] sm:$0xff]
    %v319 = vld [vmem:[#allocation4 + $0x798] sm:$0xff]
    %v320 = vld [vmem:[#allocation4 + $0x7a0] sm:$0xff]
    %v321 = vld [vmem:[#allocation4 + $0x7a8] sm:$0xff]
    %v322 = vld [vmem:[#allocation4 + $0x7b0] sm:$0xf]
    %v323 = vld [vmem:[#allocation4 + $0x7b4] sm:$0xff]
    %v324 = vld [vmem:[#allocation4 + $0x7bc] sm:$0xff]
    %v325 = vld [vmem:[#allocation4 + $0x7c4] sm:$0xff]
    %v326 = vld [vmem:[#allocation4 + $0x7cc] sm:$0xff]
    %v327 = vld [vmem:[#allocation4 + $0x7d4] sm:$0xff]
    %v328 = vld [vmem:[#allocation4 + $0x7dc] sm:$0xff]
    %v329 = vld [vmem:[#allocation4 + $0x7e4] sm:$0xff]
    %v330 = vld [vmem:[#allocation4 + $0x7ec] sm:$0xff]
    %v331 = vld [vmem:[#allocation4 + $0x7f4] sm:$0xf]
    %v332 = vld [vmem:[#allocation4 + $0x7f8] sm:$0xff]
    %v333 = vld [vmem:[#allocation4 + $0x800] sm:$0xff]
    %v334 = vld [vmem:[#allocation4 + $0x808] sm:$0xff]
    %v335 = vld [vmem:[#allocation4 + $0x810] sm:$0xff]
    %v336 = vld [vmem:[#allocation4 + $0x818] sm:$0xff]
    %v337 = vld [vmem:[#allocation4 + $0x820] sm:$0xff]
    %v338 = vld [vmem:[#allocation4 + $0x828] sm:$0xff]
    %v339 = vld [vmem:[#allocation4 + $0x830] sm:$0xff]
    %v340 = vld [vmem:[#allocation4 + $0x838] sm:$0xf]
    %v341 = vld [vmem:[#allocation4 + $0x83c] sm:$0xff]
    %v342 = vld [vmem:[#allocation4 + $0x844] sm:$0xff]
    %v343 = vld [vmem:[#allocation4 + $0x84c] sm:$0xff]
    %v344 = vld [vmem:[#allocation4 + $0x854] sm:$0xff]
    %v345 = vld [vmem:[#allocation4 + $0x85c] sm:$0xff]
    %v346 = vld [vmem:[#allocation4 + $0x864] sm:$0xff]
    %v347 = vld [vmem:[#allocation4 + $0x86c] sm:$0xff]
    %v348 = vld [vmem:[#allocation4 + $0x874] sm:$0xff]
    %v349 = vld [vmem:[#allocation4 + $0x87c] sm:$0xf]
    %v350 = vld [vmem:[#allocation4 + $0x880] sm:$0xff]
    %v351 = vld [vmem:[#allocation4 + $0x888] sm:$0xff]
    %v352 = vld [vmem:[#allocation4 + $0x890] sm:$0xff]
    %v353 = vld [vmem:[#allocation4 + $0x898] sm:$0xff]
    %v354 = vld [vmem:[#allocation4 + $0x8a0] sm:$0xff]
    %v355 = vld [vmem:[#allocation4 + $0x8a8] sm:$0xff]
    %v356 = vld [vmem:[#allocation4 + $0x8b0] sm:$0xff]
    %v357 = vld [vmem:[#allocation4 + $0x8b8] sm:$0xff]
    %v358 = vld [vmem:[#allocation4 + $0x8c0] sm:$0xf]
    %v359 = vld [vmem:[#allocation4 + $0x8c4] sm:$0xff]
    %v360 = vld [vmem:[#allocation4 + $0x8cc] sm:$0xff]
    %v361 = vld [vmem:[#allocation4 + $0x8d4] sm:$0xff]
    %v362 = vld [vmem:[#allocation4 + $0x8dc] sm:$0xff]
    %v363 = vld [vmem:[#allocation4 + $0x8e4] sm:$0xff]
    %v364 = vld [vmem:[#allocation4 + $0x8ec] sm:$0xff]
    %v365 = vld [vmem:[#allocation4 + $0x8f4] sm:$0xff]
    %v366 = vld [vmem:[#allocation4 + $0x8fc] sm:$0xff]
    %v367 = vld [vmem:[#allocation4 + $0x904] sm:$0xf]
    %v368 = vld [vmem:[#allocation4 + $0x908] sm:$0xff]
    %v369 = vld [vmem:[#allocation4 + $0x910] sm:$0xff]
    %v370 = vld [vmem:[#allocation4 + $0x918] sm:$0xff]
    %v371 = vld [vmem:[#allocation4 + $0x920] sm:$0xff]
    %v372 = vld [vmem:[#allocation4 + $0x928] sm:$0xff]
    %v373 = vld [vmem:[#allocation4 + $0x930] sm:$0xff]
    %v374 = vld [vmem:[#allocation4 + $0x938] sm:$0xff]
    %v375 = vld [vmem:[#allocation4 + $0x940] sm:$0xff]
    %v376 = vld [vmem:[#allocation4 + $0x948] sm:$0xf]
    %v377 = vld [vmem:[#allocation4 + $0x94c] sm:$0xff]
    %v378 = vld [vmem:[#allocation4 + $0x954] sm:$0xff]
    %v379 = vld [vmem:[#allocation4 + $0x95c] sm:$0xff]
    %v380 = vld [vmem:[#allocation4 + $0x964] sm:$0xff]
    %v381 = vld [vmem:[#allocation4 + $0x96c] sm:$0xff]
    %v382 = vld [vmem:[#allocation4 + $0x974] sm:$0xff]
    %v383 = vld [vmem:[#allocation4 + $0x97c] sm:$0xff]
    %v384 = vld [vmem:[#allocation4 + $0x984] sm:$0xff]
    %v385 = vld [vmem:[#allocation4 + $0x98c] sm:$0xf]
    %v386 = vld [vmem:[#allocation4 + $0x990] sm:$0xff]
    %v387 = vld [vmem:[#allocation4 + $0x998] sm:$0xff]
    %v388 = vld [vmem:[#allocation4 + $0x9a0] sm:$0xff]
    %v389 = vld [vmem:[#allocation4 + $0x9a8] sm:$0xff]
    %v390 = vld [vmem:[#allocation4 + $0x9b0] sm:$0xff]
    %v391 = vld [vmem:[#allocation4 + $0x9b8] sm:$0xff]
    %v392 = vld [vmem:[#allocation4 + $0x9c0] sm:$0xff]
    %v393 = vld [vmem:[#allocation4 + $0x9c8] sm:$0xff]
    %v394 = vld [vmem:[#allocation4 + $0x9d0] sm:$0xf]
    %v395 = vld [vmem:[#allocation4 + $0x9d4] sm:$0xff]
    %v396 = vld [vmem:[#allocation4 + $0x9dc] sm:$0xff]
    %v397 = vld [vmem:[#allocation4 + $0x9e4] sm:$0xff]
    %v398 = vld [vmem:[#allocation4 + $0x9ec] sm:$0xff]
    %v399 = vld [vmem:[#allocation4 + $0x9f4] sm:$0xff]
    %v400 = vld [vmem:[#allocation4 + $0x9fc] sm:$0xff]
    %v401 = vld [vmem:[#allocation4 + $0xa04] sm:$0xff]
    %v402 = vld [vmem:[#allocation4 + $0xa0c] sm:$0xff]
    %v403 = vld [vmem:[#allocation4 + $0xa14] sm:$0xf]
    %v404 = vld [vmem:[#allocation4 + $0xa18] sm:$0xff]
    %v405 = vld [vmem:[#allocation4 + $0xa20] sm:$0xff]
    %v406 = vld [vmem:[#allocation4 + $0xa28] sm:$0xff]
    %v407 = vld [vmem:[#allocation4 + $0xa30] sm:$0xff]
    %v408 = vld [vmem:[#allocation4 + $0xa38] sm:$0xff]
    %v409 = vld [vmem:[#allocation4 + $0xa40] sm:$0xff]
    %v410 = vld [vmem:[#allocation4 + $0xa48] sm:$0xff]
    %v411 = vld [vmem:[#allocation4 + $0xa50] sm:$0xff]
    %v412 = vld [vmem:[#allocation4 + $0xa58] sm:$0xf]
    %v413 = vld [vmem:[#allocation4 + $0xa5c] sm:$0xff]
    %v414 = vld [vmem:[#allocation4 + $0xa64] sm:$0xff]
    %v415 = vld [vmem:[#allocation4 + $0xa6c] sm:$0xff]
    %v416 = vld [vmem:[#allocation4 + $0xa74] sm:$0xff]
    %v417 = vld [vmem:[#allocation4 + $0xa7c] sm:$0xff]
    %v418 = vld [vmem:[#allocation4 + $0xa84] sm:$0xff]
    %v419 = vld [vmem:[#allocation4 + $0xa8c] sm:$0xff]
    %v420 = vld [vmem:[#allocation4 + $0xa94] sm:$0xff]
    %v421 = vld [vmem:[#allocation4 + $0xa9c] sm:$0xf]
    %v422 = vld [vmem:[#allocation4 + $0xaa0] sm:$0xff]
    %v423 = vld [vmem:[#allocation4 + $0xaa8] sm:$0xff]
    %v424 = vld [vmem:[#allocation4 + $0xab0] sm:$0xff]
    %v425 = vld [vmem:[#allocation4 + $0xab8] sm:$0xff]
    %v426 = vld [vmem:[#allocation4 + $0xac0] sm:$0xff]
    %v427 = vld [vmem:[#allocation4 + $0xac8] sm:$0xff]
    %v428 = vld [vmem:[#allocation4 + $0xad0] sm:$0xff]
    %v429 = vld [vmem:[#allocation4 + $0xad8] sm:$0xff]
    %v430 = vld [vmem:[#allocation4 + $0xae0] sm:$0xf]
    %v431 = vld [vmem:[#allocation4 + $0xae4] sm:$0xff]
    %v432 = vld [vmem:[#allocation4 + $0xaec] sm:$0xff]
    %v433 = vld [vmem:[#allocation4 + $0xaf4] sm:$0xff]
    %v434 = vld [vmem:[#allocation4 + $0xafc] sm:$0xff]
    %v435 = vld [vmem:[#allocation4 + $0xb04] sm:$0xff]
    %v436 = vld [vmem:[#allocation4 + $0xb0c] sm:$0xff]
    %v437 = vld [vmem:[#allocation4 + $0xb14] sm:$0xff]
    %v438 = vld [vmem:[#allocation4 + $0xb1c] sm:$0xff]
    %v439 = vld [vmem:[#allocation4 + $0xb24] sm:$0xf]
    %v440 = vld [vmem:[#allocation4 + $0xb28] sm:$0xff]
    %v441 = vld [vmem:[#allocation4 + $0xb30] sm:$0xff]
    %v442 = vld [vmem:[#allocation4 + $0xb38] sm:$0xff]
    %v443 = vld [vmem:[#allocation4 + $0xb40] sm:$0xff]
    %v444 = vld [vmem:[#allocation4 + $0xb48] sm:$0xff]
    %v445 = vld [vmem:[#allocation4 + $0xb50] sm:$0xff]
    %v446 = vld [vmem:[#allocation4 + $0xb58] sm:$0xff]
    %v447 = vld [vmem:[#allocation4 + $0xb60] sm:$0xff]
    %v448 = vld [vmem:[#allocation4 + $0xb68] sm:$0xf]
    %v452 = vlaneseq
    %v453 = vshrl.u32 %v452, 7
    %v454 = vsub.s32 0, %v453
    %v455 = vrot.slane %v57, %v454
    %v456 = vlaneseq
    %v457 = vshrl.u32 %v456, 7
    %v458 = vsub.s32 1, %v457
    %v459 = vrot.slane %v57, %v458
    %v460 = vlaneseq
    %v461 = vshrl.u32 %v460, 7
    %v462 = vsub.s32 2, %v461
    %v463 = vrot.slane %v57, %v462
    %v464 = vlaneseq
    %v465 = vshrl.u32 %v464, 7
    %v466 = vsub.s32 3, %v465
    %v467 = vrot.slane %v57, %v466
    %v468 = vlaneseq
    %v469 = vshrl.u32 %v468, 7
    %v470 = vsub.s32 4, %v469
    %v471 = vrot.slane %v57, %v470
    %v472 = vlaneseq
    %v473 = vshrl.u32 %v472, 7
    %v474 = vsub.s32 5, %v473
    %v475 = vrot.slane %v57, %v474
    %v476 = vlaneseq
    %v477 = vshrl.u32 %v476, 7
    %v478 = vsub.s32 6, %v477
    %v479 = vrot.slane %v57, %v478
    %v480 = vlaneseq
    %v481 = vshrl.u32 %v480, 7
    %v482 = vsub.s32 7, %v481
    %v483 = vrot.slane %v57, %v482
    %v484 = vlaneseq
    %v485 = vshrl.u32 %v484, 7
    %v486 = vsub.s32 0, %v485
    %v487 = vrot.slane %v59, %v486
    %v488 = vlaneseq
    %v489 = vshrl.u32 %v488, 7
    %v490 = vsub.s32 1, %v489
    %v491 = vrot.slane %v59, %v490
    %v492 = vlaneseq
    %v493 = vshrl.u32 %v492, 7
    %v494 = vsub.s32 2, %v493
    %v495 = vrot.slane %v59, %v494
    %v496 = vlaneseq
    %v497 = vshrl.u32 %v496, 7
    %v498 = vsub.s32 3, %v497
    %v499 = vrot.slane %v59, %v498
    %v500 = vlaneseq
    %v501 = vshrl.u32 %v500, 7
    %v502 = vsub.s32 4, %v501
    %v503 = vrot.slane %v59, %v502
    %v504 = vlaneseq
    %v505 = vshrl.u32 %v504, 7
    %v506 = vsub.s32 5, %v505
    %v507 = vrot.slane %v59, %v506
    %v508 = vlaneseq
    %v509 = vshrl.u32 %v508, 7
    %v510 = vsub.s32 6, %v509
    %v511 = vrot.slane %v59, %v510
    %v512 = vlaneseq
    %v513 = vshrl.u32 %v512, 7
    %v514 = vsub.s32 7, %v513
    %v515 = vrot.slane %v59, %v514
    %v516 = vlaneseq
    %v517 = vshrl.u32 %v516, 7
    %v518 = vsub.s32 0, %v517
    %v519 = vrot.slane %v61, %v518
    %v537 = vpack.c.bf16 %v455, %v455
    %v538 = vpack.c.bf16 %v459, %v459
    %v539 = vpack.c.bf16 %v463, %v463
    %v540 = vpack.c.bf16 %v467, %v467
    %v541 = vpack.c.bf16 %v471, %v471
    %v542 = vpack.c.bf16 %v475, %v475
    %v543 = vpack.c.bf16 %v479, %v479
    %v544 = vpack.c.bf16 %v483, %v483
    %v545 = vpack.c.bf16 %v487, %v487
    %v546 = vpack.c.bf16 %v491, %v491
    %v547 = vpack.c.bf16 %v495, %v495
    %v548 = vpack.c.bf16 %v499, %v499
    %v549 = vpack.c.bf16 %v503, %v503
    %v550 = vpack.c.bf16 %v507, %v507
    %v551 = vpack.c.bf16 %v511, %v511
    %v552 = vpack.c.bf16 %v515, %v515
    %v553 = vpack.c.bf16 %v519, %v519
    %v555 = vpack.i.b16 %v537, %v537
    %v557 = vlaneseq
    %v558 = vshrl.u32 %v557, 7
    %v559 = vsub.s32 0, %v558
    %v560 = vrot.slane %v555, %v559
    %v562 = vpack.i.b16 %v538, %v538
    %v564 = vlaneseq
    %v565 = vshrl.u32 %v564, 7
    %v566 = vsub.s32 0, %v565
    %v567 = vrot.slane %v562, %v566
    %v569 = vpack.i.b16 %v539, %v539
    %v571 = vlaneseq
    %v572 = vshrl.u32 %v571, 7
    %v573 = vsub.s32 0, %v572
    %v574 = vrot.slane %v569, %v573
    %v576 = vpack.i.b16 %v540, %v540
    %v578 = vlaneseq
    %v579 = vshrl.u32 %v578, 7
    %v580 = vsub.s32 0, %v579
    %v581 = vrot.slane %v576, %v580
    %v583 = vpack.i.b16 %v541, %v541
    %v585 = vlaneseq
    %v586 = vshrl.u32 %v585, 7
    %v587 = vsub.s32 0, %v586
    %v588 = vrot.slane %v583, %v587
    %v590 = vpack.i.b16 %v542, %v542
    %v592 = vlaneseq
    %v593 = vshrl.u32 %v592, 7
    %v594 = vsub.s32 0, %v593
    %v595 = vrot.slane %v590, %v594
    %v597 = vpack.i.b16 %v543, %v543
    %v599 = vlaneseq
    %v600 = vshrl.u32 %v599, 7
    %v601 = vsub.s32 0, %v600
    %v602 = vrot.slane %v597, %v601
    %v604 = vpack.i.b16 %v544, %v544
    %v606 = vlaneseq
    %v607 = vshrl.u32 %v606, 7
    %v608 = vsub.s32 0, %v607
    %v609 = vrot.slane %v604, %v608
    %v611 = vpack.i.b16 %v545, %v545
    %v613 = vlaneseq
    %v614 = vshrl.u32 %v613, 7
    %v615 = vsub.s32 0, %v614
    %v616 = vrot.slane %v611, %v615
    %v618 = vpack.i.b16 %v546, %v546
    %v620 = vlaneseq
    %v621 = vshrl.u32 %v620, 7
    %v622 = vsub.s32 0, %v621
    %v623 = vrot.slane %v618, %v622
    %v625 = vpack.i.b16 %v547, %v547
    %v627 = vlaneseq
    %v628 = vshrl.u32 %v627, 7
    %v629 = vsub.s32 0, %v628
    %v630 = vrot.slane %v625, %v629
    %v632 = vpack.i.b16 %v548, %v548
    %v634 = vlaneseq
    %v635 = vshrl.u32 %v634, 7
    %v636 = vsub.s32 0, %v635
    %v637 = vrot.slane %v632, %v636
    %v639 = vpack.i.b16 %v549, %v549
    %v641 = vlaneseq
    %v642 = vshrl.u32 %v641, 7
    %v643 = vsub.s32 0, %v642
    %v644 = vrot.slane %v639, %v643
    %v646 = vpack.i.b16 %v550, %v550
    %v648 = vlaneseq
    %v649 = vshrl.u32 %v648, 7
    %v650 = vsub.s32 0, %v649
    %v651 = vrot.slane %v646, %v650
    %v653 = vpack.i.b16 %v551, %v551
    %v655 = vlaneseq
    %v656 = vshrl.u32 %v655, 7
    %v657 = vsub.s32 0, %v656
    %v658 = vrot.slane %v653, %v657
    %v660 = vpack.i.b16 %v552, %v552
    %v662 = vlaneseq
    %v663 = vshrl.u32 %v662, 7
    %v664 = vsub.s32 0, %v663
    %v665 = vrot.slane %v660, %v664
    %v667 = vpack.i.b16 %v553, %v553
    %v669 = vlaneseq
    %v670 = vshrl.u32 %v669, 7
    %v671 = vsub.s32 0, %v670
    %v672 = vrot.slane %v667, %v671
    %v690 = vunpack.c.l.b16 %v560
    %v691 = vunpack.c.l.b16 %v567
    %v692 = vunpack.c.l.b16 %v574
    %v693 = vunpack.c.l.b16 %v581
    %v694 = vunpack.c.l.b16 %v588
    %v695 = vunpack.c.l.b16 %v595
    %v696 = vunpack.c.l.b16 %v602
    %v697 = vunpack.c.l.b16 %v609
    %v698 = vunpack.c.l.b16 %v616
    %v699 = vunpack.c.l.b16 %v623
    %v700 = vunpack.c.l.b16 %v630
    %v701 = vunpack.c.l.b16 %v637
    %v702 = vunpack.c.l.b16 %v644
    %v703 = vunpack.c.l.b16 %v651
    %v704 = vunpack.c.l.b16 %v658
    %v705 = vunpack.c.l.b16 %v665
    %v706 = vunpack.c.l.b16 %v672
    %v707 = vpack.c.b16 %v691, %v690
    %v708 = vpack.c.b16 %v693, %v692
    %v709 = vpack.c.b16 %v695, %v694
    %v710 = vpack.c.b16 %v697, %v696
    %v711 = vpack.c.b16 %v699, %v698
    %v712 = vpack.c.b16 %v701, %v700
    %v713 = vpack.c.b16 %v703, %v702
    %v714 = vpack.c.b16 %v705, %v704
    %v715 = vpack.c.b16 %v706, %v706
    %v725 = vmul.bf16 %v62, %v707
    %v726 = vmul.bf16 %v63, %v708
    %v727 = vmul.bf16 %v64, %v709
    %v728 = vmul.bf16 %v65, %v710
    %v729 = vmul.bf16 %v66, %v711
    %v730 = vmul.bf16 %v67, %v712
    %v731 = vmul.bf16 %v68, %v713
    %v732 = vmul.bf16 %v69, %v714
    %v733 = vmul.bf16 %v70, %v715
    %v734 = vmul.bf16 %v71, %v707
    %v735 = vmul.bf16 %v72, %v708
    %v736 = vmul.bf16 %v73, %v709
    %v737 = vmul.bf16 %v74, %v710
    %v738 = vmul.bf16 %v75, %v711
    %v739 = vmul.bf16 %v76, %v712
    %v740 = vmul.bf16 %v77, %v713
    %v741 = vmul.bf16 %v78, %v714
    %v742 = vmul.bf16 %v79, %v715
    %v743 = vmul.bf16 %v80, %v707
    %v744 = vmul.bf16 %v81, %v708
    %v745 = vmul.bf16 %v82, %v709
    %v746 = vmul.bf16 %v83, %v710
    %v747 = vmul.bf16 %v84, %v711
    %v748 = vmul.bf16 %v85, %v712
    %v749 = vmul.bf16 %v86, %v713
    %v750 = vmul.bf16 %v87, %v714
    %v751 = vmul.bf16 %v88, %v715
    %v752 = vmul.bf16 %v89, %v707
    %v753 = vmul.bf16 %v90, %v708
    %v754 = vmul.bf16 %v91, %v709
    %v755 = vmul.bf16 %v92, %v710
    %v756 = vmul.bf16 %v93, %v711
    %v757 = vmul.bf16 %v94, %v712
    %v758 = vmul.bf16 %v95, %v713
    %v759 = vmul.bf16 %v96, %v714
    %v760 = vmul.bf16 %v97, %v715
    %v761 = vmul.bf16 %v98, %v707
    %v762 = vmul.bf16 %v99, %v708
    %v763 = vmul.bf16 %v100, %v709
    %v764 = vmul.bf16 %v101, %v710
    %v765 = vmul.bf16 %v102, %v711
    %v766 = vmul.bf16 %v103, %v712
    %v767 = vmul.bf16 %v104, %v713
    %v768 = vmul.bf16 %v105, %v714
    %v769 = vmul.bf16 %v106, %v715
    %v770 = vmul.bf16 %v107, %v707
    %v771 = vmul.bf16 %v108, %v708
    %v772 = vmul.bf16 %v109, %v709
    %v773 = vmul.bf16 %v110, %v710
    %v774 = vmul.bf16 %v111, %v711
    %v775 = vmul.bf16 %v112, %v712
    %v776 = vmul.bf16 %v113, %v713
    %v777 = vmul.bf16 %v114, %v714
    %v778 = vmul.bf16 %v115, %v715
    %v779 = vmul.bf16 %v116, %v707
    %v780 = vmul.bf16 %v117, %v708
    %v781 = vmul.bf16 %v118, %v709
    %v782 = vmul.bf16 %v119, %v710
    %v783 = vmul.bf16 %v120, %v711
    %v784 = vmul.bf16 %v121, %v712
    %v785 = vmul.bf16 %v122, %v713
    %v786 = vmul.bf16 %v123, %v714
    %v787 = vmul.bf16 %v124, %v715
    %v788 = vmul.bf16 %v125, %v707
    %v789 = vmul.bf16 %v126, %v708
    %v790 = vmul.bf16 %v127, %v709
    %v791 = vmul.bf16 %v128, %v710
    %v792 = vmul.bf16 %v129, %v711
    %v793 = vmul.bf16 %v130, %v712
    %v794 = vmul.bf16 %v131, %v713
    %v795 = vmul.bf16 %v132, %v714
    %v796 = vmul.bf16 %v133, %v715
    %v797 = vmul.bf16 %v134, %v707
    %v798 = vmul.bf16 %v135, %v708
    %v799 = vmul.bf16 %v136, %v709
    %v800 = vmul.bf16 %v137, %v710
    %v801 = vmul.bf16 %v138, %v711
    %v802 = vmul.bf16 %v139, %v712
    %v803 = vmul.bf16 %v140, %v713
    %v804 = vmul.bf16 %v141, %v714
    %v805 = vmul.bf16 %v142, %v715
    %v806 = vmul.bf16 %v143, %v707
    %v807 = vmul.bf16 %v144, %v708
    %v808 = vmul.bf16 %v145, %v709
    %v809 = vmul.bf16 %v146, %v710
    %v810 = vmul.bf16 %v147, %v711
    %v811 = vmul.bf16 %v148, %v712
    %v812 = vmul.bf16 %v149, %v713
    %v813 = vmul.bf16 %v150, %v714
    %v814 = vmul.bf16 %v151, %v715
    %v815 = vmul.bf16 %v152, %v707
    %v816 = vmul.bf16 %v153, %v708
    %v817 = vmul.bf16 %v154, %v709
    %v818 = vmul.bf16 %v155, %v710
    %v819 = vmul.bf16 %v156, %v711
    %v820 = vmul.bf16 %v157, %v712
    %v821 = vmul.bf16 %v158, %v713
    %v822 = vmul.bf16 %v159, %v714
    %v823 = vmul.bf16 %v160, %v715
    %v824 = vmul.bf16 %v161, %v707
    %v825 = vmul.bf16 %v162, %v708
    %v826 = vmul.bf16 %v163, %v709
    %v827 = vmul.bf16 %v164, %v710
    %v828 = vmul.bf16 %v165, %v711
    %v829 = vmul.bf16 %v166, %v712
    %v830 = vmul.bf16 %v167, %v713
    %v831 = vmul.bf16 %v168, %v714
    %v832 = vmul.bf16 %v169, %v715
    %v833 = vmul.bf16 %v170, %v707
    %v834 = vmul.bf16 %v171, %v708
    %v835 = vmul.bf16 %v172, %v709
    %v836 = vmul.bf16 %v173, %v710
    %v837 = vmul.bf16 %v174, %v711
    %v838 = vmul.bf16 %v175, %v712
    %v839 = vmul.bf16 %v176, %v713
    %v840 = vmul.bf16 %v177, %v714
    %v841 = vmul.bf16 %v178, %v715
    %v842 = vmul.bf16 %v179, %v707
    %v843 = vmul.bf16 %v180, %v708
    %v844 = vmul.bf16 %v181, %v709
    %v845 = vmul.bf16 %v182, %v710
    %v846 = vmul.bf16 %v183, %v711
    %v847 = vmul.bf16 %v184, %v712
    %v848 = vmul.bf16 %v185, %v713
    %v849 = vmul.bf16 %v186, %v714
    %v850 = vmul.bf16 %v187, %v715
    %v851 = vmul.bf16 %v188, %v707
    %v852 = vmul.bf16 %v189, %v708
    %v853 = vmul.bf16 %v190, %v709
    %v854 = vmul.bf16 %v191, %v710
    %v855 = vmul.bf16 %v192, %v711
    %v856 = vmul.bf16 %v193, %v712
    %v857 = vmul.bf16 %v194, %v713
    %v858 = vmul.bf16 %v195, %v714
    %v859 = vmul.bf16 %v196, %v715
    %v860 = vmul.bf16 %v197, %v707
    %v861 = vmul.bf16 %v198, %v708
    %v862 = vmul.bf16 %v199, %v709
    %v863 = vmul.bf16 %v200, %v710
    %v864 = vmul.bf16 %v201, %v711
    %v865 = vmul.bf16 %v202, %v712
    %v866 = vmul.bf16 %v203, %v713
    %v867 = vmul.bf16 %v204, %v714
    %v868 = vmul.bf16 %v205, %v715
    %v869 = vmul.bf16 %v206, %v707
    %v870 = vmul.bf16 %v207, %v708
    %v871 = vmul.bf16 %v208, %v709
    %v872 = vmul.bf16 %v209, %v710
    %v873 = vmul.bf16 %v210, %v711
    %v874 = vmul.bf16 %v211, %v712
    %v875 = vmul.bf16 %v212, %v713
    %v876 = vmul.bf16 %v213, %v714
    %v877 = vmul.bf16 %v214, %v715
    %v878 = vmul.bf16 %v215, %v707
    %v879 = vmul.bf16 %v216, %v708
    %v880 = vmul.bf16 %v217, %v709
    %v881 = vmul.bf16 %v218, %v710
    %v882 = vmul.bf16 %v219, %v711
    %v883 = vmul.bf16 %v220, %v712
    %v884 = vmul.bf16 %v221, %v713
    %v885 = vmul.bf16 %v222, %v714
    %v886 = vmul.bf16 %v223, %v715
    %v887 = vmul.bf16 %v224, %v707
    %v888 = vmul.bf16 %v225, %v708
    %v889 = vmul.bf16 %v226, %v709
    %v890 = vmul.bf16 %v227, %v710
    %v891 = vmul.bf16 %v228, %v711
    %v892 = vmul.bf16 %v229, %v712
    %v893 = vmul.bf16 %v230, %v713
    %v894 = vmul.bf16 %v231, %v714
    %v895 = vmul.bf16 %v232, %v715
    %v896 = vmul.bf16 %v233, %v707
    %v897 = vmul.bf16 %v234, %v708
    %v898 = vmul.bf16 %v235, %v709
    %v899 = vmul.bf16 %v236, %v710
    %v900 = vmul.bf16 %v237, %v711
    %v901 = vmul.bf16 %v238, %v712
    %v902 = vmul.bf16 %v239, %v713
    %v903 = vmul.bf16 %v240, %v714
    %v904 = vmul.bf16 %v241, %v715
    %v905 = vmul.bf16 %v242, %v707
    %v906 = vmul.bf16 %v243, %v708
    %v907 = vmul.bf16 %v244, %v709
    %v908 = vmul.bf16 %v245, %v710
    %v909 = vmul.bf16 %v246, %v711
    %v910 = vmul.bf16 %v247, %v712
    %v911 = vmul.bf16 %v248, %v713
    %v912 = vmul.bf16 %v249, %v714
    %v913 = vmul.bf16 %v250, %v715
    %v914 = vmul.bf16 %v251, %v707
    %v915 = vmul.bf16 %v252, %v708
    %v916 = vmul.bf16 %v253, %v709
    %v917 = vmul.bf16 %v254, %v710
    %v918 = vmul.bf16 %v255, %v711
    %v919 = vmul.bf16 %v256, %v712
    %v920 = vmul.bf16 %v257, %v713
    %v921 = vmul.bf16 %v258, %v714
    %v922 = vmul.bf16 %v259, %v715
    %v923 = vmul.bf16 %v260, %v707
    %v924 = vmul.bf16 %v261, %v708
    %v925 = vmul.bf16 %v262, %v709
    %v926 = vmul.bf16 %v263, %v710
    %v927 = vmul.bf16 %v264, %v711
    %v928 = vmul.bf16 %v265, %v712
    %v929 = vmul.bf16 %v266, %v713
    %v930 = vmul.bf16 %v267, %v714
    %v931 = vmul.bf16 %v268, %v715
    %v932 = vmul.bf16 %v269, %v707
    %v933 = vmul.bf16 %v270, %v708
    %v934 = vmul.bf16 %v271, %v709
    %v935 = vmul.bf16 %v272, %v710
    %v936 = vmul.bf16 %v273, %v711
    %v937 = vmul.bf16 %v274, %v712
    %v938 = vmul.bf16 %v275, %v713
    %v939 = vmul.bf16 %v276, %v714
    %v940 = vmul.bf16 %v277, %v715
    %v941 = vmul.bf16 %v278, %v707
    %v942 = vmul.bf16 %v279, %v708
    %v943 = vmul.bf16 %v280, %v709
    %v944 = vmul.bf16 %v281, %v710
    %v945 = vmul.bf16 %v282, %v711
    %v946 = vmul.bf16 %v283, %v712
    %v947 = vmul.bf16 %v284, %v713
    %v948 = vmul.bf16 %v285, %v714
    %v949 = vmul.bf16 %v286, %v715
    %v950 = vmul.bf16 %v287, %v707
    %v951 = vmul.bf16 %v288, %v708
    %v952 = vmul.bf16 %v289, %v709
    %v953 = vmul.bf16 %v290, %v710
    %v954 = vmul.bf16 %v291, %v711
    %v955 = vmul.bf16 %v292, %v712
    %v956 = vmul.bf16 %v293, %v713
    %v957 = vmul.bf16 %v294, %v714
    %v958 = vmul.bf16 %v295, %v715
    %v959 = vmul.bf16 %v296, %v707
    %v960 = vmul.bf16 %v297, %v708
    %v961 = vmul.bf16 %v298, %v709
    %v962 = vmul.bf16 %v299, %v710
    %v963 = vmul.bf16 %v300, %v711
    %v964 = vmul.bf16 %v301, %v712
    %v965 = vmul.bf16 %v302, %v713
    %v966 = vmul.bf16 %v303, %v714
    %v967 = vmul.bf16 %v304, %v715
    %v968 = vmul.bf16 %v305, %v707
    %v969 = vmul.bf16 %v306, %v708
    %v970 = vmul.bf16 %v307, %v709
    %v971 = vmul.bf16 %v308, %v710
    %v972 = vmul.bf16 %v309, %v711
    %v973 = vmul.bf16 %v310, %v712
    %v974 = vmul.bf16 %v311, %v713
    %v975 = vmul.bf16 %v312, %v714
    %v976 = vmul.bf16 %v313, %v715
    %v977 = vmul.bf16 %v314, %v707
    %v978 = vmul.bf16 %v315, %v708
    %v979 = vmul.bf16 %v316, %v709
    %v980 = vmul.bf16 %v317, %v710
    %v981 = vmul.bf16 %v318, %v711
    %v982 = vmul.bf16 %v319, %v712
    %v983 = vmul.bf16 %v320, %v713
    %v984 = vmul.bf16 %v321, %v714
    %v985 = vmul.bf16 %v322, %v715
    %v986 = vmul.bf16 %v323, %v707
    %v987 = vmul.bf16 %v324, %v708
    %v988 = vmul.bf16 %v325, %v709
    %v989 = vmul.bf16 %v326, %v710
    %v990 = vmul.bf16 %v327, %v711
    %v991 = vmul.bf16 %v328, %v712
    %v992 = vmul.bf16 %v329, %v713
    %v993 = vmul.bf16 %v330, %v714
    %v994 = vmul.bf16 %v331, %v715
    %v995 = vmul.bf16 %v332, %v707
    %v996 = vmul.bf16 %v333, %v708
    %v997 = vmul.bf16 %v334, %v709
    %v998 = vmul.bf16 %v335, %v710
    %v999 = vmul.bf16 %v336, %v711
    %v1000 = vmul.bf16 %v337, %v712
    %v1001 = vmul.bf16 %v338, %v713
    %v1002 = vmul.bf16 %v339, %v714
    %v1003 = vmul.bf16 %v340, %v715
    %v1004 = vmul.bf16 %v341, %v707
    %v1005 = vmul.bf16 %v342, %v708
    %v1006 = vmul.bf16 %v343, %v709
    %v1007 = vmul.bf16 %v344, %v710
    %v1008 = vmul.bf16 %v345, %v711
    %v1009 = vmul.bf16 %v346, %v712
    %v1010 = vmul.bf16 %v347, %v713
    %v1011 = vmul.bf16 %v348, %v714
    %v1012 = vmul.bf16 %v349, %v715
    %v1013 = vmul.bf16 %v350, %v707
    %v1014 = vmul.bf16 %v351, %v708
    %v1015 = vmul.bf16 %v352, %v709
    %v1016 = vmul.bf16 %v353, %v710
    %v1017 = vmul.bf16 %v354, %v711
    %v1018 = vmul.bf16 %v355, %v712
    %v1019 = vmul.bf16 %v356, %v713
    %v1020 = vmul.bf16 %v357, %v714
    %v1021 = vmul.bf16 %v358, %v715
    %v1022 = vmul.bf16 %v359, %v707
    %v1023 = vmul.bf16 %v360, %v708
    %v1024 = vmul.bf16 %v361, %v709
    %v1025 = vmul.bf16 %v362, %v710
    %v1026 = vmul.bf16 %v363, %v711
    %v1027 = vmul.bf16 %v364, %v712
    %v1028 = vmul.bf16 %v365, %v713
    %v1029 = vmul.bf16 %v366, %v714
    %v1030 = vmul.bf16 %v367, %v715
    %v1031 = vmul.bf16 %v368, %v707
    %v1032 = vmul.bf16 %v369, %v708
    %v1033 = vmul.bf16 %v370, %v709
    %v1034 = vmul.bf16 %v371, %v710
    %v1035 = vmul.bf16 %v372, %v711
    %v1036 = vmul.bf16 %v373, %v712
    %v1037 = vmul.bf16 %v374, %v713
    %v1038 = vmul.bf16 %v375, %v714
    %v1039 = vmul.bf16 %v376, %v715
    %v1040 = vmul.bf16 %v377, %v707
    %v1041 = vmul.bf16 %v378, %v708
    %v1042 = vmul.bf16 %v379, %v709
    %v1043 = vmul.bf16 %v380, %v710
    %v1044 = vmul.bf16 %v381, %v711
    %v1045 = vmul.bf16 %v382, %v712
    %v1046 = vmul.bf16 %v383, %v713
    %v1047 = vmul.bf16 %v384, %v714
    %v1048 = vmul.bf16 %v385, %v715
    %v1049 = vmul.bf16 %v386, %v707
    %v1050 = vmul.bf16 %v387, %v708
    %v1051 = vmul.bf16 %v388, %v709
    %v1052 = vmul.bf16 %v389, %v710
    %v1053 = vmul.bf16 %v390, %v711
    %v1054 = vmul.bf16 %v391, %v712
    %v1055 = vmul.bf16 %v392, %v713
    %v1056 = vmul.bf16 %v393, %v714
    %v1057 = vmul.bf16 %v394, %v715
    %v1058 = vmul.bf16 %v395, %v707
    %v1059 = vmul.bf16 %v396, %v708
    %v1060 = vmul.bf16 %v397, %v709
    %v1061 = vmul.bf16 %v398, %v710
    %v1062 = vmul.bf16 %v399, %v711
    %v1063 = vmul.bf16 %v400, %v712
    %v1064 = vmul.bf16 %v401, %v713
    %v1065 = vmul.bf16 %v402, %v714
    %v1066 = vmul.bf16 %v403, %v715
    %v1067 = vmul.bf16 %v404, %v707
    %v1068 = vmul.bf16 %v405, %v708
    %v1069 = vmul.bf16 %v406, %v709
    %v1070 = vmul.bf16 %v407, %v710
    %v1071 = vmul.bf16 %v408, %v711
    %v1072 = vmul.bf16 %v409, %v712
    %v1073 = vmul.bf16 %v410, %v713
    %v1074 = vmul.bf16 %v411, %v714
    %v1075 = vmul.bf16 %v412, %v715
    %v1076 = vmul.bf16 %v413, %v707
    %v1077 = vmul.bf16 %v414, %v708
    %v1078 = vmul.bf16 %v415, %v709
    %v1079 = vmul.bf16 %v416, %v710
    %v1080 = vmul.bf16 %v417, %v711
    %v1081 = vmul.bf16 %v418, %v712
    %v1082 = vmul.bf16 %v419, %v713
    %v1083 = vmul.bf16 %v420, %v714
    %v1084 = vmul.bf16 %v421, %v715
    %v1085 = vmul.bf16 %v422, %v707
    %v1086 = vmul.bf16 %v423, %v708
    %v1087 = vmul.bf16 %v424, %v709
    %v1088 = vmul.bf16 %v425, %v710
    %v1089 = vmul.bf16 %v426, %v711
    %v1090 = vmul.bf16 %v427, %v712
    %v1091 = vmul.bf16 %v428, %v713
    %v1092 = vmul.bf16 %v429, %v714
    %v1093 = vmul.bf16 %v430, %v715
    %v1094 = vmul.bf16 %v431, %v707
    %v1095 = vmul.bf16 %v432, %v708
    %v1096 = vmul.bf16 %v433, %v709
    %v1097 = vmul.bf16 %v434, %v710
    %v1098 = vmul.bf16 %v435, %v711
    %v1099 = vmul.bf16 %v436, %v712
    %v1100 = vmul.bf16 %v437, %v713
    %v1101 = vmul.bf16 %v438, %v714
    %v1102 = vmul.bf16 %v439, %v715
    %v1103 = vmul.bf16 %v440, %v707
    %v1104 = vmul.bf16 %v441, %v708
    %v1105 = vmul.bf16 %v442, %v709
    %v1106 = vmul.bf16 %v443, %v710
    %v1107 = vmul.bf16 %v444, %v711
    %v1108 = vmul.bf16 %v445, %v712
    %v1109 = vmul.bf16 %v446, %v713
    %v1110 = vmul.bf16 %v447, %v714
    %v1111 = vmul.bf16 %v448, %v715
    %v1112 = vld [vmem:[%s1] sm:$0xff]
    %v1113 = vld [vmem:[%s1 + $0x8] sm:$0xff]
    %v1114 = vld [vmem:[%s1 + $0x10] sm:$0xff]
    %v1115 = vld [vmem:[%s1 + $0x18] sm:$0xff]
    %v1116 = vld [vmem:[%s1 + $0x20] sm:$0xff]
    %v1117 = vld [vmem:[%s1 + $0x28] sm:$0xff]
    %v1118 = vld [vmem:[%s1 + $0x30] sm:$0xff]
    %v1119 = vld [vmem:[%s1 + $0x38] sm:$0xff]
    %v1120 = vld [vmem:[%s1 + $0x40] sm:$0xff]
    %v1121 = vld [vmem:[%s1 + $0x48] sm:$0xff]
    %v1122 = vld [vmem:[%s1 + $0x50] sm:$0xff]
    %v1123 = vld [vmem:[%s1 + $0x58] sm:$0xff]
    %v1124 = vld [vmem:[%s1 + $0x60] sm:$0xff]
    %v1125 = vld [vmem:[%s1 + $0x68] sm:$0xff]
    %v1126 = vld [vmem:[%s1 + $0x70] sm:$0xff]
    %v1127 = vld [vmem:[%s1 + $0x78] sm:$0xff]
    %v1128 = vld [vmem:[%s1 + $0x80] sm:$0xff]
    %v1129 = vld [vmem:[%s1 + $0x88] sm:$0xff]
    %v1130 = vld [vmem:[%s1 + $0x90] sm:$0xff]
    %v1131 = vld [vmem:[%s1 + $0x98] sm:$0xff]
    %v1132 = vld [vmem:[%s1 + $0xa0] sm:$0xff]
    %v1133 = vld [vmem:[%s1 + $0xa8] sm:$0xff]
    %v1134 = vld [vmem:[%s1 + $0xb0] sm:$0xff]
    %v1135 = vld [vmem:[%s1 + $0xb8] sm:$0xff]
    %v1136 = vld [vmem:[%s1 + $0xc0] sm:$0xff]
    %v1137 = vld [vmem:[%s1 + $0xc8] sm:$0xff]
    %v1138 = vld [vmem:[%s1 + $0xd0] sm:$0xff]
    %v1139 = vld [vmem:[%s1 + $0xd8] sm:$0xff]
    %v1140 = vld [vmem:[%s1 + $0xe0] sm:$0xff]
    %v1141 = vld [vmem:[%s1 + $0xe8] sm:$0xff]
    %v1142 = vld [vmem:[%s1 + $0xf0] sm:$0xff]
    %v1143 = vld [vmem:[%s1 + $0xf8] sm:$0xff]
    %v1144 = vld [vmem:[%s1 + $0x100] sm:$0xff]
    %v1145 = vld [vmem:[%s1 + $0x108] sm:$0xff]
    %v1146 = vld [vmem:[%s1 + $0x110] sm:$0xff]
    %v1147 = vld [vmem:[%s1 + $0x118] sm:$0xff]
    %v1148 = vld [vmem:[%s1 + $0x120] sm:$0xff]
    %v1149 = vld [vmem:[%s1 + $0x128] sm:$0xff]
    %v1150 = vld [vmem:[%s1 + $0x130] sm:$0xff]
    %v1151 = vld [vmem:[%s1 + $0x138] sm:$0xff]
    %v1152 = vld [vmem:[%s1 + $0x140] sm:$0xff]
    %v1153 = vld [vmem:[%s1 + $0x148] sm:$0xff]
    %v1154 = vld [vmem:[%s1 + $0x150] sm:$0xff]
    %v1155 = vld [vmem:[%s1 + $0x158] sm:$0xff]
    %v1156 = vld [vmem:[%s1 + $0x160] sm:$0xff]
    %v1157 = vld [vmem:[%s1 + $0x168] sm:$0xff]
    %v1158 = vld [vmem:[%s1 + $0x170] sm:$0xff]
    %v1159 = vld [vmem:[%s1 + $0x178] sm:$0xff]
    %v1160 = vld [vmem:[%s1 + $0x180] sm:$0xff]
    %v1161 = vld [vmem:[%s1 + $0x188] sm:$0xff]
    %v1162 = vld [vmem:[%s1 + $0x190] sm:$0xff]
    %v1163 = vld [vmem:[%s1 + $0x198] sm:$0xff]
    %v1164 = vld [vmem:[%s1 + $0x1a0] sm:$0xff]
    %v1165 = vld [vmem:[%s1 + $0x1a8] sm:$0xff]
    %v1166 = vld [vmem:[%s1 + $0x1b0] sm:$0xff]
    %v1167 = vld [vmem:[%s1 + $0x1b8] sm:$0xff]
    %v1168 = vld [vmem:[%s1 + $0x1c0] sm:$0xff]
    %v1169 = vld [vmem:[%s1 + $0x1c8] sm:$0xff]
    %v1170 = vld [vmem:[%s1 + $0x1d0] sm:$0xff]
    %v1171 = vld [vmem:[%s1 + $0x1d8] sm:$0xff]
    %v1172 = vld [vmem:[%s1 + $0x1e0] sm:$0xff]
    %v1173 = vld [vmem:[%s1 + $0x1e8] sm:$0xff]
    %v1174 = vld [vmem:[%s1 + $0x1f0] sm:$0xff]
    %v1175 = vld [vmem:[%s1 + $0x1f8] sm:$0xff]
    %v1176 = vld [vmem:[%s1 + $0x200] sm:$0xff]
    %v1177 = vld [vmem:[%s1 + $0x208] sm:$0xff]
    %v1178 = vld [vmem:[%s1 + $0x210] sm:$0xff]
    %v1179 = vld [vmem:[%s1 + $0x218] sm:$0xff]
    %v1180 = vld [vmem:[%s1 + $0x220] sm:$0xff]
    %v1181 = vld [vmem:[%s1 + $0x228] sm:$0xff]
    %v1182 = vld [vmem:[%s1 + $0x230] sm:$0xff]
    %v1183 = vld [vmem:[%s1 + $0x238] sm:$0xff]
    %v1184 = vld [vmem:[%s1 + $0x240] sm:$0xff]
    %v1185 = vld [vmem:[%s1 + $0x248] sm:$0xff]
    %v1186 = vld [vmem:[%s1 + $0x250] sm:$0xff]
    %v1187 = vld [vmem:[%s1 + $0x258] sm:$0xff]
    %v1188 = vld [vmem:[%s1 + $0x260] sm:$0xff]
    %v1189 = vld [vmem:[%s1 + $0x268] sm:$0xff]
    %v1190 = vld [vmem:[%s1 + $0x270] sm:$0xff]
    %v1191 = vld [vmem:[%s1 + $0x278] sm:$0xff]
    %v1192 = vld [vmem:[%s1 + $0x280] sm:$0xff]
    %v1193 = vld [vmem:[%s1 + $0x288] sm:$0xff]
    %v1194 = vld [vmem:[%s1 + $0x290] sm:$0xff]
    %v1195 = vld [vmem:[%s1 + $0x298] sm:$0xff]
    %v1196 = vld [vmem:[%s1 + $0x2a0] sm:$0xff]
    %v1197 = vld [vmem:[%s1 + $0x2a8] sm:$0xff]
    %v1198 = vld [vmem:[%s1 + $0x2b0] sm:$0xff]
    %v1199 = vld [vmem:[%s1 + $0x2b8] sm:$0xff]
    %v1200 = vld [vmem:[%s1 + $0x2c0] sm:$0xff]
    %v1201 = vld [vmem:[%s1 + $0x2c8] sm:$0xff]
    %v1202 = vld [vmem:[%s1 + $0x2d0] sm:$0xff]
    %v1203 = vld [vmem:[%s1 + $0x2d8] sm:$0xff]
    %v1204 = vld [vmem:[%s1 + $0x2e0] sm:$0xff]
    %v1205 = vld [vmem:[%s1 + $0x2e8] sm:$0xff]
    %v1206 = vld [vmem:[%s1 + $0x2f0] sm:$0xff]
    %v1207 = vld [vmem:[%s1 + $0x2f8] sm:$0xff]
    %v1208 = vld [vmem:[%s1 + $0x300] sm:$0xff]
    %v1209 = vld [vmem:[%s1 + $0x308] sm:$0xff]
    %v1210 = vld [vmem:[%s1 + $0x310] sm:$0xff]
    %v1211 = vld [vmem:[%s1 + $0x318] sm:$0xff]
    %v1212 = vld [vmem:[%s1 + $0x320] sm:$0xff]
    %v1213 = vld [vmem:[%s1 + $0x328] sm:$0xff]
    %v1214 = vld [vmem:[%s1 + $0x330] sm:$0xff]
    %v1215 = vld [vmem:[%s1 + $0x338] sm:$0xff]
    %v1216 = vld [vmem:[%s1 + $0x340] sm:$0xff]
    %v1217 = vld [vmem:[%s1 + $0x348] sm:$0xff]
    %v1218 = vld [vmem:[%s1 + $0x350] sm:$0xff]
    %v1219 = vld [vmem:[%s1 + $0x358] sm:$0xff]
    %v1220 = vld [vmem:[%s1 + $0x360] sm:$0xff]
    %v1221 = vld [vmem:[%s1 + $0x368] sm:$0xff]
    %v1222 = vld [vmem:[%s1 + $0x370] sm:$0xff]
    %v1223 = vld [vmem:[%s1 + $0x378] sm:$0xff]
    %v1224 = vld [vmem:[%s1 + $0x380] sm:$0xff]
    %v1225 = vld [vmem:[%s1 + $0x388] sm:$0xff]
    %v1226 = vld [vmem:[%s1 + $0x390] sm:$0xff]
    %v1227 = vld [vmem:[%s1 + $0x398] sm:$0xff]
    %v1228 = vld [vmem:[%s1 + $0x3a0] sm:$0xff]
    %v1229 = vld [vmem:[%s1 + $0x3a8] sm:$0xff]
    %v1230 = vld [vmem:[%s1 + $0x3b0] sm:$0xff]
    %v1231 = vld [vmem:[%s1 + $0x3b8] sm:$0xff]
    %v1232 = vld [vmem:[%s1 + $0x3c0] sm:$0xff]
    %v1233 = vld [vmem:[%s1 + $0x3c8] sm:$0xff]
    %v1234 = vld [vmem:[%s1 + $0x3d0] sm:$0xff]
    %v1235 = vld [vmem:[%s1 + $0x3d8] sm:$0xff]
    %v1236 = vld [vmem:[%s1 + $0x3e0] sm:$0xff]
    %v1237 = vld [vmem:[%s1 + $0x3e8] sm:$0xff]
    %v1238 = vld [vmem:[%s1 + $0x3f0] sm:$0xff]
    %v1239 = vld [vmem:[%s1 + $0x3f8] sm:$0xff]
    %v1240 = vld [vmem:[%s1 + $0x400] sm:$0xff]
    %v1241 = vld [vmem:[%s1 + $0x408] sm:$0xff]
    %v1242 = vld [vmem:[%s1 + $0x410] sm:$0xff]
    %v1243 = vld [vmem:[%s1 + $0x418] sm:$0xff]
    %v1244 = vld [vmem:[%s1 + $0x420] sm:$0xff]
    %v1245 = vld [vmem:[%s1 + $0x428] sm:$0xff]
    %v1246 = vld [vmem:[%s1 + $0x430] sm:$0xff]
    %v1247 = vld [vmem:[%s1 + $0x438] sm:$0xff]
    %v1248 = vld [vmem:[%s1 + $0x440] sm:$0xff]
    %v1249 = vld [vmem:[%s1 + $0x448] sm:$0xff]
    %v1250 = vld [vmem:[%s1 + $0x450] sm:$0xff]
    %v1251 = vld [vmem:[%s1 + $0x458] sm:$0xff]
    %v1252 = vld [vmem:[%s1 + $0x460] sm:$0xff]
    %v1253 = vld [vmem:[%s1 + $0x468] sm:$0xff]
    %v1254 = vld [vmem:[%s1 + $0x470] sm:$0xff]
    %v1255 = vld [vmem:[%s1 + $0x478] sm:$0xff]
    %v1256 = vld [vmem:[%s1 + $0x480] sm:$0xff]
    %v1257 = vld [vmem:[%s1 + $0x488] sm:$0xff]
    %v1258 = vld [vmem:[%s1 + $0x490] sm:$0xff]
    %v1259 = vld [vmem:[%s1 + $0x498] sm:$0xff]
    %v1260 = vld [vmem:[%s1 + $0x4a0] sm:$0xff]
    %v1261 = vld [vmem:[%s1 + $0x4a8] sm:$0xff]
    %v1262 = vld [vmem:[%s1 + $0x4b0] sm:$0xff]
    %v1263 = vld [vmem:[%s1 + $0x4b8] sm:$0xff]
    %v1264 = vld [vmem:[%s1 + $0x4c0] sm:$0xff]
    %v1265 = vld [vmem:[%s1 + $0x4c8] sm:$0xff]
    %v1266 = vld [vmem:[%s1 + $0x4d0] sm:$0xff]
    %v1267 = vld [vmem:[%s1 + $0x4d8] sm:$0xff]
    %v1268 = vld [vmem:[%s1 + $0x4e0] sm:$0xff]
    %v1269 = vld [vmem:[%s1 + $0x4e8] sm:$0xff]
    %v1270 = vld [vmem:[%s1 + $0x4f0] sm:$0xff]
    %v1271 = vld [vmem:[%s1 + $0x4f8] sm:$0xff]
    %v1272 = vld [vmem:[%s1 + $0x500] sm:$0xff]
    %v1273 = vld [vmem:[%s1 + $0x508] sm:$0xff]
    %v1274 = vld [vmem:[%s1 + $0x510] sm:$0xff]
    %v1275 = vld [vmem:[%s1 + $0x518] sm:$0xff]
    %v1276 = vld [vmem:[%s1 + $0x520] sm:$0xff]
    %v1277 = vld [vmem:[%s1 + $0x528] sm:$0xff]
    %v1278 = vld [vmem:[%s1 + $0x530] sm:$0xff]
    %v1279 = vld [vmem:[%s1 + $0x538] sm:$0xff]
    %v1280 = vld [vmem:[%s1 + $0x540] sm:$0xff]
    %v1281 = vld [vmem:[%s1 + $0x548] sm:$0xff]
    %v1282 = vld [vmem:[%s1 + $0x550] sm:$0xff]
    %v1283 = vld [vmem:[%s1 + $0x558] sm:$0xff]
    %v1284 = vld [vmem:[%s1 + $0x560] sm:$0xff]
    %v1285 = vld [vmem:[%s1 + $0x568] sm:$0xff]
    %v1286 = vld [vmem:[%s1 + $0x570] sm:$0xff]
    %v1287 = vld [vmem:[%s1 + $0x578] sm:$0xff]
    %v1288 = vld [vmem:[%s1 + $0x580] sm:$0xff]
    %v1289 = vld [vmem:[%s1 + $0x588] sm:$0xff]
    %v1290 = vld [vmem:[%s1 + $0x590] sm:$0xff]
    %v1291 = vld [vmem:[%s1 + $0x598] sm:$0xff]
    %v1292 = vld [vmem:[%s1 + $0x5a0] sm:$0xff]
    %v1293 = vld [vmem:[%s1 + $0x5a8] sm:$0xff]
    %v1294 = vld [vmem:[%s1 + $0x5b0] sm:$0xff]
    %v1295 = vld [vmem:[%s1 + $0x5b8] sm:$0xff]
    %v1296 = vld [vmem:[%s1 + $0x5c0] sm:$0xff]
    %v1297 = vld [vmem:[%s1 + $0x5c8] sm:$0xff]
    %v1298 = vld [vmem:[%s1 + $0x5d0] sm:$0xff]
    %v1299 = vld [vmem:[%s1 + $0x5d8] sm:$0xff]
    %v1300 = vld [vmem:[%s1 + $0x5e0] sm:$0xff]
    %v1301 = vld [vmem:[%s1 + $0x5e8] sm:$0xff]
    %v1302 = vld [vmem:[%s1 + $0x5f0] sm:$0xff]
    %v1303 = vld [vmem:[%s1 + $0x5f8] sm:$0xff]
    %v1304 = vld [vmem:[%s1 + $0x600] sm:$0xff]
    %v1305 = vld [vmem:[%s1 + $0x608] sm:$0xff]
    %v1306 = vld [vmem:[%s1 + $0x610] sm:$0xff]
    %v1307 = vld [vmem:[%s1 + $0x618] sm:$0xff]
    %v1308 = vld [vmem:[%s1 + $0x620] sm:$0xff]
    %v1309 = vld [vmem:[%s1 + $0x628] sm:$0xff]
    %v1310 = vld [vmem:[%s1 + $0x630] sm:$0xff]
    %v1311 = vld [vmem:[%s1 + $0x638] sm:$0xff]
    %v1312 = vld [vmem:[%s1 + $0x640] sm:$0xff]
    %v1313 = vld [vmem:[%s1 + $0x648] sm:$0xff]
    %v1314 = vld [vmem:[%s1 + $0x650] sm:$0xff]
    %v1315 = vld [vmem:[%s1 + $0x658] sm:$0xff]
    %v1316 = vld [vmem:[%s1 + $0x660] sm:$0xff]
    %v1317 = vld [vmem:[%s1 + $0x668] sm:$0xff]
    %v1318 = vld [vmem:[%s1 + $0x670] sm:$0xff]
    %v1319 = vld [vmem:[%s1 + $0x678] sm:$0xff]
    %v1320 = vld [vmem:[%s1 + $0x680] sm:$0xff]
    %v1321 = vld [vmem:[%s1 + $0x688] sm:$0xff]
    %v1322 = vld [vmem:[%s1 + $0x690] sm:$0xff]
    %v1323 = vld [vmem:[%s1 + $0x698] sm:$0xff]
    %v1324 = vld [vmem:[%s1 + $0x6a0] sm:$0xff]
    %v1325 = vld [vmem:[%s1 + $0x6a8] sm:$0xff]
    %v1326 = vld [vmem:[%s1 + $0x6b0] sm:$0xff]
    %v1327 = vld [vmem:[%s1 + $0x6b8] sm:$0xff]
    %v1328 = vld [vmem:[%s1 + $0x6c0] sm:$0xff]
    %v1329 = vld [vmem:[%s1 + $0x6c8] sm:$0xff]
    %v1330 = vld [vmem:[%s1 + $0x6d0] sm:$0xff]
    %v1331 = vld [vmem:[%s1 + $0x6d8] sm:$0xff]
    %v1332 = vld [vmem:[%s1 + $0x6e0] sm:$0xff]
    %v1333 = vld [vmem:[%s1 + $0x6e8] sm:$0xff]
    %v1334 = vld [vmem:[%s1 + $0x6f0] sm:$0xff]
    %v1335 = vld [vmem:[%s1 + $0x6f8] sm:$0xff]
    %v1336 = vld [vmem:[%s1 + $0x700] sm:$0xff]
    %v1337 = vld [vmem:[%s1 + $0x708] sm:$0xff]
    %v1338 = vld [vmem:[%s1 + $0x710] sm:$0xff]
    %v1339 = vld [vmem:[%s1 + $0x718] sm:$0xff]
    %v1340 = vld [vmem:[%s1 + $0x720] sm:$0xff]
    %v1341 = vld [vmem:[%s1 + $0x728] sm:$0xff]
    %v1342 = vld [vmem:[%s1 + $0x730] sm:$0xff]
    %v1343 = vld [vmem:[%s1 + $0x738] sm:$0xff]
    %v1344 = vld [vmem:[%s1 + $0x740] sm:$0xff]
    %v1345 = vld [vmem:[%s1 + $0x748] sm:$0xff]
    %v1346 = vld [vmem:[%s1 + $0x750] sm:$0xff]
    %v1347 = vld [vmem:[%s1 + $0x758] sm:$0xff]
    %v1348 = vld [vmem:[%s1 + $0x760] sm:$0xff]
    %v1349 = vld [vmem:[%s1 + $0x768] sm:$0xff]
    %v1350 = vld [vmem:[%s1 + $0x770] sm:$0xff]
    %v1351 = vld [vmem:[%s1 + $0x778] sm:$0xff]
    %v1352 = vld [vmem:[%s1 + $0x780] sm:$0xff]
    %v1353 = vld [vmem:[%s1 + $0x788] sm:$0xff]
    %v1354 = vld [vmem:[%s1 + $0x790] sm:$0xff]
    %v1355 = vld [vmem:[%s1 + $0x798] sm:$0xff]
    %v1356 = vld [vmem:[%s1 + $0x7a0] sm:$0xff]
    %v1357 = vld [vmem:[%s1 + $0x7a8] sm:$0xff]
    %v1358 = vld [vmem:[%s1 + $0x7b0] sm:$0xff]
    %v1359 = vld [vmem:[%s1 + $0x7b8] sm:$0xff]
    %v1360 = vld [vmem:[%s1 + $0x7c0] sm:$0xff]
    %v1361 = vld [vmem:[%s1 + $0x7c8] sm:$0xff]
    %v1362 = vld [vmem:[%s1 + $0x7d0] sm:$0xff]
    %v1363 = vld [vmem:[%s1 + $0x7d8] sm:$0xff]
    %v1364 = vld [vmem:[%s1 + $0x7e0] sm:$0xff]
    %v1365 = vld [vmem:[%s1 + $0x7e8] sm:$0xff]
    %v1366 = vld [vmem:[%s1 + $0x7f0] sm:$0xff]
    %v1367 = vld [vmem:[%s1 + $0x7f8] sm:$0xff]
    %v1368 = vld [vmem:[%s1 + $0x800] sm:$0xff]
    %v1369 = vld [vmem:[%s1 + $0x808] sm:$0xff]
    %v1370 = vpack.c.bf16 %v1113, %v1112
    %v1371 = vpack.c.bf16 %v1115, %v1114
    %v1372 = vpack.c.bf16 %v1117, %v1116
    %v1373 = vpack.c.bf16 %v1119, %v1118
    %v1374 = vpack.c.bf16 %v1121, %v1120
    %v1375 = vpack.c.bf16 %v1123, %v1122
    %v1376 = vpack.c.bf16 %v1125, %v1124
    %v1377 = vpack.c.bf16 %v1127, %v1126
    %v1378 = vpack.c.bf16 %v1129, %v1128
    %v1379 = vpack.c.bf16 %v1131, %v1130
    %v1380 = vpack.c.bf16 %v1133, %v1132
    %v1381 = vpack.c.bf16 %v1135, %v1134
    %v1382 = vpack.c.bf16 %v1137, %v1136
    %v1383 = vpack.c.bf16 %v1139, %v1138
    %v1384 = vpack.c.bf16 %v1141, %v1140
    %v1385 = vpack.c.bf16 %v1143, %v1142
    %v1386 = vpack.c.bf16 %v1145, %v1144
    %v1387 = vpack.c.bf16 %v1147, %v1146
    %v1388 = vpack.c.bf16 %v1149, %v1148
    %v1389 = vpack.c.bf16 %v1151, %v1150
    %v1390 = vpack.c.bf16 %v1153, %v1152
    %v1391 = vpack.c.bf16 %v1155, %v1154
    %v1392 = vpack.c.bf16 %v1157, %v1156
    %v1393 = vpack.c.bf16 %v1159, %v1158
    %v1394 = vpack.c.bf16 %v1161, %v1160
    %v1395 = vpack.c.bf16 %v1163, %v1162
    %v1396 = vpack.c.bf16 %v1165, %v1164
    %v1397 = vpack.c.bf16 %v1167, %v1166
    %v1398 = vpack.c.bf16 %v1169, %v1168
    %v1399 = vpack.c.bf16 %v1171, %v1170
    %v1400 = vpack.c.bf16 %v1173, %v1172
    %v1401 = vpack.c.bf16 %v1175, %v1174
    %v1402 = vpack.c.bf16 %v1177, %v1176
    %v1403 = vpack.c.bf16 %v1179, %v1178
    %v1404 = vpack.c.bf16 %v1181, %v1180
    %v1405 = vpack.c.bf16 %v1183, %v1182
    %v1406 = vpack.c.bf16 %v1185, %v1184
    %v1407 = vpack.c.bf16 %v1187, %v1186
    %v1408 = vpack.c.bf16 %v1189, %v1188
    %v1409 = vpack.c.bf16 %v1191, %v1190
    %v1410 = vpack.c.bf16 %v1193, %v1192
    %v1411 = vpack.c.bf16 %v1195, %v1194
    %v1412 = vpack.c.bf16 %v1197, %v1196
    %v1413 = vpack.c.bf16 %v1199, %v1198
    %v1414 = vpack.c.bf16 %v1201, %v1200
    %v1415 = vpack.c.bf16 %v1203, %v1202
    %v1416 = vpack.c.bf16 %v1205, %v1204
    %v1417 = vpack.c.bf16 %v1207, %v1206
    %v1418 = vpack.c.bf16 %v1209, %v1208
    %v1419 = vpack.c.bf16 %v1211, %v1210
    %v1420 = vpack.c.bf16 %v1213, %v1212
    %v1421 = vpack.c.bf16 %v1215, %v1214
    %v1422 = vpack.c.bf16 %v1217, %v1216
    %v1423 = vpack.c.bf16 %v1219, %v1218
    %v1424 = vpack.c.bf16 %v1221, %v1220
    %v1425 = vpack.c.bf16 %v1223, %v1222
    %v1426 = vpack.c.bf16 %v1225, %v1224
    %v1427 = vpack.c.bf16 %v1227, %v1226
    %v1428 = vpack.c.bf16 %v1229, %v1228
    %v1429 = vpack.c.bf16 %v1231, %v1230
    %v1430 = vpack.c.bf16 %v1233, %v1232
    %v1431 = vpack.c.bf16 %v1235, %v1234
    %v1432 = vpack.c.bf16 %v1237, %v1236
    %v1433 = vpack.c.bf16 %v1239, %v1238
    %v1434 = vpack.c.bf16 %v1241, %v1240
    %v1435 = vpack.c.bf16 %v1243, %v1242
    %v1436 = vpack.c.bf16 %v1245, %v1244
    %v1437 = vpack.c.bf16 %v1247, %v1246
    %v1438 = vpack.c.bf16 %v1249, %v1248
    %v1439 = vpack.c.bf16 %v1251, %v1250
    %v1440 = vpack.c.bf16 %v1253, %v1252
    %v1441 = vpack.c.bf16 %v1255, %v1254
    %v1442 = vpack.c.bf16 %v1257, %v1256
    %v1443 = vpack.c.bf16 %v1259, %v1258
    %v1444 = vpack.c.bf16 %v1261, %v1260
    %v1445 = vpack.c.bf16 %v1263, %v1262
    %v1446 = vpack.c.bf16 %v1265, %v1264
    %v1447 = vpack.c.bf16 %v1267, %v1266
    %v1448 = vpack.c.bf16 %v1269, %v1268
    %v1449 = vpack.c.bf16 %v1271, %v1270
    %v1450 = vpack.c.bf16 %v1273, %v1272
    %v1451 = vpack.c.bf16 %v1275, %v1274
    %v1452 = vpack.c.bf16 %v1277, %v1276
    %v1453 = vpack.c.bf16 %v1279, %v1278
    %v1454 = vpack.c.bf16 %v1281, %v1280
    %v1455 = vpack.c.bf16 %v1283, %v1282
    %v1456 = vpack.c.bf16 %v1285, %v1284
    %v1457 = vpack.c.bf16 %v1287, %v1286
    %v1458 = vpack.c.bf16 %v1289, %v1288
    %v1459 = vpack.c.bf16 %v1291, %v1290
    %v1460 = vpack.c.bf16 %v1293, %v1292
    %v1461 = vpack.c.bf16 %v1295, %v1294
    %v1462 = vpack.c.bf16 %v1297, %v1296
    %v1463 = vpack.c.bf16 %v1299, %v1298
    %v1464 = vpack.c.bf16 %v1301, %v1300
    %v1465 = vpack.c.bf16 %v1303, %v1302
    %v1466 = vpack.c.bf16 %v1305, %v1304
    %v1467 = vpack.c.bf16 %v1307, %v1306
    %v1468 = vpack.c.bf16 %v1309, %v1308
    %v1469 = vpack.c.bf16 %v1311, %v1310
    %v1470 = vpack.c.bf16 %v1313, %v1312
    %v1471 = vpack.c.bf16 %v1315, %v1314
    %v1472 = vpack.c.bf16 %v1317, %v1316
    %v1473 = vpack.c.bf16 %v1319, %v1318
    %v1474 = vpack.c.bf16 %v1321, %v1320
    %v1475 = vpack.c.bf16 %v1323, %v1322
    %v1476 = vpack.c.bf16 %v1325, %v1324
    %v1477 = vpack.c.bf16 %v1327, %v1326
    %v1478 = vpack.c.bf16 %v1329, %v1328
    %v1479 = vpack.c.bf16 %v1331, %v1330
    %v1480 = vpack.c.bf16 %v1333, %v1332
    %v1481 = vpack.c.bf16 %v1335, %v1334
    %v1482 = vpack.c.bf16 %v1337, %v1336
    %v1483 = vpack.c.bf16 %v1339, %v1338
    %v1484 = vpack.c.bf16 %v1341, %v1340
    %v1485 = vpack.c.bf16 %v1343, %v1342
    %v1486 = vpack.c.bf16 %v1345, %v1344
    %v1487 = vpack.c.bf16 %v1347, %v1346
    %v1488 = vpack.c.bf16 %v1349, %v1348
    %v1489 = vpack.c.bf16 %v1351, %v1350
    %v1490 = vpack.c.bf16 %v1353, %v1352
    %v1491 = vpack.c.bf16 %v1355, %v1354
    %v1492 = vpack.c.bf16 %v1357, %v1356
    %v1493 = vpack.c.bf16 %v1359, %v1358
    %v1494 = vpack.c.bf16 %v1361, %v1360
    %v1495 = vpack.c.bf16 %v1363, %v1362
    %v1496 = vpack.c.bf16 %v1365, %v1364
    %v1497 = vpack.c.bf16 %v1367, %v1366
    %v1498 = vpack.c.bf16 %v1369, %v1368
    %v1886 = vunpack.c.l.b16 %v725
    %v1887 = vunpack.c.h.b16 %v725
    %v1888 = vunpack.c.l.b16 %v726
    %v1889 = vunpack.c.h.b16 %v726
    %v1890 = vunpack.c.l.b16 %v727
    %v1891 = vunpack.c.h.b16 %v727
    %v1892 = vunpack.c.l.b16 %v728
    %v1893 = vunpack.c.h.b16 %v728
    %v1894 = vunpack.c.l.b16 %v729
    %v1895 = vunpack.c.h.b16 %v729
    %v1896 = vunpack.c.l.b16 %v730
    %v1897 = vunpack.c.h.b16 %v730
    %v1898 = vunpack.c.l.b16 %v731
    %v1899 = vunpack.c.h.b16 %v731
    %v1900 = vunpack.c.l.b16 %v732
    %v1901 = vunpack.c.h.b16 %v732
    %v1902 = vunpack.c.l.b16 %v733
    %v1903 = vunpack.c.l.b16 %v734
    %v1904 = vunpack.c.h.b16 %v734
    %v1905 = vunpack.c.l.b16 %v735
    %v1906 = vunpack.c.h.b16 %v735
    %v1907 = vunpack.c.l.b16 %v736
    %v1908 = vunpack.c.h.b16 %v736
    %v1909 = vunpack.c.l.b16 %v737
    %v1910 = vunpack.c.h.b16 %v737
    %v1911 = vunpack.c.l.b16 %v738
    %v1912 = vunpack.c.h.b16 %v738
    %v1913 = vunpack.c.l.b16 %v739
    %v1914 = vunpack.c.h.b16 %v739
    %v1915 = vunpack.c.l.b16 %v740
    %v1916 = vunpack.c.h.b16 %v740
    %v1917 = vunpack.c.l.b16 %v741
    %v1918 = vunpack.c.h.b16 %v741
    %v1919 = vunpack.c.l.b16 %v742
    %v1920 = vunpack.c.l.b16 %v743
    %v1921 = vunpack.c.h.b16 %v743
    %v1922 = vunpack.c.l.b16 %v744
    %v1923 = vunpack.c.h.b16 %v744
    %v1924 = vunpack.c.l.b16 %v745
    %v1925 = vunpack.c.h.b16 %v745
    %v1926 = vunpack.c.l.b16 %v746
    %v1927 = vunpack.c.h.b16 %v746
    %v1928 = vunpack.c.l.b16 %v747
    %v1929 = vunpack.c.h.b16 %v747
    %v1930 = vunpack.c.l.b16 %v748
    %v1931 = vunpack.c.h.b16 %v748
    %v1932 = vunpack.c.l.b16 %v749
    %v1933 = vunpack.c.h.b16 %v749
    %v1934 = vunpack.c.l.b16 %v750
    %v1935 = vunpack.c.h.b16 %v750
    %v1936 = vunpack.c.l.b16 %v751
    %v1937 = vunpack.c.l.b16 %v752
    %v1938 = vunpack.c.h.b16 %v752
    %v1939 = vunpack.c.l.b16 %v753
    %v1940 = vunpack.c.h.b16 %v753
    %v1941 = vunpack.c.l.b16 %v754
    %v1942 = vunpack.c.h.b16 %v754
    %v1943 = vunpack.c.l.b16 %v755
    %v1944 = vunpack.c.h.b16 %v755
    %v1945 = vunpack.c.l.b16 %v756
    %v1946 = vunpack.c.h.b16 %v756
    %v1947 = vunpack.c.l.b16 %v757
    %v1948 = vunpack.c.h.b16 %v757
    %v1949 = vunpack.c.l.b16 %v758
    %v1950 = vunpack.c.h.b16 %v758
    %v1951 = vunpack.c.l.b16 %v759
    %v1952 = vunpack.c.h.b16 %v759
    %v1953 = vunpack.c.l.b16 %v760
    %v1954 = vunpack.c.l.b16 %v761
    %v1955 = vunpack.c.h.b16 %v761
    %v1956 = vunpack.c.l.b16 %v762
    %v1957 = vunpack.c.h.b16 %v762
    %v1958 = vunpack.c.l.b16 %v763
    %v1959 = vunpack.c.h.b16 %v763
    %v1960 = vunpack.c.l.b16 %v764
    %v1961 = vunpack.c.h.b16 %v764
    %v1962 = vunpack.c.l.b16 %v765
    %v1963 = vunpack.c.h.b16 %v765
    %v1964 = vunpack.c.l.b16 %v766
    %v1965 = vunpack.c.h.b16 %v766
    %v1966 = vunpack.c.l.b16 %v767
    %v1967 = vunpack.c.h.b16 %v767
    %v1968 = vunpack.c.l.b16 %v768
    %v1969 = vunpack.c.h.b16 %v768
    %v1970 = vunpack.c.l.b16 %v769
    %v1971 = vunpack.c.l.b16 %v770
    %v1972 = vunpack.c.h.b16 %v770
    %v1973 = vunpack.c.l.b16 %v771
    %v1974 = vunpack.c.h.b16 %v771
    %v1975 = vunpack.c.l.b16 %v772
    %v1976 = vunpack.c.h.b16 %v772
    %v1977 = vunpack.c.l.b16 %v773
    %v1978 = vunpack.c.h.b16 %v773
    %v1979 = vunpack.c.l.b16 %v774
    %v1980 = vunpack.c.h.b16 %v774
    %v1981 = vunpack.c.l.b16 %v775
    %v1982 = vunpack.c.h.b16 %v775
    %v1983 = vunpack.c.l.b16 %v776
    %v1984 = vunpack.c.h.b16 %v776
    %v1985 = vunpack.c.l.b16 %v777
    %v1986 = vunpack.c.h.b16 %v777
    %v1987 = vunpack.c.l.b16 %v778
    %v1988 = vunpack.c.l.b16 %v779
    %v1989 = vunpack.c.h.b16 %v779
    %v1990 = vunpack.c.l.b16 %v780
    %v1991 = vunpack.c.h.b16 %v780
    %v1992 = vunpack.c.l.b16 %v781
    %v1993 = vunpack.c.h.b16 %v781
    %v1994 = vunpack.c.l.b16 %v782
    %v1995 = vunpack.c.h.b16 %v782
    %v1996 = vunpack.c.l.b16 %v783
    %v1997 = vunpack.c.h.b16 %v783
    %v1998 = vunpack.c.l.b16 %v784
    %v1999 = vunpack.c.h.b16 %v784
    %v2000 = vunpack.c.l.b16 %v785
    %v2001 = vunpack.c.h.b16 %v785
    %v2002 = vunpack.c.l.b16 %v786
    %v2003 = vunpack.c.h.b16 %v786
    %v2004 = vunpack.c.l.b16 %v787
    %v2005 = vunpack.c.l.b16 %v788
    %v2006 = vunpack.c.h.b16 %v788
    %v2007 = vunpack.c.l.b16 %v789
    %v2008 = vunpack.c.h.b16 %v789
    %v2009 = vunpack.c.l.b16 %v790
    %v2010 = vunpack.c.h.b16 %v790
    %v2011 = vunpack.c.l.b16 %v791
    %v2012 = vunpack.c.h.b16 %v791
    %v2013 = vunpack.c.l.b16 %v792
    %v2014 = vunpack.c.h.b16 %v792
    %v2015 = vunpack.c.l.b16 %v793
    %v2016 = vunpack.c.h.b16 %v793
    %v2017 = vunpack.c.l.b16 %v794
    %v2018 = vunpack.c.h.b16 %v794
    %v2019 = vunpack.c.l.b16 %v795
    %v2020 = vunpack.c.h.b16 %v795
    %v2021 = vunpack.c.l.b16 %v796
    %v2022 = vunpack.c.l.b16 %v797
    %v2023 = vunpack.c.h.b16 %v797
    %v2024 = vunpack.c.l.b16 %v798
    %v2025 = vunpack.c.h.b16 %v798
    %v2026 = vunpack.c.l.b16 %v799
    %v2027 = vunpack.c.h.b16 %v799
    %v2028 = vunpack.c.l.b16 %v800
    %v2029 = vunpack.c.h.b16 %v800
    %v2030 = vunpack.c.l.b16 %v801
    %v2031 = vunpack.c.h.b16 %v801
    %v2032 = vunpack.c.l.b16 %v802
    %v2033 = vunpack.c.h.b16 %v802
    %v2034 = vunpack.c.l.b16 %v803
    %v2035 = vunpack.c.h.b16 %v803
    %v2036 = vunpack.c.l.b16 %v804
    %v2037 = vunpack.c.h.b16 %v804
    %v2038 = vunpack.c.l.b16 %v805
    %v2039 = vunpack.c.l.b16 %v806
    %v2040 = vunpack.c.h.b16 %v806
    %v2041 = vunpack.c.l.b16 %v807
    %v2042 = vunpack.c.h.b16 %v807
    %v2043 = vunpack.c.l.b16 %v808
    %v2044 = vunpack.c.h.b16 %v808
    %v2045 = vunpack.c.l.b16 %v809
    %v2046 = vunpack.c.h.b16 %v809
    %v2047 = vunpack.c.l.b16 %v810
    %v2048 = vunpack.c.h.b16 %v810
    %v2049 = vunpack.c.l.b16 %v811
    %v2050 = vunpack.c.h.b16 %v811
    %v2051 = vunpack.c.l.b16 %v812
    %v2052 = vunpack.c.h.b16 %v812
    %v2053 = vunpack.c.l.b16 %v813
    %v2054 = vunpack.c.h.b16 %v813
    %v2055 = vunpack.c.l.b16 %v814
    %v2056 = vunpack.c.l.b16 %v815
    %v2057 = vunpack.c.h.b16 %v815
    %v2058 = vunpack.c.l.b16 %v816
    %v2059 = vunpack.c.h.b16 %v816
    %v2060 = vunpack.c.l.b16 %v817
    %v2061 = vunpack.c.h.b16 %v817
    %v2062 = vunpack.c.l.b16 %v818
    %v2063 = vunpack.c.h.b16 %v818
    %v2064 = vunpack.c.l.b16 %v819
    %v2065 = vunpack.c.h.b16 %v819
    %v2066 = vunpack.c.l.b16 %v820
    %v2067 = vunpack.c.h.b16 %v820
    %v2068 = vunpack.c.l.b16 %v821
    %v2069 = vunpack.c.h.b16 %v821
    %v2070 = vunpack.c.l.b16 %v822
    %v2071 = vunpack.c.h.b16 %v822
    %v2072 = vunpack.c.l.b16 %v823
    %v2073 = vunpack.c.l.b16 %v824
    %v2074 = vunpack.c.h.b16 %v824
    %v2075 = vunpack.c.l.b16 %v825
    %v2076 = vunpack.c.h.b16 %v825
    %v2077 = vunpack.c.l.b16 %v826
    %v2078 = vunpack.c.h.b16 %v826
    %v2079 = vunpack.c.l.b16 %v827
    %v2080 = vunpack.c.h.b16 %v827
    %v2081 = vunpack.c.l.b16 %v828
    %v2082 = vunpack.c.h.b16 %v828
    %v2083 = vunpack.c.l.b16 %v829
    %v2084 = vunpack.c.h.b16 %v829
    %v2085 = vunpack.c.l.b16 %v830
    %v2086 = vunpack.c.h.b16 %v830
    %v2087 = vunpack.c.l.b16 %v831
    %v2088 = vunpack.c.h.b16 %v831
    %v2089 = vunpack.c.l.b16 %v832
    %v2090 = vunpack.c.l.b16 %v833
    %v2091 = vunpack.c.h.b16 %v833
    %v2092 = vunpack.c.l.b16 %v834
    %v2093 = vunpack.c.h.b16 %v834
    %v2094 = vunpack.c.l.b16 %v835
    %v2095 = vunpack.c.h.b16 %v835
    %v2096 = vunpack.c.l.b16 %v836
    %v2097 = vunpack.c.h.b16 %v836
    %v2098 = vunpack.c.l.b16 %v837
    %v2099 = vunpack.c.h.b16 %v837
    %v2100 = vunpack.c.l.b16 %v838
    %v2101 = vunpack.c.h.b16 %v838
    %v2102 = vunpack.c.l.b16 %v839
    %v2103 = vunpack.c.h.b16 %v839
    %v2104 = vunpack.c.l.b16 %v840
    %v2105 = vunpack.c.h.b16 %v840
    %v2106 = vunpack.c.l.b16 %v841
    %v2107 = vunpack.c.l.b16 %v842
    %v2108 = vunpack.c.h.b16 %v842
    %v2109 = vunpack.c.l.b16 %v843
    %v2110 = vunpack.c.h.b16 %v843
    %v2111 = vunpack.c.l.b16 %v844
    %v2112 = vunpack.c.h.b16 %v844
    %v2113 = vunpack.c.l.b16 %v845
    %v2114 = vunpack.c.h.b16 %v845
    %v2115 = vunpack.c.l.b16 %v846
    %v2116 = vunpack.c.h.b16 %v846
    %v2117 = vunpack.c.l.b16 %v847
    %v2118 = vunpack.c.h.b16 %v847
    %v2119 = vunpack.c.l.b16 %v848
    %v2120 = vunpack.c.h.b16 %v848
    %v2121 = vunpack.c.l.b16 %v849
    %v2122 = vunpack.c.h.b16 %v849
    %v2123 = vunpack.c.l.b16 %v850
    %v2124 = vunpack.c.l.b16 %v851
    %v2125 = vunpack.c.h.b16 %v851
    %v2126 = vunpack.c.l.b16 %v852
    %v2127 = vunpack.c.h.b16 %v852
    %v2128 = vunpack.c.l.b16 %v853
    %v2129 = vunpack.c.h.b16 %v853
    %v2130 = vunpack.c.l.b16 %v854
    %v2131 = vunpack.c.h.b16 %v854
    %v2132 = vunpack.c.l.b16 %v855
    %v2133 = vunpack.c.h.b16 %v855
    %v2134 = vunpack.c.l.b16 %v856
    %v2135 = vunpack.c.h.b16 %v856
    %v2136 = vunpack.c.l.b16 %v857
    %v2137 = vunpack.c.h.b16 %v857
    %v2138 = vunpack.c.l.b16 %v858
    %v2139 = vunpack.c.h.b16 %v858
    %v2140 = vunpack.c.l.b16 %v859
    %v2141 = vunpack.c.l.b16 %v860
    %v2142 = vunpack.c.h.b16 %v860
    %v2143 = vunpack.c.l.b16 %v861
    %v2144 = vunpack.c.h.b16 %v861
    %v2145 = vunpack.c.l.b16 %v862
    %v2146 = vunpack.c.h.b16 %v862
    %v2147 = vunpack.c.l.b16 %v863
    %v2148 = vunpack.c.h.b16 %v863
    %v2149 = vunpack.c.l.b16 %v864
    %v2150 = vunpack.c.h.b16 %v864
    %v2151 = vunpack.c.l.b16 %v865
    %v2152 = vunpack.c.h.b16 %v865
    %v2153 = vunpack.c.l.b16 %v866
    %v2154 = vunpack.c.h.b16 %v866
    %v2155 = vunpack.c.l.b16 %v867
    %v2156 = vunpack.c.h.b16 %v867
    %v2157 = vunpack.c.l.b16 %v868
    %v2158 = vunpack.c.l.b16 %v869
    %v2159 = vunpack.c.h.b16 %v869
    %v2160 = vunpack.c.l.b16 %v870
    %v2161 = vunpack.c.h.b16 %v870
    %v2162 = vunpack.c.l.b16 %v871
    %v2163 = vunpack.c.h.b16 %v871
    %v2164 = vunpack.c.l.b16 %v872
    %v2165 = vunpack.c.h.b16 %v872
    %v2166 = vunpack.c.l.b16 %v873
    %v2167 = vunpack.c.h.b16 %v873
    %v2168 = vunpack.c.l.b16 %v874
    %v2169 = vunpack.c.h.b16 %v874
    %v2170 = vunpack.c.l.b16 %v875
    %v2171 = vunpack.c.h.b16 %v875
    %v2172 = vunpack.c.l.b16 %v876
    %v2173 = vunpack.c.h.b16 %v876
    %v2174 = vunpack.c.l.b16 %v877
    %v2175 = vunpack.c.l.b16 %v878
    %v2176 = vunpack.c.h.b16 %v878
    %v2177 = vunpack.c.l.b16 %v879
    %v2178 = vunpack.c.h.b16 %v879
    %v2179 = vunpack.c.l.b16 %v880
    %v2180 = vunpack.c.h.b16 %v880
    %v2181 = vunpack.c.l.b16 %v881
    %v2182 = vunpack.c.h.b16 %v881
    %v2183 = vunpack.c.l.b16 %v882
    %v2184 = vunpack.c.h.b16 %v882
    %v2185 = vunpack.c.l.b16 %v883
    %v2186 = vunpack.c.h.b16 %v883
    %v2187 = vunpack.c.l.b16 %v884
    %v2188 = vunpack.c.h.b16 %v884
    %v2189 = vunpack.c.l.b16 %v885
    %v2190 = vunpack.c.h.b16 %v885
    %v2191 = vunpack.c.l.b16 %v886
    %v2192 = vunpack.c.l.b16 %v887
    %v2193 = vunpack.c.h.b16 %v887
    %v2194 = vunpack.c.l.b16 %v888
    %v2195 = vunpack.c.h.b16 %v888
    %v2196 = vunpack.c.l.b16 %v889
    %v2197 = vunpack.c.h.b16 %v889
    %v2198 = vunpack.c.l.b16 %v890
    %v2199 = vunpack.c.h.b16 %v890
    %v2200 = vunpack.c.l.b16 %v891
    %v2201 = vunpack.c.h.b16 %v891
    %v2202 = vunpack.c.l.b16 %v892
    %v2203 = vunpack.c.h.b16 %v892
    %v2204 = vunpack.c.l.b16 %v893
    %v2205 = vunpack.c.h.b16 %v893
    %v2206 = vunpack.c.l.b16 %v894
    %v2207 = vunpack.c.h.b16 %v894
    %v2208 = vunpack.c.l.b16 %v895
    %v2209 = vunpack.c.l.b16 %v896
    %v2210 = vunpack.c.h.b16 %v896
    %v2211 = vunpack.c.l.b16 %v897
    %v2212 = vunpack.c.h.b16 %v897
    %v2213 = vunpack.c.l.b16 %v898
    %v2214 = vunpack.c.h.b16 %v898
    %v2215 = vunpack.c.l.b16 %v899
    %v2216 = vunpack.c.h.b16 %v899
    %v2217 = vunpack.c.l.b16 %v900
    %v2218 = vunpack.c.h.b16 %v900
    %v2219 = vunpack.c.l.b16 %v901
    %v2220 = vunpack.c.h.b16 %v901
    %v2221 = vunpack.c.l.b16 %v902
    %v2222 = vunpack.c.h.b16 %v902
    %v2223 = vunpack.c.l.b16 %v903
    %v2224 = vunpack.c.h.b16 %v903
    %v2225 = vunpack.c.l.b16 %v904
    %v2226 = vunpack.c.l.b16 %v905
    %v2227 = vunpack.c.h.b16 %v905
    %v2228 = vunpack.c.l.b16 %v906
    %v2229 = vunpack.c.h.b16 %v906
    %v2230 = vunpack.c.l.b16 %v907
    %v2231 = vunpack.c.h.b16 %v907
    %v2232 = vunpack.c.l.b16 %v908
    %v2233 = vunpack.c.h.b16 %v908
    %v2234 = vunpack.c.l.b16 %v909
    %v2235 = vunpack.c.h.b16 %v909
    %v2236 = vunpack.c.l.b16 %v910
    %v2237 = vunpack.c.h.b16 %v910
    %v2238 = vunpack.c.l.b16 %v911
    %v2239 = vunpack.c.h.b16 %v911
    %v2240 = vunpack.c.l.b16 %v912
    %v2241 = vunpack.c.h.b16 %v912
    %v2242 = vunpack.c.l.b16 %v913
    %v2243 = vunpack.c.l.b16 %v914
    %v2244 = vunpack.c.h.b16 %v914
    %v2245 = vunpack.c.l.b16 %v915
    %v2246 = vunpack.c.h.b16 %v915
    %v2247 = vunpack.c.l.b16 %v916
    %v2248 = vunpack.c.h.b16 %v916
    %v2249 = vunpack.c.l.b16 %v917
    %v2250 = vunpack.c.h.b16 %v917
    %v2251 = vunpack.c.l.b16 %v918
    %v2252 = vunpack.c.h.b16 %v918
    %v2253 = vunpack.c.l.b16 %v919
    %v2254 = vunpack.c.h.b16 %v919
    %v2255 = vunpack.c.l.b16 %v920
    %v2256 = vunpack.c.h.b16 %v920
    %v2257 = vunpack.c.l.b16 %v921
    %v2258 = vunpack.c.h.b16 %v921
    %v2259 = vunpack.c.l.b16 %v922
    %v2260 = vunpack.c.l.b16 %v923
    %v2261 = vunpack.c.h.b16 %v923
    %v2262 = vunpack.c.l.b16 %v924
    %v2263 = vunpack.c.h.b16 %v924
    %v2264 = vunpack.c.l.b16 %v925
    %v2265 = vunpack.c.h.b16 %v925
    %v2266 = vunpack.c.l.b16 %v926
    %v2267 = vunpack.c.h.b16 %v926
    %v2268 = vunpack.c.l.b16 %v927
    %v2269 = vunpack.c.h.b16 %v927
    %v2270 = vunpack.c.l.b16 %v928
    %v2271 = vunpack.c.h.b16 %v928
    %v2272 = vunpack.c.l.b16 %v929
    %v2273 = vunpack.c.h.b16 %v929
    %v2274 = vunpack.c.l.b16 %v930
    %v2275 = vunpack.c.h.b16 %v930
    %v2276 = vunpack.c.l.b16 %v931
    %v2277 = vunpack.c.l.b16 %v932
    %v2278 = vunpack.c.h.b16 %v932
    %v2279 = vunpack.c.l.b16 %v933
    %v2280 = vunpack.c.h.b16 %v933
    %v2281 = vunpack.c.l.b16 %v934
    %v2282 = vunpack.c.h.b16 %v934
    %v2283 = vunpack.c.l.b16 %v935
    %v2284 = vunpack.c.h.b16 %v935
    %v2285 = vunpack.c.l.b16 %v936
    %v2286 = vunpack.c.h.b16 %v936
    %v2287 = vunpack.c.l.b16 %v937
    %v2288 = vunpack.c.h.b16 %v937
    %v2289 = vunpack.c.l.b16 %v938
    %v2290 = vunpack.c.h.b16 %v938
    %v2291 = vunpack.c.l.b16 %v939
    %v2292 = vunpack.c.h.b16 %v939
    %v2293 = vunpack.c.l.b16 %v940
    %v2294 = vunpack.c.l.b16 %v941
    %v2295 = vunpack.c.h.b16 %v941
    %v2296 = vunpack.c.l.b16 %v942
    %v2297 = vunpack.c.h.b16 %v942
    %v2298 = vunpack.c.l.b16 %v943
    %v2299 = vunpack.c.h.b16 %v943
    %v2300 = vunpack.c.l.b16 %v944
    %v2301 = vunpack.c.h.b16 %v944
    %v2302 = vunpack.c.l.b16 %v945
    %v2303 = vunpack.c.h.b16 %v945
    %v2304 = vunpack.c.l.b16 %v946
    %v2305 = vunpack.c.h.b16 %v946
    %v2306 = vunpack.c.l.b16 %v947
    %v2307 = vunpack.c.h.b16 %v947
    %v2308 = vunpack.c.l.b16 %v948
    %v2309 = vunpack.c.h.b16 %v948
    %v2310 = vunpack.c.l.b16 %v949
    %v2311 = vunpack.c.l.b16 %v950
    %v2312 = vunpack.c.h.b16 %v950
    %v2313 = vunpack.c.l.b16 %v951
    %v2314 = vunpack.c.h.b16 %v951
    %v2315 = vunpack.c.l.b16 %v952
    %v2316 = vunpack.c.h.b16 %v952
    %v2317 = vunpack.c.l.b16 %v953
    %v2318 = vunpack.c.h.b16 %v953
    %v2319 = vunpack.c.l.b16 %v954
    %v2320 = vunpack.c.h.b16 %v954
    %v2321 = vunpack.c.l.b16 %v955
    %v2322 = vunpack.c.h.b16 %v955
    %v2323 = vunpack.c.l.b16 %v956
    %v2324 = vunpack.c.h.b16 %v956
    %v2325 = vunpack.c.l.b16 %v957
    %v2326 = vunpack.c.h.b16 %v957
    %v2327 = vunpack.c.l.b16 %v958
    %v2328 = vunpack.c.l.b16 %v959
    %v2329 = vunpack.c.h.b16 %v959
    %v2330 = vunpack.c.l.b16 %v960
    %v2331 = vunpack.c.h.b16 %v960
    %v2332 = vunpack.c.l.b16 %v961
    %v2333 = vunpack.c.h.b16 %v961
    %v2334 = vunpack.c.l.b16 %v962
    %v2335 = vunpack.c.h.b16 %v962
    %v2336 = vunpack.c.l.b16 %v963
    %v2337 = vunpack.c.h.b16 %v963
    %v2338 = vunpack.c.l.b16 %v964
    %v2339 = vunpack.c.h.b16 %v964
    %v2340 = vunpack.c.l.b16 %v965
    %v2341 = vunpack.c.h.b16 %v965
    %v2342 = vunpack.c.l.b16 %v966
    %v2343 = vunpack.c.h.b16 %v966
    %v2344 = vunpack.c.l.b16 %v967
    %v2345 = vunpack.c.l.b16 %v968
    %v2346 = vunpack.c.h.b16 %v968
    %v2347 = vunpack.c.l.b16 %v969
    %v2348 = vunpack.c.h.b16 %v969
    %v2349 = vunpack.c.l.b16 %v970
    %v2350 = vunpack.c.h.b16 %v970
    %v2351 = vunpack.c.l.b16 %v971
    %v2352 = vunpack.c.h.b16 %v971
    %v2353 = vunpack.c.l.b16 %v972
    %v2354 = vunpack.c.h.b16 %v972
    %v2355 = vunpack.c.l.b16 %v973
    %v2356 = vunpack.c.h.b16 %v973
    %v2357 = vunpack.c.l.b16 %v974
    %v2358 = vunpack.c.h.b16 %v974
    %v2359 = vunpack.c.l.b16 %v975
    %v2360 = vunpack.c.h.b16 %v975
    %v2361 = vunpack.c.l.b16 %v976
    %v2362 = vunpack.c.l.b16 %v977
    %v2363 = vunpack.c.h.b16 %v977
    %v2364 = vunpack.c.l.b16 %v978
    %v2365 = vunpack.c.h.b16 %v978
    %v2366 = vunpack.c.l.b16 %v979
    %v2367 = vunpack.c.h.b16 %v979
    %v2368 = vunpack.c.l.b16 %v980
    %v2369 = vunpack.c.h.b16 %v980
    %v2370 = vunpack.c.l.b16 %v981
    %v2371 = vunpack.c.h.b16 %v981
    %v2372 = vunpack.c.l.b16 %v982
    %v2373 = vunpack.c.h.b16 %v982
    %v2374 = vunpack.c.l.b16 %v983
    %v2375 = vunpack.c.h.b16 %v983
    %v2376 = vunpack.c.l.b16 %v984
    %v2377 = vunpack.c.h.b16 %v984
    %v2378 = vunpack.c.l.b16 %v985
    %v2379 = vunpack.c.l.b16 %v986
    %v2380 = vunpack.c.h.b16 %v986
    %v2381 = vunpack.c.l.b16 %v987
    %v2382 = vunpack.c.h.b16 %v987
    %v2383 = vunpack.c.l.b16 %v988
    %v2384 = vunpack.c.h.b16 %v988
    %v2385 = vunpack.c.l.b16 %v989
    %v2386 = vunpack.c.h.b16 %v989
    %v2387 = vunpack.c.l.b16 %v990
    %v2388 = vunpack.c.h.b16 %v990
    %v2389 = vunpack.c.l.b16 %v991
    %v2390 = vunpack.c.h.b16 %v991
    %v2391 = vunpack.c.l.b16 %v992
    %v2392 = vunpack.c.h.b16 %v992
    %v2393 = vunpack.c.l.b16 %v993
    %v2394 = vunpack.c.h.b16 %v993
    %v2395 = vunpack.c.l.b16 %v994
    %v2396 = vunpack.c.l.b16 %v995
    %v2397 = vunpack.c.h.b16 %v995
    %v2398 = vunpack.c.l.b16 %v996
    %v2399 = vunpack.c.h.b16 %v996
    %v2400 = vunpack.c.l.b16 %v997
    %v2401 = vunpack.c.h.b16 %v997
    %v2402 = vunpack.c.l.b16 %v998
    %v2403 = vunpack.c.h.b16 %v998
    %v2404 = vunpack.c.l.b16 %v999
    %v2405 = vunpack.c.h.b16 %v999
    %v2406 = vunpack.c.l.b16 %v1000
    %v2407 = vunpack.c.h.b16 %v1000
    %v2408 = vunpack.c.l.b16 %v1001
    %v2409 = vunpack.c.h.b16 %v1001
    %v2410 = vunpack.c.l.b16 %v1002
    %v2411 = vunpack.c.h.b16 %v1002
    %v2412 = vunpack.c.l.b16 %v1003
    %v2413 = vunpack.c.l.b16 %v1004
    %v2414 = vunpack.c.h.b16 %v1004
    %v2415 = vunpack.c.l.b16 %v1005
    %v2416 = vunpack.c.h.b16 %v1005
    %v2417 = vunpack.c.l.b16 %v1006
    %v2418 = vunpack.c.h.b16 %v1006
    %v2419 = vunpack.c.l.b16 %v1007
    %v2420 = vunpack.c.h.b16 %v1007
    %v2421 = vunpack.c.l.b16 %v1008
    %v2422 = vunpack.c.h.b16 %v1008
    %v2423 = vunpack.c.l.b16 %v1009
    %v2424 = vunpack.c.h.b16 %v1009
    %v2425 = vunpack.c.l.b16 %v1010
    %v2426 = vunpack.c.h.b16 %v1010
    %v2427 = vunpack.c.l.b16 %v1011
    %v2428 = vunpack.c.h.b16 %v1011
    %v2429 = vunpack.c.l.b16 %v1012
    %v2430 = vunpack.c.l.b16 %v1013
    %v2431 = vunpack.c.h.b16 %v1013
    %v2432 = vunpack.c.l.b16 %v1014
    %v2433 = vunpack.c.h.b16 %v1014
    %v2434 = vunpack.c.l.b16 %v1015
    %v2435 = vunpack.c.h.b16 %v1015
    %v2436 = vunpack.c.l.b16 %v1016
    %v2437 = vunpack.c.h.b16 %v1016
    %v2438 = vunpack.c.l.b16 %v1017
    %v2439 = vunpack.c.h.b16 %v1017
    %v2440 = vunpack.c.l.b16 %v1018
    %v2441 = vunpack.c.h.b16 %v1018
    %v2442 = vunpack.c.l.b16 %v1019
    %v2443 = vunpack.c.h.b16 %v1019
    %v2444 = vunpack.c.l.b16 %v1020
    %v2445 = vunpack.c.h.b16 %v1020
    %v2446 = vunpack.c.l.b16 %v1021
    %v2447 = vunpack.c.l.b16 %v1022
    %v2448 = vunpack.c.h.b16 %v1022
    %v2449 = vunpack.c.l.b16 %v1023
    %v2450 = vunpack.c.h.b16 %v1023
    %v2451 = vunpack.c.l.b16 %v1024
    %v2452 = vunpack.c.h.b16 %v1024
    %v2453 = vunpack.c.l.b16 %v1025
    %v2454 = vunpack.c.h.b16 %v1025
    %v2455 = vunpack.c.l.b16 %v1026
    %v2456 = vunpack.c.h.b16 %v1026
    %v2457 = vunpack.c.l.b16 %v1027
    %v2458 = vunpack.c.h.b16 %v1027
    %v2459 = vunpack.c.l.b16 %v1028
    %v2460 = vunpack.c.h.b16 %v1028
    %v2461 = vunpack.c.l.b16 %v1029
    %v2462 = vunpack.c.h.b16 %v1029
    %v2463 = vunpack.c.l.b16 %v1030
    %v2464 = vunpack.c.l.b16 %v1031
    %v2465 = vunpack.c.h.b16 %v1031
    %v2466 = vunpack.c.l.b16 %v1032
    %v2467 = vunpack.c.h.b16 %v1032
    %v2468 = vunpack.c.l.b16 %v1033
    %v2469 = vunpack.c.h.b16 %v1033
    %v2470 = vunpack.c.l.b16 %v1034
    %v2471 = vunpack.c.h.b16 %v1034
    %v2472 = vunpack.c.l.b16 %v1035
    %v2473 = vunpack.c.h.b16 %v1035
    %v2474 = vunpack.c.l.b16 %v1036
    %v2475 = vunpack.c.h.b16 %v1036
    %v2476 = vunpack.c.l.b16 %v1037
    %v2477 = vunpack.c.h.b16 %v1037
    %v2478 = vunpack.c.l.b16 %v1038
    %v2479 = vunpack.c.h.b16 %v1038
    %v2480 = vunpack.c.l.b16 %v1039
    %v2481 = vunpack.c.l.b16 %v1040
    %v2482 = vunpack.c.h.b16 %v1040
    %v2483 = vunpack.c.l.b16 %v1041
    %v2484 = vunpack.c.h.b16 %v1041
    %v2485 = vunpack.c.l.b16 %v1042
    %v2486 = vunpack.c.h.b16 %v1042
    %v2487 = vunpack.c.l.b16 %v1043
    %v2488 = vunpack.c.h.b16 %v1043
    %v2489 = vunpack.c.l.b16 %v1044
    %v2490 = vunpack.c.h.b16 %v1044
    %v2491 = vunpack.c.l.b16 %v1045
    %v2492 = vunpack.c.h.b16 %v1045
    %v2493 = vunpack.c.l.b16 %v1046
    %v2494 = vunpack.c.h.b16 %v1046
    %v2495 = vunpack.c.l.b16 %v1047
    %v2496 = vunpack.c.h.b16 %v1047
    %v2497 = vunpack.c.l.b16 %v1048
    %v2498 = vunpack.c.l.b16 %v1049
    %v2499 = vunpack.c.h.b16 %v1049
    %v2500 = vunpack.c.l.b16 %v1050
    %v2501 = vunpack.c.h.b16 %v1050
    %v2502 = vunpack.c.l.b16 %v1051
    %v2503 = vunpack.c.h.b16 %v1051
    %v2504 = vunpack.c.l.b16 %v1052
    %v2505 = vunpack.c.h.b16 %v1052
    %v2506 = vunpack.c.l.b16 %v1053
    %v2507 = vunpack.c.h.b16 %v1053
    %v2508 = vunpack.c.l.b16 %v1054
    %v2509 = vunpack.c.h.b16 %v1054
    %v2510 = vunpack.c.l.b16 %v1055
    %v2511 = vunpack.c.h.b16 %v1055
    %v2512 = vunpack.c.l.b16 %v1056
    %v2513 = vunpack.c.h.b16 %v1056
    %v2514 = vunpack.c.l.b16 %v1057
    %v2515 = vunpack.c.l.b16 %v1058
    %v2516 = vunpack.c.h.b16 %v1058
    %v2517 = vunpack.c.l.b16 %v1059
    %v2518 = vunpack.c.h.b16 %v1059
    %v2519 = vunpack.c.l.b16 %v1060
    %v2520 = vunpack.c.h.b16 %v1060
    %v2521 = vunpack.c.l.b16 %v1061
    %v2522 = vunpack.c.h.b16 %v1061
    %v2523 = vunpack.c.l.b16 %v1062
    %v2524 = vunpack.c.h.b16 %v1062
    %v2525 = vunpack.c.l.b16 %v1063
    %v2526 = vunpack.c.h.b16 %v1063
    %v2527 = vunpack.c.l.b16 %v1064
    %v2528 = vunpack.c.h.b16 %v1064
    %v2529 = vunpack.c.l.b16 %v1065
    %v2530 = vunpack.c.h.b16 %v1065
    %v2531 = vunpack.c.l.b16 %v1066
    %v2532 = vunpack.c.l.b16 %v1067
    %v2533 = vunpack.c.h.b16 %v1067
    %v2534 = vunpack.c.l.b16 %v1068
    %v2535 = vunpack.c.h.b16 %v1068
    %v2536 = vunpack.c.l.b16 %v1069
    %v2537 = vunpack.c.h.b16 %v1069
    %v2538 = vunpack.c.l.b16 %v1070
    %v2539 = vunpack.c.h.b16 %v1070
    %v2540 = vunpack.c.l.b16 %v1071
    %v2541 = vunpack.c.h.b16 %v1071
    %v2542 = vunpack.c.l.b16 %v1072
    %v2543 = vunpack.c.h.b16 %v1072
    %v2544 = vunpack.c.l.b16 %v1073
    %v2545 = vunpack.c.h.b16 %v1073
    %v2546 = vunpack.c.l.b16 %v1074
    %v2547 = vunpack.c.h.b16 %v1074
    %v2548 = vunpack.c.l.b16 %v1075
    %v2549 = vunpack.c.l.b16 %v1076
    %v2550 = vunpack.c.h.b16 %v1076
    %v2551 = vunpack.c.l.b16 %v1077
    %v2552 = vunpack.c.h.b16 %v1077
    %v2553 = vunpack.c.l.b16 %v1078
    %v2554 = vunpack.c.h.b16 %v1078
    %v2555 = vunpack.c.l.b16 %v1079
    %v2556 = vunpack.c.h.b16 %v1079
    %v2557 = vunpack.c.l.b16 %v1080
    %v2558 = vunpack.c.h.b16 %v1080
    %v2559 = vunpack.c.l.b16 %v1081
    %v2560 = vunpack.c.h.b16 %v1081
    %v2561 = vunpack.c.l.b16 %v1082
    %v2562 = vunpack.c.h.b16 %v1082
    %v2563 = vunpack.c.l.b16 %v1083
    %v2564 = vunpack.c.h.b16 %v1083
    %v2565 = vunpack.c.l.b16 %v1084
    %v2566 = vunpack.c.l.b16 %v1085
    %v2567 = vunpack.c.h.b16 %v1085
    %v2568 = vunpack.c.l.b16 %v1086
    %v2569 = vunpack.c.h.b16 %v1086
    %v2570 = vunpack.c.l.b16 %v1087
    %v2571 = vunpack.c.h.b16 %v1087
    %v2572 = vunpack.c.l.b16 %v1088
    %v2573 = vunpack.c.h.b16 %v1088
    %v2574 = vunpack.c.l.b16 %v1089
    %v2575 = vunpack.c.h.b16 %v1089
    %v2576 = vunpack.c.l.b16 %v1090
    %v2577 = vunpack.c.h.b16 %v1090
    %v2578 = vunpack.c.l.b16 %v1091
    %v2579 = vunpack.c.h.b16 %v1091
    %v2580 = vunpack.c.l.b16 %v1092
    %v2581 = vunpack.c.h.b16 %v1092
    %v2582 = vunpack.c.l.b16 %v1093
    %v2583 = vunpack.c.l.b16 %v1094
    %v2584 = vunpack.c.h.b16 %v1094
    %v2585 = vunpack.c.l.b16 %v1095
    %v2586 = vunpack.c.h.b16 %v1095
    %v2587 = vunpack.c.l.b16 %v1096
    %v2588 = vunpack.c.h.b16 %v1096
    %v2589 = vunpack.c.l.b16 %v1097
    %v2590 = vunpack.c.h.b16 %v1097
    %v2591 = vunpack.c.l.b16 %v1098
    %v2592 = vunpack.c.h.b16 %v1098
    %v2593 = vunpack.c.l.b16 %v1099
    %v2594 = vunpack.c.h.b16 %v1099
    %v2595 = vunpack.c.l.b16 %v1100
    %v2596 = vunpack.c.h.b16 %v1100
    %v2597 = vunpack.c.l.b16 %v1101
    %v2598 = vunpack.c.h.b16 %v1101
    %v2599 = vunpack.c.l.b16 %v1102
    %v2600 = vunpack.c.l.b16 %v1103
    %v2601 = vunpack.c.h.b16 %v1103
    %v2602 = vunpack.c.l.b16 %v1104
    %v2603 = vunpack.c.h.b16 %v1104
    %v2604 = vunpack.c.l.b16 %v1105
    %v2605 = vunpack.c.h.b16 %v1105
    %v2606 = vunpack.c.l.b16 %v1106
    %v2607 = vunpack.c.h.b16 %v1106
    %v2608 = vunpack.c.l.b16 %v1107
    %v2609 = vunpack.c.h.b16 %v1107
    %v2610 = vunpack.c.l.b16 %v1108
    %v2611 = vunpack.c.h.b16 %v1108
    %v2612 = vunpack.c.l.b16 %v1109
    %v2613 = vunpack.c.h.b16 %v1109
    %v2614 = vunpack.c.l.b16 %v1110
    %v2615 = vunpack.c.h.b16 %v1110
    %v2616 = vunpack.c.l.b16 %v1111
    %v2617 = vpack.c.b16 %v1903, %v1886
    %v2618 = vpack.c.b16 %v1904, %v1887
    %v2619 = vpack.c.b16 %v1905, %v1888
    %v2620 = vpack.c.b16 %v1906, %v1889
    %v2621 = vpack.c.b16 %v1907, %v1890
    %v2622 = vpack.c.b16 %v1908, %v1891
    %v2623 = vpack.c.b16 %v1909, %v1892
    %v2624 = vpack.c.b16 %v1910, %v1893
    %v2625 = vpack.c.b16 %v1911, %v1894
    %v2626 = vpack.c.b16 %v1912, %v1895
    %v2627 = vpack.c.b16 %v1913, %v1896
    %v2628 = vpack.c.b16 %v1914, %v1897
    %v2629 = vpack.c.b16 %v1915, %v1898
    %v2630 = vpack.c.b16 %v1916, %v1899
    %v2631 = vpack.c.b16 %v1917, %v1900
    %v2632 = vpack.c.b16 %v1918, %v1901
    %v2633 = vpack.c.b16 %v1919, %v1902
    %v2634 = vpack.c.b16 %v1937, %v1920
    %v2635 = vpack.c.b16 %v1938, %v1921
    %v2636 = vpack.c.b16 %v1939, %v1922
    %v2637 = vpack.c.b16 %v1940, %v1923
    %v2638 = vpack.c.b16 %v1941, %v1924
    %v2639 = vpack.c.b16 %v1942, %v1925
    %v2640 = vpack.c.b16 %v1943, %v1926
    %v2641 = vpack.c.b16 %v1944, %v1927
    %v2642 = vpack.c.b16 %v1945, %v1928
    %v2643 = vpack.c.b16 %v1946, %v1929
    %v2644 = vpack.c.b16 %v1947, %v1930
    %v2645 = vpack.c.b16 %v1948, %v1931
    %v2646 = vpack.c.b16 %v1949, %v1932
    %v2647 = vpack.c.b16 %v1950, %v1933
    %v2648 = vpack.c.b16 %v1951, %v1934
    %v2649 = vpack.c.b16 %v1952, %v1935
    %v2650 = vpack.c.b16 %v1953, %v1936
    %v2651 = vpack.c.b16 %v1971, %v1954
    %v2652 = vpack.c.b16 %v1972, %v1955
    %v2653 = vpack.c.b16 %v1973, %v1956
    %v2654 = vpack.c.b16 %v1974, %v1957
    %v2655 = vpack.c.b16 %v1975, %v1958
    %v2656 = vpack.c.b16 %v1976, %v1959
    %v2657 = vpack.c.b16 %v1977, %v1960
    %v2658 = vpack.c.b16 %v1978, %v1961
    %v2659 = vpack.c.b16 %v1979, %v1962
    %v2660 = vpack.c.b16 %v1980, %v1963
    %v2661 = vpack.c.b16 %v1981, %v1964
    %v2662 = vpack.c.b16 %v1982, %v1965
    %v2663 = vpack.c.b16 %v1983, %v1966
    %v2664 = vpack.c.b16 %v1984, %v1967
    %v2665 = vpack.c.b16 %v1985, %v1968
    %v2666 = vpack.c.b16 %v1986, %v1969
    %v2667 = vpack.c.b16 %v1987, %v1970
    %v2668 = vpack.c.b16 %v2005, %v1988
    %v2669 = vpack.c.b16 %v2006, %v1989
    %v2670 = vpack.c.b16 %v2007, %v1990
    %v2671 = vpack.c.b16 %v2008, %v1991
    %v2672 = vpack.c.b16 %v2009, %v1992
    %v2673 = vpack.c.b16 %v2010, %v1993
    %v2674 = vpack.c.b16 %v2011, %v1994
    %v2675 = vpack.c.b16 %v2012, %v1995
    %v2676 = vpack.c.b16 %v2013, %v1996
    %v2677 = vpack.c.b16 %v2014, %v1997
    %v2678 = vpack.c.b16 %v2015, %v1998
    %v2679 = vpack.c.b16 %v2016, %v1999
    %v2680 = vpack.c.b16 %v2017, %v2000
    %v2681 = vpack.c.b16 %v2018, %v2001
    %v2682 = vpack.c.b16 %v2019, %v2002
    %v2683 = vpack.c.b16 %v2020, %v2003
    %v2684 = vpack.c.b16 %v2021, %v2004
    %v2685 = vpack.c.b16 %v2039, %v2022
    %v2686 = vpack.c.b16 %v2040, %v2023
    %v2687 = vpack.c.b16 %v2041, %v2024
    %v2688 = vpack.c.b16 %v2042, %v2025
    %v2689 = vpack.c.b16 %v2043, %v2026
    %v2690 = vpack.c.b16 %v2044, %v2027
    %v2691 = vpack.c.b16 %v2045, %v2028
    %v2692 = vpack.c.b16 %v2046, %v2029
    %v2693 = vpack.c.b16 %v2047, %v2030
    %v2694 = vpack.c.b16 %v2048, %v2031
    %v2695 = vpack.c.b16 %v2049, %v2032
    %v2696 = vpack.c.b16 %v2050, %v2033
    %v2697 = vpack.c.b16 %v2051, %v2034
    %v2698 = vpack.c.b16 %v2052, %v2035
    %v2699 = vpack.c.b16 %v2053, %v2036
    %v2700 = vpack.c.b16 %v2054, %v2037
    %v2701 = vpack.c.b16 %v2055, %v2038
    %v2702 = vpack.c.b16 %v2073, %v2056
    %v2703 = vpack.c.b16 %v2074, %v2057
    %v2704 = vpack.c.b16 %v2075, %v2058
    %v2705 = vpack.c.b16 %v2076, %v2059
    %v2706 = vpack.c.b16 %v2077, %v2060
    %v2707 = vpack.c.b16 %v2078, %v2061
    %v2708 = vpack.c.b16 %v2079, %v2062
    %v2709 = vpack.c.b16 %v2080, %v2063
    %v2710 = vpack.c.b16 %v2081, %v2064
    %v2711 = vpack.c.b16 %v2082, %v2065
    %v2712 = vpack.c.b16 %v2083, %v2066
    %v2713 = vpack.c.b16 %v2084, %v2067
    %v2714 = vpack.c.b16 %v2085, %v2068
    %v2715 = vpack.c.b16 %v2086, %v2069
    %v2716 = vpack.c.b16 %v2087, %v2070
    %v2717 = vpack.c.b16 %v2088, %v2071
    %v2718 = vpack.c.b16 %v2089, %v2072
    %v2719 = vpack.c.b16 %v2107, %v2090
    %v2720 = vpack.c.b16 %v2108, %v2091
    %v2721 = vpack.c.b16 %v2109, %v2092
    %v2722 = vpack.c.b16 %v2110, %v2093
    %v2723 = vpack.c.b16 %v2111, %v2094
    %v2724 = vpack.c.b16 %v2112, %v2095
    %v2725 = vpack.c.b16 %v2113, %v2096
    %v2726 = vpack.c.b16 %v2114, %v2097
    %v2727 = vpack.c.b16 %v2115, %v2098
    %v2728 = vpack.c.b16 %v2116, %v2099
    %v2729 = vpack.c.b16 %v2117, %v2100
    %v2730 = vpack.c.b16 %v2118, %v2101
    %v2731 = vpack.c.b16 %v2119, %v2102
    %v2732 = vpack.c.b16 %v2120, %v2103
    %v2733 = vpack.c.b16 %v2121, %v2104
    %v2734 = vpack.c.b16 %v2122, %v2105
    %v2735 = vpack.c.b16 %v2123, %v2106
    %v2736 = vpack.c.b16 %v2141, %v2124
    %v2737 = vpack.c.b16 %v2142, %v2125
    %v2738 = vpack.c.b16 %v2143, %v2126
    %v2739 = vpack.c.b16 %v2144, %v2127
    %v2740 = vpack.c.b16 %v2145, %v2128
    %v2741 = vpack.c.b16 %v2146, %v2129
    %v2742 = vpack.c.b16 %v2147, %v2130
    %v2743 = vpack.c.b16 %v2148, %v2131
    %v2744 = vpack.c.b16 %v2149, %v2132
    %v2745 = vpack.c.b16 %v2150, %v2133
    %v2746 = vpack.c.b16 %v2151, %v2134
    %v2747 = vpack.c.b16 %v2152, %v2135
    %v2748 = vpack.c.b16 %v2153, %v2136
    %v2749 = vpack.c.b16 %v2154, %v2137
    %v2750 = vpack.c.b16 %v2155, %v2138
    %v2751 = vpack.c.b16 %v2156, %v2139
    %v2752 = vpack.c.b16 %v2157, %v2140
    %v2753 = vpack.c.b16 %v2175, %v2158
    %v2754 = vpack.c.b16 %v2176, %v2159
    %v2755 = vpack.c.b16 %v2177, %v2160
    %v2756 = vpack.c.b16 %v2178, %v2161
    %v2757 = vpack.c.b16 %v2179, %v2162
    %v2758 = vpack.c.b16 %v2180, %v2163
    %v2759 = vpack.c.b16 %v2181, %v2164
    %v2760 = vpack.c.b16 %v2182, %v2165
    %v2761 = vpack.c.b16 %v2183, %v2166
    %v2762 = vpack.c.b16 %v2184, %v2167
    %v2763 = vpack.c.b16 %v2185, %v2168
    %v2764 = vpack.c.b16 %v2186, %v2169
    %v2765 = vpack.c.b16 %v2187, %v2170
    %v2766 = vpack.c.b16 %v2188, %v2171
    %v2767 = vpack.c.b16 %v2189, %v2172
    %v2768 = vpack.c.b16 %v2190, %v2173
    %v2769 = vpack.c.b16 %v2191, %v2174
    %v2770 = vpack.c.b16 %v2209, %v2192
    %v2771 = vpack.c.b16 %v2210, %v2193
    %v2772 = vpack.c.b16 %v2211, %v2194
    %v2773 = vpack.c.b16 %v2212, %v2195
    %v2774 = vpack.c.b16 %v2213, %v2196
    %v2775 = vpack.c.b16 %v2214, %v2197
    %v2776 = vpack.c.b16 %v2215, %v2198
    %v2777 = vpack.c.b16 %v2216, %v2199
    %v2778 = vpack.c.b16 %v2217, %v2200
    %v2779 = vpack.c.b16 %v2218, %v2201
    %v2780 = vpack.c.b16 %v2219, %v2202
    %v2781 = vpack.c.b16 %v2220, %v2203
    %v2782 = vpack.c.b16 %v2221, %v2204
    %v2783 = vpack.c.b16 %v2222, %v2205
    %v2784 = vpack.c.b16 %v2223, %v2206
    %v2785 = vpack.c.b16 %v2224, %v2207
    %v2786 = vpack.c.b16 %v2225, %v2208
    %v2787 = vpack.c.b16 %v2243, %v2226
    %v2788 = vpack.c.b16 %v2244, %v2227
    %v2789 = vpack.c.b16 %v2245, %v2228
    %v2790 = vpack.c.b16 %v2246, %v2229
    %v2791 = vpack.c.b16 %v2247, %v2230
    %v2792 = vpack.c.b16 %v2248, %v2231
    %v2793 = vpack.c.b16 %v2249, %v2232
    %v2794 = vpack.c.b16 %v2250, %v2233
    %v2795 = vpack.c.b16 %v2251, %v2234
    %v2796 = vpack.c.b16 %v2252, %v2235
    %v2797 = vpack.c.b16 %v2253, %v2236
    %v2798 = vpack.c.b16 %v2254, %v2237
    %v2799 = vpack.c.b16 %v2255, %v2238
    %v2800 = vpack.c.b16 %v2256, %v2239
    %v2801 = vpack.c.b16 %v2257, %v2240
    %v2802 = vpack.c.b16 %v2258, %v2241
    %v2803 = vpack.c.b16 %v2259, %v2242
    %v2804 = vpack.c.b16 %v2277, %v2260
    %v2805 = vpack.c.b16 %v2278, %v2261
    %v2806 = vpack.c.b16 %v2279, %v2262
    %v2807 = vpack.c.b16 %v2280, %v2263
    %v2808 = vpack.c.b16 %v2281, %v2264
    %v2809 = vpack.c.b16 %v2282, %v2265
    %v2810 = vpack.c.b16 %v2283, %v2266
    %v2811 = vpack.c.b16 %v2284, %v2267
    %v2812 = vpack.c.b16 %v2285, %v2268
    %v2813 = vpack.c.b16 %v2286, %v2269
    %v2814 = vpack.c.b16 %v2287, %v2270
    %v2815 = vpack.c.b16 %v2288, %v2271
    %v2816 = vpack.c.b16 %v2289, %v2272
    %v2817 = vpack.c.b16 %v2290, %v2273
    %v2818 = vpack.c.b16 %v2291, %v2274
    %v2819 = vpack.c.b16 %v2292, %v2275
    %v2820 = vpack.c.b16 %v2293, %v2276
    %v2821 = vpack.c.b16 %v2311, %v2294
    %v2822 = vpack.c.b16 %v2312, %v2295
    %v2823 = vpack.c.b16 %v2313, %v2296
    %v2824 = vpack.c.b16 %v2314, %v2297
    %v2825 = vpack.c.b16 %v2315, %v2298
    %v2826 = vpack.c.b16 %v2316, %v2299
    %v2827 = vpack.c.b16 %v2317, %v2300
    %v2828 = vpack.c.b16 %v2318, %v2301
    %v2829 = vpack.c.b16 %v2319, %v2302
    %v2830 = vpack.c.b16 %v2320, %v2303
    %v2831 = vpack.c.b16 %v2321, %v2304
    %v2832 = vpack.c.b16 %v2322, %v2305
    %v2833 = vpack.c.b16 %v2323, %v2306
    %v2834 = vpack.c.b16 %v2324, %v2307
    %v2835 = vpack.c.b16 %v2325, %v2308
    %v2836 = vpack.c.b16 %v2326, %v2309
    %v2837 = vpack.c.b16 %v2327, %v2310
    %v2838 = vpack.c.b16 %v2345, %v2328
    %v2839 = vpack.c.b16 %v2346, %v2329
    %v2840 = vpack.c.b16 %v2347, %v2330
    %v2841 = vpack.c.b16 %v2348, %v2331
    %v2842 = vpack.c.b16 %v2349, %v2332
    %v2843 = vpack.c.b16 %v2350, %v2333
    %v2844 = vpack.c.b16 %v2351, %v2334
    %v2845 = vpack.c.b16 %v2352, %v2335
    %v2846 = vpack.c.b16 %v2353, %v2336
    %v2847 = vpack.c.b16 %v2354, %v2337
    %v2848 = vpack.c.b16 %v2355, %v2338
    %v2849 = vpack.c.b16 %v2356, %v2339
    %v2850 = vpack.c.b16 %v2357, %v2340
    %v2851 = vpack.c.b16 %v2358, %v2341
    %v2852 = vpack.c.b16 %v2359, %v2342
    %v2853 = vpack.c.b16 %v2360, %v2343
    %v2854 = vpack.c.b16 %v2361, %v2344
    %v2855 = vpack.c.b16 %v2379, %v2362
    %v2856 = vpack.c.b16 %v2380, %v2363
    %v2857 = vpack.c.b16 %v2381, %v2364
    %v2858 = vpack.c.b16 %v2382, %v2365
    %v2859 = vpack.c.b16 %v2383, %v2366
    %v2860 = vpack.c.b16 %v2384, %v2367
    %v2861 = vpack.c.b16 %v2385, %v2368
    %v2862 = vpack.c.b16 %v2386, %v2369
    %v2863 = vpack.c.b16 %v2387, %v2370
    %v2864 = vpack.c.b16 %v2388, %v2371
    %v2865 = vpack.c.b16 %v2389, %v2372
    %v2866 = vpack.c.b16 %v2390, %v2373
    %v2867 = vpack.c.b16 %v2391, %v2374
    %v2868 = vpack.c.b16 %v2392, %v2375
    %v2869 = vpack.c.b16 %v2393, %v2376
    %v2870 = vpack.c.b16 %v2394, %v2377
    %v2871 = vpack.c.b16 %v2395, %v2378
    %v2872 = vpack.c.b16 %v2413, %v2396
    %v2873 = vpack.c.b16 %v2414, %v2397
    %v2874 = vpack.c.b16 %v2415, %v2398
    %v2875 = vpack.c.b16 %v2416, %v2399
    %v2876 = vpack.c.b16 %v2417, %v2400
    %v2877 = vpack.c.b16 %v2418, %v2401
    %v2878 = vpack.c.b16 %v2419, %v2402
    %v2879 = vpack.c.b16 %v2420, %v2403
    %v2880 = vpack.c.b16 %v2421, %v2404
    %v2881 = vpack.c.b16 %v2422, %v2405
    %v2882 = vpack.c.b16 %v2423, %v2406
    %v2883 = vpack.c.b16 %v2424, %v2407
    %v2884 = vpack.c.b16 %v2425, %v2408
    %v2885 = vpack.c.b16 %v2426, %v2409
    %v2886 = vpack.c.b16 %v2427, %v2410
    %v2887 = vpack.c.b16 %v2428, %v2411
    %v2888 = vpack.c.b16 %v2429, %v2412
    %v2889 = vpack.c.b16 %v2447, %v2430
    %v2890 = vpack.c.b16 %v2448, %v2431
    %v2891 = vpack.c.b16 %v2449, %v2432
    %v2892 = vpack.c.b16 %v2450, %v2433
    %v2893 = vpack.c.b16 %v2451, %v2434
    %v2894 = vpack.c.b16 %v2452, %v2435
    %v2895 = vpack.c.b16 %v2453, %v2436
    %v2896 = vpack.c.b16 %v2454, %v2437
    %v2897 = vpack.c.b16 %v2455, %v2438
    %v2898 = vpack.c.b16 %v2456, %v2439
    %v2899 = vpack.c.b16 %v2457, %v2440
    %v2900 = vpack.c.b16 %v2458, %v2441
    %v2901 = vpack.c.b16 %v2459, %v2442
    %v2902 = vpack.c.b16 %v2460, %v2443
    %v2903 = vpack.c.b16 %v2461, %v2444
    %v2904 = vpack.c.b16 %v2462, %v2445
    %v2905 = vpack.c.b16 %v2463, %v2446
    %v2906 = vpack.c.b16 %v2481, %v2464
    %v2907 = vpack.c.b16 %v2482, %v2465
    %v2908 = vpack.c.b16 %v2483, %v2466
    %v2909 = vpack.c.b16 %v2484, %v2467
    %v2910 = vpack.c.b16 %v2485, %v2468
    %v2911 = vpack.c.b16 %v2486, %v2469
    %v2912 = vpack.c.b16 %v2487, %v2470
    %v2913 = vpack.c.b16 %v2488, %v2471
    %v2914 = vpack.c.b16 %v2489, %v2472
    %v2915 = vpack.c.b16 %v2490, %v2473
    %v2916 = vpack.c.b16 %v2491, %v2474
    %v2917 = vpack.c.b16 %v2492, %v2475
    %v2918 = vpack.c.b16 %v2493, %v2476
    %v2919 = vpack.c.b16 %v2494, %v2477
    %v2920 = vpack.c.b16 %v2495, %v2478
    %v2921 = vpack.c.b16 %v2496, %v2479
    %v2922 = vpack.c.b16 %v2497, %v2480
    %v2923 = vpack.c.b16 %v2515, %v2498
    %v2924 = vpack.c.b16 %v2516, %v2499
    %v2925 = vpack.c.b16 %v2517, %v2500
    %v2926 = vpack.c.b16 %v2518, %v2501
    %v2927 = vpack.c.b16 %v2519, %v2502
    %v2928 = vpack.c.b16 %v2520, %v2503
    %v2929 = vpack.c.b16 %v2521, %v2504
    %v2930 = vpack.c.b16 %v2522, %v2505
    %v2931 = vpack.c.b16 %v2523, %v2506
    %v2932 = vpack.c.b16 %v2524, %v2507
    %v2933 = vpack.c.b16 %v2525, %v2508
    %v2934 = vpack.c.b16 %v2526, %v2509
    %v2935 = vpack.c.b16 %v2527, %v2510
    %v2936 = vpack.c.b16 %v2528, %v2511
    %v2937 = vpack.c.b16 %v2529, %v2512
    %v2938 = vpack.c.b16 %v2530, %v2513
    %v2939 = vpack.c.b16 %v2531, %v2514
    %v2940 = vpack.c.b16 %v2549, %v2532
    %v2941 = vpack.c.b16 %v2550, %v2533
    %v2942 = vpack.c.b16 %v2551, %v2534
    %v2943 = vpack.c.b16 %v2552, %v2535
    %v2944 = vpack.c.b16 %v2553, %v2536
    %v2945 = vpack.c.b16 %v2554, %v2537
    %v2946 = vpack.c.b16 %v2555, %v2538
    %v2947 = vpack.c.b16 %v2556, %v2539
    %v2948 = vpack.c.b16 %v2557, %v2540
    %v2949 = vpack.c.b16 %v2558, %v2541
    %v2950 = vpack.c.b16 %v2559, %v2542
    %v2951 = vpack.c.b16 %v2560, %v2543
    %v2952 = vpack.c.b16 %v2561, %v2544
    %v2953 = vpack.c.b16 %v2562, %v2545
    %v2954 = vpack.c.b16 %v2563, %v2546
    %v2955 = vpack.c.b16 %v2564, %v2547
    %v2956 = vpack.c.b16 %v2565, %v2548
    %v2957 = vpack.c.b16 %v2583, %v2566
    %v2958 = vpack.c.b16 %v2584, %v2567
    %v2959 = vpack.c.b16 %v2585, %v2568
    %v2960 = vpack.c.b16 %v2586, %v2569
    %v2961 = vpack.c.b16 %v2587, %v2570
    %v2962 = vpack.c.b16 %v2588, %v2571
    %v2963 = vpack.c.b16 %v2589, %v2572
    %v2964 = vpack.c.b16 %v2590, %v2573
    %v2965 = vpack.c.b16 %v2591, %v2574
    %v2966 = vpack.c.b16 %v2592, %v2575
    %v2967 = vpack.c.b16 %v2593, %v2576
    %v2968 = vpack.c.b16 %v2594, %v2577
    %v2969 = vpack.c.b16 %v2595, %v2578
    %v2970 = vpack.c.b16 %v2596, %v2579
    %v2971 = vpack.c.b16 %v2597, %v2580
    %v2972 = vpack.c.b16 %v2598, %v2581
    %v2973 = vpack.c.b16 %v2599, %v2582
    %v2974 = vpack.c.b16 %v2600, %v2600
    %v2975 = vpack.c.b16 %v2601, %v2601
    %v2976 = vpack.c.b16 %v2602, %v2602
    %v2977 = vpack.c.b16 %v2603, %v2603
    %v2978 = vpack.c.b16 %v2604, %v2604
    %v2979 = vpack.c.b16 %v2605, %v2605
    %v2980 = vpack.c.b16 %v2606, %v2606
    %v2981 = vpack.c.b16 %v2607, %v2607
    %v2982 = vpack.c.b16 %v2608, %v2608
    %v2983 = vpack.c.b16 %v2609, %v2609
    %v2984 = vpack.c.b16 %v2610, %v2610
    %v2985 = vpack.c.b16 %v2611, %v2611
    %v2986 = vpack.c.b16 %v2612, %v2612
    %v2987 = vpack.c.b16 %v2613, %v2613
    %v2988 = vpack.c.b16 %v2614, %v2614
    %v2989 = vpack.c.b16 %v2615, %v2615
    %v2990 = vpack.c.b16 %v2616, %v2616
    %vm3343 = vcmask 130048
    %v3345 = vsel %vm3343, %v2633, 0
    %v3348 = vsel %vm3343, %v2650, 0
    %v3351 = vsel %vm3343, %v2667, 0
    %v3354 = vsel %vm3343, %v2684, 0
    %v3357 = vsel %vm3343, %v2701, 0
    %v3360 = vsel %vm3343, %v2718, 0
    %v3363 = vsel %vm3343, %v2735, 0
    %v3366 = vsel %vm3343, %v2752, 0
    %v3369 = vsel %vm3343, %v2769, 0
    %v3372 = vsel %vm3343, %v2786, 0
    %v3375 = vsel %vm3343, %v2803, 0
    %v3378 = vsel %vm3343, %v2820, 0
    %v3381 = vsel %vm3343, %v2837, 0
    %v3384 = vsel %vm3343, %v2854, 0
    %v3387 = vsel %vm3343, %v2871, 0
    %v3390 = vsel %vm3343, %v2888, 0
    %v3393 = vsel %vm3343, %v2905, 0
    %v3396 = vsel %vm3343, %v2922, 0
    %v3399 = vsel %vm3343, %v2939, 0
    %v3402 = vsel %vm3343, %v2956, 0
    %v3405 = vsel %vm3343, %v2973, 0
    %v3408 = vsel %vm3343, %v2990, 0
    %3410 = vmatprep.subr.bf16.mxu0 0
    %3411 = vmatpush1.bf16.msra.mxu0 %v1370
    %3412 = vmatprep.subr.bf16.mxu0 0
    %3413 = vmatpush1.bf16.msra.mxu0 %v1371
    %3414 = vmatprep.subr.bf16.mxu0 0
    %3415 = vmatpush1.bf16.msra.mxu0 %v1372
    %3416 = vmatprep.subr.bf16.mxu0 0
    %3417 = vmatpush1.bf16.msra.mxu0 %v1373
    %3418 = vmatprep.subr.bf16.mxu0 0
    %3419 = vmatpush1.bf16.msra.mxu0 %v1374
    %3420 = vmatprep.subr.bf16.mxu0 0
    %3421 = vmatpush1.bf16.msra.mxu0 %v1375
    %3422 = vmatprep.subr.bf16.mxu0 0
    %3423 = vmatpush1.bf16.msra.mxu0 %v1376
    %3424 = vmatprep.subr.bf16.mxu0 0
    %3425 = vmatpush1.bf16.msra.mxu0 %v1377
    %3426 = vmatprep.subr.bf16.mxu0 0
    %3427 = vmatpush1.bf16.msra.mxu0 %v1378
    %3428 = vmatprep.subr.bf16.mxu0 0
    %3429 = vmatpush1.bf16.msra.mxu0 %v1379
    %3430 = vmatprep.subr.bf16.mxu0 0
    %3431 = vmatpush1.bf16.msra.mxu0 %v1380
    %3432 = vmatprep.subr.bf16.mxu0 0
    %3433 = vmatpush1.bf16.msra.mxu0 %v1381
    %3434 = vmatprep.subr.bf16.mxu0 0
    %3435 = vmatpush1.bf16.msra.mxu0 %v1382
    %3436 = vmatprep.subr.bf16.mxu0 0
    %3437 = vmatpush1.bf16.msra.mxu0 %v1383
    %3438 = vmatprep.subr.bf16.mxu0 0
    %3439 = vmatpush1.bf16.msra.mxu0 %v1384
    %3440 = vmatprep.subr.bf16.mxu0 0
    %3441 = vmatpush1.bf16.msra.mxu0 %v1385
    %3442 = vmatprep.mubr.bf16.mxu0 %v2618
    %3443 = vmatmul.mubr.bf16.gmra.mrb[0].mxu0 %v2617
    %v3444 = vpop.f32.mrb[0].mxu0
    %v3445 = vadd.f32 0.0, %v3444
    %v3446 = vpop.f32.mrb[0].mxu0
    %v3447 = vpop.f32.mrb[0].mxu0
    %v3448 = vadd.f32 0.0, %v3447
    %v3449 = vpop.f32.mrb[0].mxu0
    %3450 = vmatprep.mubr.bf16.mxu0 %v2635
    %3451 = vmatmul.mubr.bf16.gmra.mrb[0].mxu0 %v2634
    %v3452 = vpop.f32.mrb[0].mxu0
    %v3453 = vadd.f32 0.0, %v3452
    %v3454 = vpop.f32.mrb[0].mxu0
    %v3455 = vpop.f32.mrb[0].mxu0
    %v3456 = vadd.f32 0.0, %v3455
    %v3457 = vpop.f32.mrb[0].mxu0
    %3458 = vmatprep.mubr.bf16.mxu0 %v2652
    %3459 = vmatmul.mubr.bf16.gmra.mrb[0].mxu0 %v2651
    %v3460 = vpop.f32.mrb[0].mxu0
    %v3461 = vadd.f32 0.0, %v3460
    %v3462 = vpop.f32.mrb[0].mxu0
    %v3463 = vpop.f32.mrb[0].mxu0
    %v3464 = vadd.f32 0.0, %v3463
    %v3465 = vpop.f32.mrb[0].mxu0
    %3466 = vmatprep.mubr.bf16.mxu0 %v2669
    %3467 = vmatmul.mubr.bf16.gmra.mrb[0].mxu0 %v2668
    %v3468 = vpop.f32.mrb[0].mxu0
    %v3469 = vadd.f32 0.0, %v3468
    %v3470 = vpop.f32.mrb[0].mxu0
    %v3471 = vpop.f32.mrb[0].mxu0
    %v3472 = vadd.f32 0.0, %v3471
    %v3473 = vpop.f32.mrb[0].mxu0
    %3474 = vmatprep.mubr.bf16.mxu0 %v2686
    %3475 = vmatmul.mubr.bf16.gmra.mrb[0].mxu0 %v2685
    %v3476 = vpop.f32.mrb[0].mxu0
    %v3477 = vadd.f32 0.0, %v3476
    %v3478 = vpop.f32.mrb[0].mxu0
    %v3479 = vpop.f32.mrb[0].mxu0
    %v3480 = vadd.f32 0.0, %v3479
    %v3481 = vpop.f32.mrb[0].mxu0
    %3482 = vmatprep.mubr.bf16.mxu0 %v2703
    %3483 = vmatmul.mubr.bf16.gmra.mrb[0].mxu0 %v2702
    %v3484 = vpop.f32.mrb[0].mxu0
    %v3485 = vadd.f32 0.0, %v3484
    %v3486 = vpop.f32.mrb[0].mxu0
    %v3487 = vpop.f32.mrb[0].mxu0
    %v3488 = vadd.f32 0.0, %v3487
    %v3489 = vpop.f32.mrb[0].mxu0
    %3490 = vmatprep.mubr.bf16.mxu0 %v2720
    %3491 = vmatmul.mubr.bf16.gmra.mrb[0].mxu0 %v2719
    %v3492 = vpop.f32.mrb[0].mxu0
    %v3493 = vadd.f32 0.0, %v3492
    %v3494 = vpop.f32.mrb[0].mxu0
    %v3495 = vpop.f32.mrb[0].mxu0
    %v3496 = vadd.f32 0.0, %v3495
    %v3497 = vpop.f32.mrb[0].mxu0
    %3498 = vmatprep.mubr.bf16.mxu0 %v2737
    %3499 = vmatmul.mubr.bf16.gmra.mrb[0].mxu0 %v2736
    %v3500 = vpop.f32.mrb[0].mxu0
    %v3501 = vadd.f32 0.0, %v3500
    %v3502 = vpop.f32.mrb[0].mxu0
    %v3503 = vpop.f32.mrb[0].mxu0
    %v3504 = vadd.f32 0.0, %v3503
    %v3505 = vpop.f32.mrb[0].mxu0
    %3506 = vmatprep.mubr.bf16.mxu0 %v2754
    %3507 = vmatmul.mubr.bf16.gmra.mrb[0].mxu0 %v2753
    %v3508 = vpop.f32.mrb[0].mxu0
    %v3509 = vadd.f32 0.0, %v3508
    %v3510 = vpop.f32.mrb[0].mxu0
    %v3511 = vpop.f32.mrb[0].mxu0
    %v3512 = vadd.f32 0.0, %v3511
    %v3513 = vpop.f32.mrb[0].mxu0
    %3514 = vmatprep.mubr.bf16.mxu0 %v2771
    %3515 = vmatmul.mubr.bf16.gmra.mrb[0].mxu0 %v2770
    %v3516 = vpop.f32.mrb[0].mxu0
    %v3517 = vadd.f32 0.0, %v3516
    %v3518 = vpop.f32.mrb[0].mxu0
    %v3519 = vpop.f32.mrb[0].mxu0
    %v3520 = vadd.f32 0.0, %v3519
    %v3521 = vpop.f32.mrb[0].mxu0
    %3522 = vmatprep.mubr.bf16.mxu0 %v2788
    %3523 = vmatmul.mubr.bf16.gmra.mrb[0].mxu0 %v2787
    %v3524 = vpop.f32.mrb[0].mxu0
    %v3525 = vadd.f32 0.0, %v3524
    %v3526 = vpop.f32.mrb[0].mxu0
    %v3527 = vpop.f32.mrb[0].mxu0
    %v3528 = vadd.f32 0.0, %v3527
    %v3529 = vpop.f32.mrb[0].mxu0
    %3530 = vmatprep.mubr.bf16.mxu0 %v2805
    %3531 = vmatmul.mubr.bf16.gmra.mrb[0].mxu0 %v2804
    %v3532 = vpop.f32.mrb[0].mxu0
    %v3533 = vadd.f32 0.0, %v3532
    %v3534 = vpop.f32.mrb[0].mxu0
    %v3535 = vpop.f32.mrb[0].mxu0
    %v3536 = vadd.f32 0.0, %v3535
    %v3537 = vpop.f32.mrb[0].mxu0
    %3538 = vmatprep.mubr.bf16.mxu0 %v2822
    %3539 = vmatmul.mubr.bf16.gmra.mrb[0].mxu0 %v2821
    %v3540 = vpop.f32.mrb[0].mxu0
    %v3541 = vadd.f32 0.0, %v3540
    %v3542 = vpop.f32.mrb[0].mxu0
    %v3543 = vpop.f32.mrb[0].mxu0
    %v3544 = vadd.f32 0.0, %v3543
    %v3545 = vpop.f32.mrb[0].mxu0
    %3546 = vmatprep.mubr.bf16.mxu0 %v2839
    %3547 = vmatmul.mubr.bf16.gmra.mrb[0].mxu0 %v2838
    %v3548 = vpop.f32.mrb[0].mxu0
    %v3549 = vadd.f32 0.0, %v3548
    %v3550 = vpop.f32.mrb[0].mxu0
    %v3551 = vpop.f32.mrb[0].mxu0
    %v3552 = vadd.f32 0.0, %v3551
    %v3553 = vpop.f32.mrb[0].mxu0
    %3554 = vmatprep.mubr.bf16.mxu0 %v2856
    %3555 = vmatmul.mubr.bf16.gmra.mrb[0].mxu0 %v2855
    %v3556 = vpop.f32.mrb[0].mxu0
    %v3557 = vadd.f32 0.0, %v3556
    %v3558 = vpop.f32.mrb[0].mxu0
    %v3559 = vpop.f32.mrb[0].mxu0
    %v3560 = vadd.f32 0.0, %v3559
    %v3561 = vpop.f32.mrb[0].mxu0
    %3562 = vmatprep.mubr.bf16.mxu0 %v2873
    %3563 = vmatmul.mubr.bf16.gmra.mrb[0].mxu0 %v2872
    %v3564 = vpop.f32.mrb[0].mxu0
    %v3565 = vadd.f32 0.0, %v3564
    %v3566 = vpop.f32.mrb[0].mxu0
    %v3567 = vpop.f32.mrb[0].mxu0
    %v3568 = vadd.f32 0.0, %v3567
    %v3569 = vpop.f32.mrb[0].mxu0
    %3570 = vmatprep.mubr.bf16.mxu0 %v2890
    %3571 = vmatmul.mubr.bf16.gmra.mrb[0].mxu0 %v2889
    %v3572 = vpop.f32.mrb[0].mxu0
    %v3573 = vadd.f32 0.0, %v3572
    %v3574 = vpop.f32.mrb[0].mxu0
    %v3575 = vpop.f32.mrb[0].mxu0
    %v3576 = vadd.f32 0.0, %v3575
    %v3577 = vpop.f32.mrb[0].mxu0
    %3578 = vmatprep.mubr.bf16.mxu0 %v2907
    %3579 = vmatmul.mubr.bf16.gmra.mrb[0].mxu0 %v2906
    %v3580 = vpop.f32.mrb[0].mxu0
    %v3581 = vadd.f32 0.0, %v3580
    %v3582 = vpop.f32.mrb[0].mxu0
    %v3583 = vpop.f32.mrb[0].mxu0
    %v3584 = vadd.f32 0.0, %v3583
    %v3585 = vpop.f32.mrb[0].mxu0
    %3586 = vmatprep.mubr.bf16.mxu0 %v2924
    %3587 = vmatmul.mubr.bf16.gmra.mrb[0].mxu0 %v2923
    %v3588 = vpop.f32.mrb[0].mxu0
    %v3589 = vadd.f32 0.0, %v3588
    %v3590 = vpop.f32.mrb[0].mxu0
    %v3591 = vpop.f32.mrb[0].mxu0
    %v3592 = vadd.f32 0.0, %v3591
    %v3593 = vpop.f32.mrb[0].mxu0
    %3594 = vmatprep.mubr.bf16.mxu0 %v2941
    %3595 = vmatmul.mubr.bf16.gmra.mrb[0].mxu0 %v2940
    %v3596 = vpop.f32.mrb[0].mxu0
    %v3597 = vadd.f32 0.0, %v3596
    %v3598 = vpop.f32.mrb[0].mxu0
    %v3599 = vpop.f32.mrb[0].mxu0
    %v3600 = vadd.f32 0.0, %v3599
    %v3601 = vpop.f32.mrb[0].mxu0
    %3602 = vmatprep.mubr.bf16.mxu0 %v2958
    %3603 = vmatmul.mubr.bf16.gmra.mrb[0].mxu0 %v2957
    %v3604 = vpop.f32.mrb[0].mxu0
    %v3605 = vadd.f32 0.0, %v3604
    %v3606 = vpop.f32.mrb[0].mxu0
    %v3607 = vpop.f32.mrb[0].mxu0
    %v3608 = vadd.f32 0.0, %v3607
    %v3609 = vpop.f32.mrb[0].mxu0
    %3610 = vmatprep.mubr.bf16.mxu0 %v2975
    %3611 = vmatmul.mubr.bf16.gmra.mrb[0].mxu0 %v2974
    %v3612 = vpop.f32.mrb[0].mxu0
    %v3613 = vadd.f32 0.0, %v3612
    %v3614 = vpop.f32.mrb[0].mxu0
    %v3615 = vpop.f32.mrb[0].mxu0
    %v3616 = vpop.f32.mrb[0].mxu0
    %3617 = vdwg.mxu0
    %3618 = vmatprep.subr.bf16.mxu0 0
    %3619 = vmatpush1.bf16.msra.mxu0 %v1386
    %3620 = vmatprep.subr.bf16.mxu0 0
    %3621 = vmatpush1.bf16.msra.mxu0 %v1387
    %3622 = vmatprep.subr.bf16.mxu0 0
    %3623 = vmatpush1.bf16.msra.mxu0 %v1388
    %3624 = vmatprep.subr.bf16.mxu0 0
    %3625 = vmatpush1.bf16.msra.mxu0 %v1389
    %3626 = vmatprep.subr.bf16.mxu0 0
    %3627 = vmatpush1.bf16.msra.mxu0 %v1390
    %3628 = vmatprep.subr.bf16.mxu0 0
    %3629 = vmatpush1.bf16.msra.mxu0 %v1391
    %3630 = vmatprep.subr.bf16.mxu0 0
    %3631 = vmatpush1.bf16.msra.mxu0 %v1392
    %3632 = vmatprep.subr.bf16.mxu0 0
    %3633 = vmatpush1.bf16.msra.mxu0 %v1393
    %3634 = vmatprep.subr.bf16.mxu0 0
    %3635 = vmatpush1.bf16.msra.mxu0 %v1394
    %3636 = vmatprep.subr.bf16.mxu0 0
    %3637 = vmatpush1.bf16.msra.mxu0 %v1395
    %3638 = vmatprep.subr.bf16.mxu0 0
    %3639 = vmatpush1.bf16.msra.mxu0 %v1396
    %3640 = vmatprep.subr.bf16.mxu0 0
    %3641 = vmatpush1.bf16.msra.mxu0 %v1397
    %3642 = vmatprep.subr.bf16.mxu0 0
    %3643 = vmatpush1.bf16.msra.mxu0 %v1398
    %3644 = vmatprep.subr.bf16.mxu0 0
    %3645 = vmatpush1.bf16.msra.mxu0 %v1399
    %3646 = vmatprep.subr.bf16.mxu0 0
    %3647 = vmatpush1.bf16.msra.mxu0 %v1400
    %3648 = vmatprep.subr.bf16.mxu0 0
    %3649 = vmatpush1.bf16.msra.mxu0 %v1401
    %3650 = vmatprep.mubr.bf16.mxu0 %v2620
    %3651 = vmatmul.mubr.bf16.gmra.mrb[0].mxu0 %v2619
    %v3652 = vpop.f32.mrb[0].mxu0
    %v3653 = vadd.f32 %v3445, %v3652
    %v3654 = vpop.f32.mrb[0].mxu0
    %v3655 = vpop.f32.mrb[0].mxu0
    %v3656 = vadd.f32 %v3448, %v3655
    %v3657 = vpop.f32.mrb[0].mxu0
    %3658 = vmatprep.mubr.bf16.mxu0 %v2637
    %3659 = vmatmul.mubr.bf16.gmra.mrb[0].mxu0 %v2636
    %v3660 = vpop.f32.mrb[0].mxu0
    %v3661 = vadd.f32 %v3453, %v3660
    %v3662 = vpop.f32.mrb[0].mxu0
    %v3663 = vpop.f32.mrb[0].mxu0
    %v3664 = vadd.f32 %v3456, %v3663
    %v3665 = vpop.f32.mrb[0].mxu0
    %3666 = vmatprep.mubr.bf16.mxu0 %v2654
    %3667 = vmatmul.mubr.bf16.gmra.mrb[0].mxu0 %v2653
    %v3668 = vpop.f32.mrb[0].mxu0
    %v3669 = vadd.f32 %v3461, %v3668
    %v3670 = vpop.f32.mrb[0].mxu0
    %v3671 = vpop.f32.mrb[0].mxu0
    %v3672 = vadd.f32 %v3464, %v3671
    %v3673 = vpop.f32.mrb[0].mxu0
    %3674 = vmatprep.mubr.bf16.mxu0 %v2671
    %3675 = vmatmul.mubr.bf16.gmra.mrb[0].mxu0 %v2670
    %v3676 = vpop.f32.mrb[0].mxu0
    %v3677 = vadd.f32 %v3469, %v3676
    %v3678 = vpop.f32.mrb[0].mxu0
    %v3679 = vpop.f32.mrb[0].mxu0
    %v3680 = vadd.f32 %v3472, %v3679
    %v3681 = vpop.f32.mrb[0].mxu0
    %3682 = vmatprep.mubr.bf16.mxu0 %v2688
    %3683 = vmatmul.mubr.bf16.gmra.mrb[0].mxu0 %v2687
    %v3684 = vpop.f32.mrb[0].mxu0
    %v3685 = vadd.f32 %v3477, %v3684
    %v3686 = vpop.f32.mrb[0].mxu0
    %v3687 = vpop.f32.mrb[0].mxu0
    %v3688 = vadd.f32 %v3480, %v3687
    %v3689 = vpop.f32.mrb[0].mxu0
    %3690 = vmatprep.mubr.bf16.mxu0 %v2705
    %3691 = vmatmul.mubr.bf16.gmra.mrb[0].mxu0 %v2704
    %v3692 = vpop.f32.mrb[0].mxu0
    %v3693 = vadd.f32 %v3485, %v3692
    %v3694 = vpop.f32.mrb[0].mxu0
    %v3695 = vpop.f32.mrb[0].mxu0
    %v3696 = vadd.f32 %v3488, %v3695
    %v3697 = vpop.f32.mrb[0].mxu0
    %3698 = vmatprep.mubr.bf16.mxu0 %v2722
    %3699 = vmatmul.mubr.bf16.gmra.mrb[0].mxu0 %v2721
    %v3700 = vpop.f32.mrb[0].mxu0
    %v3701 = vadd.f32 %v3493, %v3700
    %v3702 = vpop.f32.mrb[0].mxu0
    %v3703 = vpop.f32.mrb[0].mxu0
    %v3704 = vadd.f32 %v3496, %v3703
    %v3705 = vpop.f32.mrb[0].mxu0
    %3706 = vmatprep.mubr.bf16.mxu0 %v2739
    %3707 = vmatmul.mubr.bf16.gmra.mrb[0].mxu0 %v2738
    %v3708 = vpop.f32.mrb[0].mxu0
    %v3709 = vadd.f32 %v3501, %v3708
    %v3710 = vpop.f32.mrb[0].mxu0
    %v3711 = vpop.f32.mrb[0].mxu0
    %v3712 = vadd.f32 %v3504, %v3711
    %v3713 = vpop.f32.mrb[0].mxu0
    %3714 = vmatprep.mubr.bf16.mxu0 %v2756
    %3715 = vmatmul.mubr.bf16.gmra.mrb[0].mxu0 %v2755
    %v3716 = vpop.f32.mrb[0].mxu0
    %v3717 = vadd.f32 %v3509, %v3716
    %v3718 = vpop.f32.mrb[0].mxu0
    %v3719 = vpop.f32.mrb[0].mxu0
    %v3720 = vadd.f32 %v3512, %v3719
    %v3721 = vpop.f32.mrb[0].mxu0
    %3722 = vmatprep.mubr.bf16.mxu0 %v2773
    %3723 = vmatmul.mubr.bf16.gmra.mrb[0].mxu0 %v2772
    %v3724 = vpop.f32.mrb[0].mxu0
    %v3725 = vadd.f32 %v3517, %v3724
    %v3726 = vpop.f32.mrb[0].mxu0
    %v3727 = vpop.f32.mrb[0].mxu0
    %v3728 = vadd.f32 %v3520, %v3727
    %v3729 = vpop.f32.mrb[0].mxu0
    %3730 = vmatprep.mubr.bf16.mxu0 %v2790
    %3731 = vmatmul.mubr.bf16.gmra.mrb[0].mxu0 %v2789
    %v3732 = vpop.f32.mrb[0].mxu0
    %v3733 = vadd.f32 %v3525, %v3732
    %v3734 = vpop.f32.mrb[0].mxu0
    %v3735 = vpop.f32.mrb[0].mxu0
    %v3736 = vadd.f32 %v3528, %v3735
    %v3737 = vpop.f32.mrb[0].mxu0
    %3738 = vmatprep.mubr.bf16.mxu0 %v2807
    %3739 = vmatmul.mubr.bf16.gmra.mrb[0].mxu0 %v2806
    %v3740 = vpop.f32.mrb[0].mxu0
    %v3741 = vadd.f32 %v3533, %v3740
    %v3742 = vpop.f32.mrb[0].mxu0
    %v3743 = vpop.f32.mrb[0].mxu0
    %v3744 = vadd.f32 %v3536, %v3743
    %v3745 = vpop.f32.mrb[0].mxu0
    %3746 = vmatprep.mubr.bf16.mxu0 %v2824
    %3747 = vmatmul.mubr.bf16.gmra.mrb[0].mxu0 %v2823
    %v3748 = vpop.f32.mrb[0].mxu0
    %v3749 = vadd.f32 %v3541, %v3748
    %v3750 = vpop.f32.mrb[0].mxu0
    %v3751 = vpop.f32.mrb[0].mxu0
    %v3752 = vadd.f32 %v3544, %v3751
    %v3753 = vpop.f32.mrb[0].mxu0
    %3754 = vmatprep.mubr.bf16.mxu0 %v2841
    %3755 = vmatmul.mubr.bf16.gmra.mrb[0].mxu0 %v2840
    %v3756 = vpop.f32.mrb[0].mxu0
    %v3757 = vadd.f32 %v3549, %v3756
    %v3758 = vpop.f32.mrb[0].mxu0
    %v3759 = vpop.f32.mrb[0].mxu0
    %v3760 = vadd.f32 %v3552, %v3759
    %v3761 = vpop.f32.mrb[0].mxu0
    %3762 = vmatprep.mubr.bf16.mxu0 %v2858
    %3763 = vmatmul.mubr.bf16.gmra.mrb[0].mxu0 %v2857
    %v3764 = vpop.f32.mrb[0].mxu0
    %v3765 = vadd.f32 %v3557, %v3764
    %v3766 = vpop.f32.mrb[0].mxu0
    %v3767 = vpop.f32.mrb[0].mxu0
    %v3768 = vadd.f32 %v3560, %v3767
    %v3769 = vpop.f32.mrb[0].mxu0
    %3770 = vmatprep.mubr.bf16.mxu0 %v2875
    %3771 = vmatmul.mubr.bf16.gmra.mrb[0].mxu0 %v2874
    %v3772 = vpop.f32.mrb[0].mxu0
    %v3773 = vadd.f32 %v3565, %v3772
    %v3774 = vpop.f32.mrb[0].mxu0
    %v3775 = vpop.f32.mrb[0].mxu0
    %v3776 = vadd.f32 %v3568, %v3775
    %v3777 = vpop.f32.mrb[0].mxu0
    %3778 = vmatprep.mubr.bf16.mxu0 %v2892
    %3779 = vmatmul.mubr.bf16.gmra.mrb[0].mxu0 %v2891
    %v3780 = vpop.f32.mrb[0].mxu0
    %v3781 = vadd.f32 %v3573, %v3780
    %v3782 = vpop.f32.mrb[0].mxu0
    %v3783 = vpop.f32.mrb[0].mxu0
    %v3784 = vadd.f32 %v3576, %v3783
    %v3785 = vpop.f32.mrb[0].mxu0
    %3786 = vmatprep.mubr.bf16.mxu0 %v2909
    %3787 = vmatmul.mubr.bf16.gmra.mrb[0].mxu0 %v2908
    %v3788 = vpop.f32.mrb[0].mxu0
    %v3789 = vadd.f32 %v3581, %v3788
    %v3790 = vpop.f32.mrb[0].mxu0
    %v3791 = vpop.f32.mrb[0].mxu0
    %v3792 = vadd.f32 %v3584, %v3791
    %v3793 = vpop.f32.mrb[0].mxu0
    %3794 = vmatprep.mubr.bf16.mxu0 %v2926
    %3795 = vmatmul.mubr.bf16.gmra.mrb[0].mxu0 %v2925
    %v3796 = vpop.f32.mrb[0].mxu0
    %v3797 = vadd.f32 %v3589, %v3796
    %v3798 = vpop.f32.mrb[0].mxu0
    %v3799 = vpop.f32.mrb[0].mxu0
    %v3800 = vadd.f32 %v3592, %v3799
    %v3801 = vpop.f32.mrb[0].mxu0
    %3802 = vmatprep.mubr.bf16.mxu0 %v2943
    %3803 = vmatmul.mubr.bf16.gmra.mrb[0].mxu0 %v2942
    %v3804 = vpop.f32.mrb[0].mxu0
    %v3805 = vadd.f32 %v3597, %v3804
    %v3806 = vpop.f32.mrb[0].mxu0
    %v3807 = vpop.f32.mrb[0].mxu0
    %v3808 = vadd.f32 %v3600, %v3807
    %v3809 = vpop.f32.mrb[0].mxu0
    %3810 = vmatprep.mubr.bf16.mxu0 %v2960
    %3811 = vmatmul.mubr.bf16.gmra.mrb[0].mxu0 %v2959
    %v3812 = vpop.f32.mrb[0].mxu0
    %v3813 = vadd.f32 %v3605, %v3812
    %v3814 = vpop.f32.mrb[0].mxu0
    %v3815 = vpop.f32.mrb[0].mxu0
    %v3816 = vadd.f32 %v3608, %v3815
    %v3817 = vpop.f32.mrb[0].mxu0
    %3818 = vmatprep.mubr.bf16.mxu0 %v2977
    %3819 = vmatmul.mubr.bf16.gmra.mrb[0].mxu0 %v2976
    %v3820 = vpop.f32.mrb[0].mxu0
    %v3821 = vadd.f32 %v3613, %v3820
    %v3822 = vpop.f32.mrb[0].mxu0
    %v3823 = vpop.f32.mrb[0].mxu0
    %v3824 = vpop.f32.mrb[0].mxu0
    %3825 = vdwg.mxu0
    %3826 = vmatprep.subr.bf16.mxu0 0
    %3827 = vmatpush1.bf16.msra.mxu0 %v1402
    %3828 = vmatprep.subr.bf16.mxu0 0
    %3829 = vmatpush1.bf16.msra.mxu0 %v1403
    %3830 = vmatprep.subr.bf16.mxu0 0
    %3831 = vmatpush1.bf16.msra.mxu0 %v1404
    %3832 = vmatprep.subr.bf16.mxu0 0
    %3833 = vmatpush1.bf16.msra.mxu0 %v1405
    %3834 = vmatprep.subr.bf16.mxu0 0
    %3835 = vmatpush1.bf16.msra.mxu0 %v1406
    %3836 = vmatprep.subr.bf16.mxu0 0
    %3837 = vmatpush1.bf16.msra.mxu0 %v1407
    %3838 = vmatprep.subr.bf16.mxu0 0
    %3839 = vmatpush1.bf16.msra.mxu0 %v1408
    %3840 = vmatprep.subr.bf16.mxu0 0
    %3841 = vmatpush1.bf16.msra.mxu0 %v1409
    %3842 = vmatprep.subr.bf16.mxu0 0
    %3843 = vmatpush1.bf16.msra.mxu0 %v1410
    %3844 = vmatprep.subr.bf16.mxu0 0
    %3845 = vmatpush1.bf16.msra.mxu0 %v1411
    %3846 = vmatprep.subr.bf16.mxu0 0
    %3847 = vmatpush1.bf16.msra.mxu0 %v1412
    %3848 = vmatprep.subr.bf16.mxu0 0
    %3849 = vmatpush1.bf16.msra.mxu0 %v1413
    %3850 = vmatprep.subr.bf16.mxu0 0
    %3851 = vmatpush1.bf16.msra.mxu0 %v1414
    %3852 = vmatprep.subr.bf16.mxu0 0
    %3853 = vmatpush1.bf16.msra.mxu0 %v1415
    %3854 = vmatprep.subr.bf16.mxu0 0
    %3855 = vmatpush1.bf16.msra.mxu0 %v1416
    %3856 = vmatprep.subr.bf16.mxu0 0
    %3857 = vmatpush1.bf16.msra.mxu0 %v1417
    %3858 = vmatprep.mubr.bf16.mxu0 %v2622
    %3859 = vmatmul.mubr.bf16.gmra.mrb[0].mxu0 %v2621
    %v3860 = vpop.f32.mrb[0].mxu0
    %v3861 = vadd.f32 %v3653, %v3860
    %v3862 = vpop.f32.mrb[0].mxu0
    %v3863 = vpop.f32.mrb[0].mxu0
    %v3864 = vadd.f32 %v3656, %v3863
    %v3865 = vpop.f32.mrb[0].mxu0
    %3866 = vmatprep.mubr.bf16.mxu0 %v2639
    %3867 = vmatmul.mubr.bf16.gmra.mrb[0].mxu0 %v2638
    %v3868 = vpop.f32.mrb[0].mxu0
    %v3869 = vadd.f32 %v3661, %v3868
    %v3870 = vpop.f32.mrb[0].mxu0
    %v3871 = vpop.f32.mrb[0].mxu0
    %v3872 = vadd.f32 %v3664, %v3871
    %v3873 = vpop.f32.mrb[0].mxu0
    %3874 = vmatprep.mubr.bf16.mxu0 %v2656
    %3875 = vmatmul.mubr.bf16.gmra.mrb[0].mxu0 %v2655
    %v3876 = vpop.f32.mrb[0].mxu0
    %v3877 = vadd.f32 %v3669, %v3876
    %v3878 = vpop.f32.mrb[0].mxu0
    %v3879 = vpop.f32.mrb[0].mxu0
    %v3880 = vadd.f32 %v3672, %v3879
    %v3881 = vpop.f32.mrb[0].mxu0
    %3882 = vmatprep.mubr.bf16.mxu0 %v2673
    %3883 = vmatmul.mubr.bf16.gmra.mrb[0].mxu0 %v2672
    %v3884 = vpop.f32.mrb[0].mxu0
    %v3885 = vadd.f32 %v3677, %v3884
    %v3886 = vpop.f32.mrb[0].mxu0
    %v3887 = vpop.f32.mrb[0].mxu0
    %v3888 = vadd.f32 %v3680, %v3887
    %v3889 = vpop.f32.mrb[0].mxu0
    %3890 = vmatprep.mubr.bf16.mxu0 %v2690
    %3891 = vmatmul.mubr.bf16.gmra.mrb[0].mxu0 %v2689
    %v3892 = vpop.f32.mrb[0].mxu0
    %v3893 = vadd.f32 %v3685, %v3892
    %v3894 = vpop.f32.mrb[0].mxu0
    %v3895 = vpop.f32.mrb[0].mxu0
    %v3896 = vadd.f32 %v3688, %v3895
    %v3897 = vpop.f32.mrb[0].mxu0
    %3898 = vmatprep.mubr.bf16.mxu0 %v2707
    %3899 = vmatmul.mubr.bf16.gmra.mrb[0].mxu0 %v2706
    %v3900 = vpop.f32.mrb[0].mxu0
    %v3901 = vadd.f32 %v3693, %v3900
    %v3902 = vpop.f32.mrb[0].mxu0
    %v3903 = vpop.f32.mrb[0].mxu0
    %v3904 = vadd.f32 %v3696, %v3903
    %v3905 = vpop.f32.mrb[0].mxu0
    %3906 = vmatprep.mubr.bf16.mxu0 %v2724
    %3907 = vmatmul.mubr.bf16.gmra.mrb[0].mxu0 %v2723
    %v3908 = vpop.f32.mrb[0].mxu0
    %v3909 = vadd.f32 %v3701, %v3908
    %v3910 = vpop.f32.mrb[0].mxu0
    %v3911 = vpop.f32.mrb[0].mxu0
    %v3912 = vadd.f32 %v3704, %v3911
    %v3913 = vpop.f32.mrb[0].mxu0
    %3914 = vmatprep.mubr.bf16.mxu0 %v2741
    %3915 = vmatmul.mubr.bf16.gmra.mrb[0].mxu0 %v2740
    %v3916 = vpop.f32.mrb[0].mxu0
    %v3917 = vadd.f32 %v3709, %v3916
    %v3918 = vpop.f32.mrb[0].mxu0
    %v3919 = vpop.f32.mrb[0].mxu0
    %v3920 = vadd.f32 %v3712, %v3919
    %v3921 = vpop.f32.mrb[0].mxu0
    %3922 = vmatprep.mubr.bf16.mxu0 %v2758
    %3923 = vmatmul.mubr.bf16.gmra.mrb[0].mxu0 %v2757
    %v3924 = vpop.f32.mrb[0].mxu0
    %v3925 = vadd.f32 %v3717, %v3924
    %v3926 = vpop.f32.mrb[0].mxu0
    %v3927 = vpop.f32.mrb[0].mxu0
    %v3928 = vadd.f32 %v3720, %v3927
    %v3929 = vpop.f32.mrb[0].mxu0
    %3930 = vmatprep.mubr.bf16.mxu0 %v2775
    %3931 = vmatmul.mubr.bf16.gmra.mrb[0].mxu0 %v2774
    %v3932 = vpop.f32.mrb[0].mxu0
    %v3933 = vadd.f32 %v3725, %v3932
    %v3934 = vpop.f32.mrb[0].mxu0
    %v3935 = vpop.f32.mrb[0].mxu0
    %v3936 = vadd.f32 %v3728, %v3935
    %v3937 = vpop.f32.mrb[0].mxu0
    %3938 = vmatprep.mubr.bf16.mxu0 %v2792
    %3939 = vmatmul.mubr.bf16.gmra.mrb[0].mxu0 %v2791
    %v3940 = vpop.f32.mrb[0].mxu0
    %v3941 = vadd.f32 %v3733, %v3940
    %v3942 = vpop.f32.mrb[0].mxu0
    %v3943 = vpop.f32.mrb[0].mxu0
    %v3944 = vadd.f32 %v3736, %v3943
    %v3945 = vpop.f32.mrb[0].mxu0
    %3946 = vmatprep.mubr.bf16.mxu0 %v2809
    %3947 = vmatmul.mubr.bf16.gmra.mrb[0].mxu0 %v2808
    %v3948 = vpop.f32.mrb[0].mxu0
    %v3949 = vadd.f32 %v3741, %v3948
    %v3950 = vpop.f32.mrb[0].mxu0
    %v3951 = vpop.f32.mrb[0].mxu0
    %v3952 = vadd.f32 %v3744, %v3951
    %v3953 = vpop.f32.mrb[0].mxu0
    %3954 = vmatprep.mubr.bf16.mxu0 %v2826
    %3955 = vmatmul.mubr.bf16.gmra.mrb[0].mxu0 %v2825
    %v3956 = vpop.f32.mrb[0].mxu0
    %v3957 = vadd.f32 %v3749, %v3956
    %v3958 = vpop.f32.mrb[0].mxu0
    %v3959 = vpop.f32.mrb[0].mxu0
    %v3960 = vadd.f32 %v3752, %v3959
    %v3961 = vpop.f32.mrb[0].mxu0
    %3962 = vmatprep.mubr.bf16.mxu0 %v2843
    %3963 = vmatmul.mubr.bf16.gmra.mrb[0].mxu0 %v2842
    %v3964 = vpop.f32.mrb[0].mxu0
    %v3965 = vadd.f32 %v3757, %v3964
    %v3966 = vpop.f32.mrb[0].mxu0
    %v3967 = vpop.f32.mrb[0].mxu0
    %v3968 = vadd.f32 %v3760, %v3967
    %v3969 = vpop.f32.mrb[0].mxu0
    %3970 = vmatprep.mubr.bf16.mxu0 %v2860
    %3971 = vmatmul.mubr.bf16.gmra.mrb[0].mxu0 %v2859
    %v3972 = vpop.f32.mrb[0].mxu0
    %v3973 = vadd.f32 %v3765, %v3972
    %v3974 = vpop.f32.mrb[0].mxu0
    %v3975 = vpop.f32.mrb[0].mxu0
    %v3976 = vadd.f32 %v3768, %v3975
    %v3977 = vpop.f32.mrb[0].mxu0
    %3978 = vmatprep.mubr.bf16.mxu0 %v2877
    %3979 = vmatmul.mubr.bf16.gmra.mrb[0].mxu0 %v2876
    %v3980 = vpop.f32.mrb[0].mxu0
    %v3981 = vadd.f32 %v3773, %v3980
    %v3982 = vpop.f32.mrb[0].mxu0
    %v3983 = vpop.f32.mrb[0].mxu0
    %v3984 = vadd.f32 %v3776, %v3983
    %v3985 = vpop.f32.mrb[0].mxu0
    %3986 = vmatprep.mubr.bf16.mxu0 %v2894
    %3987 = vmatmul.mubr.bf16.gmra.mrb[0].mxu0 %v2893
    %v3988 = vpop.f32.mrb[0].mxu0
    %v3989 = vadd.f32 %v3781, %v3988
    %v3990 = vpop.f32.mrb[0].mxu0
    %v3991 = vpop.f32.mrb[0].mxu0
    %v3992 = vadd.f32 %v3784, %v3991
    %v3993 = vpop.f32.mrb[0].mxu0
    %3994 = vmatprep.mubr.bf16.mxu0 %v2911
    %3995 = vmatmul.mubr.bf16.gmra.mrb[0].mxu0 %v2910
    %v3996 = vpop.f32.mrb[0].mxu0
    %v3997 = vadd.f32 %v3789, %v3996
    %v3998 = vpop.f32.mrb[0].mxu0
    %v3999 = vpop.f32.mrb[0].mxu0
    %v4000 = vadd.f32 %v3792, %v3999
    %v4001 = vpop.f32.mrb[0].mxu0
    %4002 = vmatprep.mubr.bf16.mxu0 %v2928
    %4003 = vmatmul.mubr.bf16.gmra.mrb[0].mxu0 %v2927
    %v4004 = vpop.f32.mrb[0].mxu0
    %v4005 = vadd.f32 %v3797, %v4004
    %v4006 = vpop.f32.mrb[0].mxu0
    %v4007 = vpop.f32.mrb[0].mxu0
    %v4008 = vadd.f32 %v3800, %v4007
    %v4009 = vpop.f32.mrb[0].mxu0
    %4010 = vmatprep.mubr.bf16.mxu0 %v2945
    %4011 = vmatmul.mubr.bf16.gmra.mrb[0].mxu0 %v2944
    %v4012 = vpop.f32.mrb[0].mxu0
    %v4013 = vadd.f32 %v3805, %v4012
    %v4014 = vpop.f32.mrb[0].mxu0
    %v4015 = vpop.f32.mrb[0].mxu0
    %v4016 = vadd.f32 %v3808, %v4015
    %v4017 = vpop.f32.mrb[0].mxu0
    %4018 = vmatprep.mubr.bf16.mxu0 %v2962
    %4019 = vmatmul.mubr.bf16.gmra.mrb[0].mxu0 %v2961
    %v4020 = vpop.f32.mrb[0].mxu0
    %v4021 = vadd.f32 %v3813, %v4020
    %v4022 = vpop.f32.mrb[0].mxu0
    %v4023 = vpop.f32.mrb[0].mxu0
    %v4024 = vadd.f32 %v3816, %v4023
    %v4025 = vpop.f32.mrb[0].mxu0
    %4026 = vmatprep.mubr.bf16.mxu0 %v2979
    %4027 = vmatmul.mubr.bf16.gmra.mrb[0].mxu0 %v2978
    %v4028 = vpop.f32.mrb[0].mxu0
    %v4029 = vadd.f32 %v3821, %v4028
    %v4030 = vpop.f32.mrb[0].mxu0
    %v4031 = vpop.f32.mrb[0].mxu0
    %v4032 = vpop.f32.mrb[0].mxu0
    %4033 = vdwg.mxu0
    %4034 = vmatprep.subr.bf16.mxu0 0
    %4035 = vmatpush1.bf16.msra.mxu0 %v1418
    %4036 = vmatprep.subr.bf16.mxu0 0
    %4037 = vmatpush1.bf16.msra.mxu0 %v1419
    %4038 = vmatprep.subr.bf16.mxu0 0
    %4039 = vmatpush1.bf16.msra.mxu0 %v1420
    %4040 = vmatprep.subr.bf16.mxu0 0
    %4041 = vmatpush1.bf16.msra.mxu0 %v1421
    %4042 = vmatprep.subr.bf16.mxu0 0
    %4043 = vmatpush1.bf16.msra.mxu0 %v1422
    %4044 = vmatprep.subr.bf16.mxu0 0
    %4045 = vmatpush1.bf16.msra.mxu0 %v1423
    %4046 = vmatprep.subr.bf16.mxu0 0
    %4047 = vmatpush1.bf16.msra.mxu0 %v1424
    %4048 = vmatprep.subr.bf16.mxu0 0
    %4049 = vmatpush1.bf16.msra.mxu0 %v1425
    %4050 = vmatprep.subr.bf16.mxu0 0
    %4051 = vmatpush1.bf16.msra.mxu0 %v1426
    %4052 = vmatprep.subr.bf16.mxu0 0
    %4053 = vmatpush1.bf16.msra.mxu0 %v1427
    %4054 = vmatprep.subr.bf16.mxu0 0
    %4055 = vmatpush1.bf16.msra.mxu0 %v1428
    %4056 = vmatprep.subr.bf16.mxu0 0
    %4057 = vmatpush1.bf16.msra.mxu0 %v1429
    %4058 = vmatprep.subr.bf16.mxu0 0
    %4059 = vmatpush1.bf16.msra.mxu0 %v1430
    %4060 = vmatprep.subr.bf16.mxu0 0
    %4061 = vmatpush1.bf16.msra.mxu0 %v1431
    %4062 = vmatprep.subr.bf16.mxu0 0
    %4063 = vmatpush1.bf16.msra.mxu0 %v1432
    %4064 = vmatprep.subr.bf16.mxu0 0
    %4065 = vmatpush1.bf16.msra.mxu0 %v1433
    %4066 = vmatprep.mubr.bf16.mxu0 %v2624
    %4067 = vmatmul.mubr.bf16.gmra.mrb[0].mxu0 %v2623
    %v4068 = vpop.f32.mrb[0].mxu0
    %v4069 = vadd.f32 %v3861, %v4068
    %v4070 = vpop.f32.mrb[0].mxu0
    %v4071 = vpop.f32.mrb[0].mxu0
    %v4072 = vadd.f32 %v3864, %v4071
    %v4073 = vpop.f32.mrb[0].mxu0
    %4074 = vmatprep.mubr.bf16.mxu0 %v2641
    %4075 = vmatmul.mubr.bf16.gmra.mrb[0].mxu0 %v2640
    %v4076 = vpop.f32.mrb[0].mxu0
    %v4077 = vadd.f32 %v3869, %v4076
    %v4078 = vpop.f32.mrb[0].mxu0
    %v4079 = vpop.f32.mrb[0].mxu0
    %v4080 = vadd.f32 %v3872, %v4079
    %v4081 = vpop.f32.mrb[0].mxu0
    %4082 = vmatprep.mubr.bf16.mxu0 %v2658
    %4083 = vmatmul.mubr.bf16.gmra.mrb[0].mxu0 %v2657
    %v4084 = vpop.f32.mrb[0].mxu0
    %v4085 = vadd.f32 %v3877, %v4084
    %v4086 = vpop.f32.mrb[0].mxu0
    %v4087 = vpop.f32.mrb[0].mxu0
    %v4088 = vadd.f32 %v3880, %v4087
    %v4089 = vpop.f32.mrb[0].mxu0
    %4090 = vmatprep.mubr.bf16.mxu0 %v2675
    %4091 = vmatmul.mubr.bf16.gmra.mrb[0].mxu0 %v2674
    %v4092 = vpop.f32.mrb[0].mxu0
    %v4093 = vadd.f32 %v3885, %v4092
    %v4094 = vpop.f32.mrb[0].mxu0
    %v4095 = vpop.f32.mrb[0].mxu0
    %v4096 = vadd.f32 %v3888, %v4095
    %v4097 = vpop.f32.mrb[0].mxu0
    %4098 = vmatprep.mubr.bf16.mxu0 %v2692
    %4099 = vmatmul.mubr.bf16.gmra.mrb[0].mxu0 %v2691
    %v4100 = vpop.f32.mrb[0].mxu0
    %v4101 = vadd.f32 %v3893, %v4100
    %v4102 = vpop.f32.mrb[0].mxu0
    %v4103 = vpop.f32.mrb[0].mxu0
    %v4104 = vadd.f32 %v3896, %v4103
    %v4105 = vpop.f32.mrb[0].mxu0
    %4106 = vmatprep.mubr.bf16.mxu0 %v2709
    %4107 = vmatmul.mubr.bf16.gmra.mrb[0].mxu0 %v2708
    %v4108 = vpop.f32.mrb[0].mxu0
    %v4109 = vadd.f32 %v3901, %v4108
    %v4110 = vpop.f32.mrb[0].mxu0
    %v4111 = vpop.f32.mrb[0].mxu0
    %v4112 = vadd.f32 %v3904, %v4111
    %v4113 = vpop.f32.mrb[0].mxu0
    %4114 = vmatprep.mubr.bf16.mxu0 %v2726
    %4115 = vmatmul.mubr.bf16.gmra.mrb[0].mxu0 %v2725
    %v4116 = vpop.f32.mrb[0].mxu0
    %v4117 = vadd.f32 %v3909, %v4116
    %v4118 = vpop.f32.mrb[0].mxu0
    %v4119 = vpop.f32.mrb[0].mxu0
    %v4120 = vadd.f32 %v3912, %v4119
    %v4121 = vpop.f32.mrb[0].mxu0
    %4122 = vmatprep.mubr.bf16.mxu0 %v2743
    %4123 = vmatmul.mubr.bf16.gmra.mrb[0].mxu0 %v2742
    %v4124 = vpop.f32.mrb[0].mxu0
    %v4125 = vadd.f32 %v3917, %v4124
    %v4126 = vpop.f32.mrb[0].mxu0
    %v4127 = vpop.f32.mrb[0].mxu0
    %v4128 = vadd.f32 %v3920, %v4127
    %v4129 = vpop.f32.mrb[0].mxu0
    %4130 = vmatprep.mubr.bf16.mxu0 %v2760
    %4131 = vmatmul.mubr.bf16.gmra.mrb[0].mxu0 %v2759
    %v4132 = vpop.f32.mrb[0].mxu0
    %v4133 = vadd.f32 %v3925, %v4132
    %v4134 = vpop.f32.mrb[0].mxu0
    %v4135 = vpop.f32.mrb[0].mxu0
    %v4136 = vadd.f32 %v3928, %v4135
    %v4137 = vpop.f32.mrb[0].mxu0
    %4138 = vmatprep.mubr.bf16.mxu0 %v2777
    %4139 = vmatmul.mubr.bf16.gmra.mrb[0].mxu0 %v2776
    %v4140 = vpop.f32.mrb[0].mxu0
    %v4141 = vadd.f32 %v3933, %v4140
    %v4142 = vpop.f32.mrb[0].mxu0
    %v4143 = vpop.f32.mrb[0].mxu0
    %v4144 = vadd.f32 %v3936, %v4143
    %v4145 = vpop.f32.mrb[0].mxu0
    %4146 = vmatprep.mubr.bf16.mxu0 %v2794
    %4147 = vmatmul.mubr.bf16.gmra.mrb[0].mxu0 %v2793
    %v4148 = vpop.f32.mrb[0].mxu0
    %v4149 = vadd.f32 %v3941, %v4148
    %v4150 = vpop.f32.mrb[0].mxu0
    %v4151 = vpop.f32.mrb[0].mxu0
    %v4152 = vadd.f32 %v3944, %v4151
    %v4153 = vpop.f32.mrb[0].mxu0
    %4154 = vmatprep.mubr.bf16.mxu0 %v2811
    %4155 = vmatmul.mubr.bf16.gmra.mrb[0].mxu0 %v2810
    %v4156 = vpop.f32.mrb[0].mxu0
    %v4157 = vadd.f32 %v3949, %v4156
    %v4158 = vpop.f32.mrb[0].mxu0
    %v4159 = vpop.f32.mrb[0].mxu0
    %v4160 = vadd.f32 %v3952, %v4159
    %v4161 = vpop.f32.mrb[0].mxu0
    %4162 = vmatprep.mubr.bf16.mxu0 %v2828
    %4163 = vmatmul.mubr.bf16.gmra.mrb[0].mxu0 %v2827
    %v4164 = vpop.f32.mrb[0].mxu0
    %v4165 = vadd.f32 %v3957, %v4164
    %v4166 = vpop.f32.mrb[0].mxu0
    %v4167 = vpop.f32.mrb[0].mxu0
    %v4168 = vadd.f32 %v3960, %v4167
    %v4169 = vpop.f32.mrb[0].mxu0
    %4170 = vmatprep.mubr.bf16.mxu0 %v2845
    %4171 = vmatmul.mubr.bf16.gmra.mrb[0].mxu0 %v2844
    %v4172 = vpop.f32.mrb[0].mxu0
    %v4173 = vadd.f32 %v3965, %v4172
    %v4174 = vpop.f32.mrb[0].mxu0
    %v4175 = vpop.f32.mrb[0].mxu0
    %v4176 = vadd.f32 %v3968, %v4175
    %v4177 = vpop.f32.mrb[0].mxu0
    %4178 = vmatprep.mubr.bf16.mxu0 %v2862
    %4179 = vmatmul.mubr.bf16.gmra.mrb[0].mxu0 %v2861
    %v4180 = vpop.f32.mrb[0].mxu0
    %v4181 = vadd.f32 %v3973, %v4180
    %v4182 = vpop.f32.mrb[0].mxu0
    %v4183 = vpop.f32.mrb[0].mxu0
    %v4184 = vadd.f32 %v3976, %v4183
    %v4185 = vpop.f32.mrb[0].mxu0
    %4186 = vmatprep.mubr.bf16.mxu0 %v2879
    %4187 = vmatmul.mubr.bf16.gmra.mrb[0].mxu0 %v2878
    %v4188 = vpop.f32.mrb[0].mxu0
    %v4189 = vadd.f32 %v3981, %v4188
    %v4190 = vpop.f32.mrb[0].mxu0
    %v4191 = vpop.f32.mrb[0].mxu0
    %v4192 = vadd.f32 %v3984, %v4191
    %v4193 = vpop.f32.mrb[0].mxu0
    %4194 = vmatprep.mubr.bf16.mxu0 %v2896
    %4195 = vmatmul.mubr.bf16.gmra.mrb[0].mxu0 %v2895
    %v4196 = vpop.f32.mrb[0].mxu0
    %v4197 = vadd.f32 %v3989, %v4196
    %v4198 = vpop.f32.mrb[0].mxu0
    %v4199 = vpop.f32.mrb[0].mxu0
    %v4200 = vadd.f32 %v3992, %v4199
    %v4201 = vpop.f32.mrb[0].mxu0
    %4202 = vmatprep.mubr.bf16.mxu0 %v2913
    %4203 = vmatmul.mubr.bf16.gmra.mrb[0].mxu0 %v2912
    %v4204 = vpop.f32.mrb[0].mxu0
    %v4205 = vadd.f32 %v3997, %v4204
    %v4206 = vpop.f32.mrb[0].mxu0
    %v4207 = vpop.f32.mrb[0].mxu0
    %v4208 = vadd.f32 %v4000, %v4207
    %v4209 = vpop.f32.mrb[0].mxu0
    %4210 = vmatprep.mubr.bf16.mxu0 %v2930
    %4211 = vmatmul.mubr.bf16.gmra.mrb[0].mxu0 %v2929
    %v4212 = vpop.f32.mrb[0].mxu0
    %v4213 = vadd.f32 %v4005, %v4212
    %v4214 = vpop.f32.mrb[0].mxu0
    %v4215 = vpop.f32.mrb[0].mxu0
    %v4216 = vadd.f32 %v4008, %v4215
    %v4217 = vpop.f32.mrb[0].mxu0
    %4218 = vmatprep.mubr.bf16.mxu0 %v2947
    %4219 = vmatmul.mubr.bf16.gmra.mrb[0].mxu0 %v2946
    %v4220 = vpop.f32.mrb[0].mxu0
    %v4221 = vadd.f32 %v4013, %v4220
    %v4222 = vpop.f32.mrb[0].mxu0
    %v4223 = vpop.f32.mrb[0].mxu0
    %v4224 = vadd.f32 %v4016, %v4223
    %v4225 = vpop.f32.mrb[0].mxu0
    %4226 = vmatprep.mubr.bf16.mxu0 %v2964
    %4227 = vmatmul.mubr.bf16.gmra.mrb[0].mxu0 %v2963
    %v4228 = vpop.f32.mrb[0].mxu0
    %v4229 = vadd.f32 %v4021, %v4228
    %v4230 = vpop.f32.mrb[0].mxu0
    %v4231 = vpop.f32.mrb[0].mxu0
    %v4232 = vadd.f32 %v4024, %v4231
    %v4233 = vpop.f32.mrb[0].mxu0
    %4234 = vmatprep.mubr.bf16.mxu0 %v2981
    %4235 = vmatmul.mubr.bf16.gmra.mrb[0].mxu0 %v2980
    %v4236 = vpop.f32.mrb[0].mxu0
    %v4237 = vadd.f32 %v4029, %v4236
    %v4238 = vpop.f32.mrb[0].mxu0
    %v4239 = vpop.f32.mrb[0].mxu0
    %v4240 = vpop.f32.mrb[0].mxu0
    %4241 = vdwg.mxu0
    %4242 = vmatprep.subr.bf16.mxu0 0
    %4243 = vmatpush1.bf16.msra.mxu0 %v1434
    %4244 = vmatprep.subr.bf16.mxu0 0
    %4245 = vmatpush1.bf16.msra.mxu0 %v1435
    %4246 = vmatprep.subr.bf16.mxu0 0
    %4247 = vmatpush1.bf16.msra.mxu0 %v1436
    %4248 = vmatprep.subr.bf16.mxu0 0
    %4249 = vmatpush1.bf16.msra.mxu0 %v1437
    %4250 = vmatprep.subr.bf16.mxu0 0
    %4251 = vmatpush1.bf16.msra.mxu0 %v1438
    %4252 = vmatprep.subr.bf16.mxu0 0
    %4253 = vmatpush1.bf16.msra.mxu0 %v1439
    %4254 = vmatprep.subr.bf16.mxu0 0
    %4255 = vmatpush1.bf16.msra.mxu0 %v1440
    %4256 = vmatprep.subr.bf16.mxu0 0
    %4257 = vmatpush1.bf16.msra.mxu0 %v1441
    %4258 = vmatprep.subr.bf16.mxu0 0
    %4259 = vmatpush1.bf16.msra.mxu0 %v1442
    %4260 = vmatprep.subr.bf16.mxu0 0
    %4261 = vmatpush1.bf16.msra.mxu0 %v1443
    %4262 = vmatprep.subr.bf16.mxu0 0
    %4263 = vmatpush1.bf16.msra.mxu0 %v1444
    %4264 = vmatprep.subr.bf16.mxu0 0
    %4265 = vmatpush1.bf16.msra.mxu0 %v1445
    %4266 = vmatprep.subr.bf16.mxu0 0
    %4267 = vmatpush1.bf16.msra.mxu0 %v1446
    %4268 = vmatprep.subr.bf16.mxu0 0
    %4269 = vmatpush1.bf16.msra.mxu0 %v1447
    %4270 = vmatprep.subr.bf16.mxu0 0
    %4271 = vmatpush1.bf16.msra.mxu0 %v1448
    %4272 = vmatprep.subr.bf16.mxu0 0
    %4273 = vmatpush1.bf16.msra.mxu0 %v1449
    %4274 = vmatprep.mubr.bf16.mxu0 %v2626
    %4275 = vmatmul.mubr.bf16.gmra.mrb[0].mxu0 %v2625
    %v4276 = vpop.f32.mrb[0].mxu0
    %v4277 = vadd.f32 %v4069, %v4276
    %v4278 = vpop.f32.mrb[0].mxu0
    %v4279 = vpop.f32.mrb[0].mxu0
    %v4280 = vadd.f32 %v4072, %v4279
    %v4281 = vpop.f32.mrb[0].mxu0
    %4282 = vmatprep.mubr.bf16.mxu0 %v2643
    %4283 = vmatmul.mubr.bf16.gmra.mrb[0].mxu0 %v2642
    %v4284 = vpop.f32.mrb[0].mxu0
    %v4285 = vadd.f32 %v4077, %v4284
    %v4286 = vpop.f32.mrb[0].mxu0
    %v4287 = vpop.f32.mrb[0].mxu0
    %v4288 = vadd.f32 %v4080, %v4287
    %v4289 = vpop.f32.mrb[0].mxu0
    %4290 = vmatprep.mubr.bf16.mxu0 %v2660
    %4291 = vmatmul.mubr.bf16.gmra.mrb[0].mxu0 %v2659
    %v4292 = vpop.f32.mrb[0].mxu0
    %v4293 = vadd.f32 %v4085, %v4292
    %v4294 = vpop.f32.mrb[0].mxu0
    %v4295 = vpop.f32.mrb[0].mxu0
    %v4296 = vadd.f32 %v4088, %v4295
    %v4297 = vpop.f32.mrb[0].mxu0
    %4298 = vmatprep.mubr.bf16.mxu0 %v2677
    %4299 = vmatmul.mubr.bf16.gmra.mrb[0].mxu0 %v2676
    %v4300 = vpop.f32.mrb[0].mxu0
    %v4301 = vadd.f32 %v4093, %v4300
    %v4302 = vpop.f32.mrb[0].mxu0
    %v4303 = vpop.f32.mrb[0].mxu0
    %v4304 = vadd.f32 %v4096, %v4303
    %v4305 = vpop.f32.mrb[0].mxu0
    %4306 = vmatprep.mubr.bf16.mxu0 %v2694
    %4307 = vmatmul.mubr.bf16.gmra.mrb[0].mxu0 %v2693
    %v4308 = vpop.f32.mrb[0].mxu0
    %v4309 = vadd.f32 %v4101, %v4308
    %v4310 = vpop.f32.mrb[0].mxu0
    %v4311 = vpop.f32.mrb[0].mxu0
    %v4312 = vadd.f32 %v4104, %v4311
    %v4313 = vpop.f32.mrb[0].mxu0
    %4314 = vmatprep.mubr.bf16.mxu0 %v2711
    %4315 = vmatmul.mubr.bf16.gmra.mrb[0].mxu0 %v2710
    %v4316 = vpop.f32.mrb[0].mxu0
    %v4317 = vadd.f32 %v4109, %v4316
    %v4318 = vpop.f32.mrb[0].mxu0
    %v4319 = vpop.f32.mrb[0].mxu0
    %v4320 = vadd.f32 %v4112, %v4319
    %v4321 = vpop.f32.mrb[0].mxu0
    %4322 = vmatprep.mubr.bf16.mxu0 %v2728
    %4323 = vmatmul.mubr.bf16.gmra.mrb[0].mxu0 %v2727
    %v4324 = vpop.f32.mrb[0].mxu0
    %v4325 = vadd.f32 %v4117, %v4324
    %v4326 = vpop.f32.mrb[0].mxu0
    %v4327 = vpop.f32.mrb[0].mxu0
    %v4328 = vadd.f32 %v4120, %v4327
    %v4329 = vpop.f32.mrb[0].mxu0
    %4330 = vmatprep.mubr.bf16.mxu0 %v2745
    %4331 = vmatmul.mubr.bf16.gmra.mrb[0].mxu0 %v2744
    %v4332 = vpop.f32.mrb[0].mxu0
    %v4333 = vadd.f32 %v4125, %v4332
    %v4334 = vpop.f32.mrb[0].mxu0
    %v4335 = vpop.f32.mrb[0].mxu0
    %v4336 = vadd.f32 %v4128, %v4335
    %v4337 = vpop.f32.mrb[0].mxu0
    %4338 = vmatprep.mubr.bf16.mxu0 %v2762
    %4339 = vmatmul.mubr.bf16.gmra.mrb[0].mxu0 %v2761
    %v4340 = vpop.f32.mrb[0].mxu0
    %v4341 = vadd.f32 %v4133, %v4340
    %v4342 = vpop.f32.mrb[0].mxu0
    %v4343 = vpop.f32.mrb[0].mxu0
    %v4344 = vadd.f32 %v4136, %v4343
    %v4345 = vpop.f32.mrb[0].mxu0
    %4346 = vmatprep.mubr.bf16.mxu0 %v2779
    %4347 = vmatmul.mubr.bf16.gmra.mrb[0].mxu0 %v2778
    %v4348 = vpop.f32.mrb[0].mxu0
    %v4349 = vadd.f32 %v4141, %v4348
    %v4350 = vpop.f32.mrb[0].mxu0
    %v4351 = vpop.f32.mrb[0].mxu0
    %v4352 = vadd.f32 %v4144, %v4351
    %v4353 = vpop.f32.mrb[0].mxu0
    %4354 = vmatprep.mubr.bf16.mxu0 %v2796
    %4355 = vmatmul.mubr.bf16.gmra.mrb[0].mxu0 %v2795
    %v4356 = vpop.f32.mrb[0].mxu0
    %v4357 = vadd.f32 %v4149, %v4356
    %v4358 = vpop.f32.mrb[0].mxu0
    %v4359 = vpop.f32.mrb[0].mxu0
    %v4360 = vadd.f32 %v4152, %v4359
    %v4361 = vpop.f32.mrb[0].mxu0
    %4362 = vmatprep.mubr.bf16.mxu0 %v2813
    %4363 = vmatmul.mubr.bf16.gmra.mrb[0].mxu0 %v2812
    %v4364 = vpop.f32.mrb[0].mxu0
    %v4365 = vadd.f32 %v4157, %v4364
    %v4366 = vpop.f32.mrb[0].mxu0
    %v4367 = vpop.f32.mrb[0].mxu0
    %v4368 = vadd.f32 %v4160, %v4367
    %v4369 = vpop.f32.mrb[0].mxu0
    %4370 = vmatprep.mubr.bf16.mxu0 %v2830
    %4371 = vmatmul.mubr.bf16.gmra.mrb[0].mxu0 %v2829
    %v4372 = vpop.f32.mrb[0].mxu0
    %v4373 = vadd.f32 %v4165, %v4372
    %v4374 = vpop.f32.mrb[0].mxu0
    %v4375 = vpop.f32.mrb[0].mxu0
    %v4376 = vadd.f32 %v4168, %v4375
    %v4377 = vpop.f32.mrb[0].mxu0
    %4378 = vmatprep.mubr.bf16.mxu0 %v2847
    %4379 = vmatmul.mubr.bf16.gmra.mrb[0].mxu0 %v2846
    %v4380 = vpop.f32.mrb[0].mxu0
    %v4381 = vadd.f32 %v4173, %v4380
    %v4382 = vpop.f32.mrb[0].mxu0
    %v4383 = vpop.f32.mrb[0].mxu0
    %v4384 = vadd.f32 %v4176, %v4383
    %v4385 = vpop.f32.mrb[0].mxu0
    %4386 = vmatprep.mubr.bf16.mxu0 %v2864
    %4387 = vmatmul.mubr.bf16.gmra.mrb[0].mxu0 %v2863
    %v4388 = vpop.f32.mrb[0].mxu0
    %v4389 = vadd.f32 %v4181, %v4388
    %v4390 = vpop.f32.mrb[0].mxu0
    %v4391 = vpop.f32.mrb[0].mxu0
    %v4392 = vadd.f32 %v4184, %v4391
    %v4393 = vpop.f32.mrb[0].mxu0
    %4394 = vmatprep.mubr.bf16.mxu0 %v2881
    %4395 = vmatmul.mubr.bf16.gmra.mrb[0].mxu0 %v2880
    %v4396 = vpop.f32.mrb[0].mxu0
    %v4397 = vadd.f32 %v4189, %v4396
    %v4398 = vpop.f32.mrb[0].mxu0
    %v4399 = vpop.f32.mrb[0].mxu0
    %v4400 = vadd.f32 %v4192, %v4399
    %v4401 = vpop.f32.mrb[0].mxu0
    %4402 = vmatprep.mubr.bf16.mxu0 %v2898
    %4403 = vmatmul.mubr.bf16.gmra.mrb[0].mxu0 %v2897
    %v4404 = vpop.f32.mrb[0].mxu0
    %v4405 = vadd.f32 %v4197, %v4404
    %v4406 = vpop.f32.mrb[0].mxu0
    %v4407 = vpop.f32.mrb[0].mxu0
    %v4408 = vadd.f32 %v4200, %v4407
    %v4409 = vpop.f32.mrb[0].mxu0
    %4410 = vmatprep.mubr.bf16.mxu0 %v2915
    %4411 = vmatmul.mubr.bf16.gmra.mrb[0].mxu0 %v2914
    %v4412 = vpop.f32.mrb[0].mxu0
    %v4413 = vadd.f32 %v4205, %v4412
    %v4414 = vpop.f32.mrb[0].mxu0
    %v4415 = vpop.f32.mrb[0].mxu0
    %v4416 = vadd.f32 %v4208, %v4415
    %v4417 = vpop.f32.mrb[0].mxu0
    %4418 = vmatprep.mubr.bf16.mxu0 %v2932
    %4419 = vmatmul.mubr.bf16.gmra.mrb[0].mxu0 %v2931
    %v4420 = vpop.f32.mrb[0].mxu0
    %v4421 = vadd.f32 %v4213, %v4420
    %v4422 = vpop.f32.mrb[0].mxu0
    %v4423 = vpop.f32.mrb[0].mxu0
    %v4424 = vadd.f32 %v4216, %v4423
    %v4425 = vpop.f32.mrb[0].mxu0
    %4426 = vmatprep.mubr.bf16.mxu0 %v2949
    %4427 = vmatmul.mubr.bf16.gmra.mrb[0].mxu0 %v2948
    %v4428 = vpop.f32.mrb[0].mxu0
    %v4429 = vadd.f32 %v4221, %v4428
    %v4430 = vpop.f32.mrb[0].mxu0
    %v4431 = vpop.f32.mrb[0].mxu0
    %v4432 = vadd.f32 %v4224, %v4431
    %v4433 = vpop.f32.mrb[0].mxu0
    %4434 = vmatprep.mubr.bf16.mxu0 %v2966
    %4435 = vmatmul.mubr.bf16.gmra.mrb[0].mxu0 %v2965
    %v4436 = vpop.f32.mrb[0].mxu0
    %v4437 = vadd.f32 %v4229, %v4436
    %v4438 = vpop.f32.mrb[0].mxu0
    %v4439 = vpop.f32.mrb[0].mxu0
    %v4440 = vadd.f32 %v4232, %v4439
    %v4441 = vpop.f32.mrb[0].mxu0
    %4442 = vmatprep.mubr.bf16.mxu0 %v2983
    %4443 = vmatmul.mubr.bf16.gmra.mrb[0].mxu0 %v2982
    %v4444 = vpop.f32.mrb[0].mxu0
    %v4445 = vadd.f32 %v4237, %v4444
    %v4446 = vpop.f32.mrb[0].mxu0
    %v4447 = vpop.f32.mrb[0].mxu0
    %v4448 = vpop.f32.mrb[0].mxu0
    %4449 = vdwg.mxu0
    %4450 = vmatprep.subr.bf16.mxu0 0
    %4451 = vmatpush1.bf16.msra.mxu0 %v1450
    %4452 = vmatprep.subr.bf16.mxu0 0
    %4453 = vmatpush1.bf16.msra.mxu0 %v1451
    %4454 = vmatprep.subr.bf16.mxu0 0
    %4455 = vmatpush1.bf16.msra.mxu0 %v1452
    %4456 = vmatprep.subr.bf16.mxu0 0
    %4457 = vmatpush1.bf16.msra.mxu0 %v1453
    %4458 = vmatprep.subr.bf16.mxu0 0
    %4459 = vmatpush1.bf16.msra.mxu0 %v1454
    %4460 = vmatprep.subr.bf16.mxu0 0
    %4461 = vmatpush1.bf16.msra.mxu0 %v1455
    %4462 = vmatprep.subr.bf16.mxu0 0
    %4463 = vmatpush1.bf16.msra.mxu0 %v1456
    %4464 = vmatprep.subr.bf16.mxu0 0
    %4465 = vmatpush1.bf16.msra.mxu0 %v1457
    %4466 = vmatprep.subr.bf16.mxu0 0
    %4467 = vmatpush1.bf16.msra.mxu0 %v1458
    %4468 = vmatprep.subr.bf16.mxu0 0
    %4469 = vmatpush1.bf16.msra.mxu0 %v1459
    %4470 = vmatprep.subr.bf16.mxu0 0
    %4471 = vmatpush1.bf16.msra.mxu0 %v1460
    %4472 = vmatprep.subr.bf16.mxu0 0
    %4473 = vmatpush1.bf16.msra.mxu0 %v1461
    %4474 = vmatprep.subr.bf16.mxu0 0
    %4475 = vmatpush1.bf16.msra.mxu0 %v1462
    %4476 = vmatprep.subr.bf16.mxu0 0
    %4477 = vmatpush1.bf16.msra.mxu0 %v1463
    %4478 = vmatprep.subr.bf16.mxu0 0
    %4479 = vmatpush1.bf16.msra.mxu0 %v1464
    %4480 = vmatprep.subr.bf16.mxu0 0
    %4481 = vmatpush1.bf16.msra.mxu0 %v1465
    %4482 = vmatprep.mubr.bf16.mxu0 %v2628
    %4483 = vmatmul.mubr.bf16.gmra.mrb[0].mxu0 %v2627
    %v4484 = vpop.f32.mrb[0].mxu0
    %v4485 = vadd.f32 %v4277, %v4484
    %v4486 = vpop.f32.mrb[0].mxu0
    %v4487 = vpop.f32.mrb[0].mxu0
    %v4488 = vadd.f32 %v4280, %v4487
    %v4489 = vpop.f32.mrb[0].mxu0
    %4490 = vmatprep.mubr.bf16.mxu0 %v2645
    %4491 = vmatmul.mubr.bf16.gmra.mrb[0].mxu0 %v2644
    %v4492 = vpop.f32.mrb[0].mxu0
    %v4493 = vadd.f32 %v4285, %v4492
    %v4494 = vpop.f32.mrb[0].mxu0
    %v4495 = vpop.f32.mrb[0].mxu0
    %v4496 = vadd.f32 %v4288, %v4495
    %v4497 = vpop.f32.mrb[0].mxu0
    %4498 = vmatprep.mubr.bf16.mxu0 %v2662
    %4499 = vmatmul.mubr.bf16.gmra.mrb[0].mxu0 %v2661
    %v4500 = vpop.f32.mrb[0].mxu0
    %v4501 = vadd.f32 %v4293, %v4500
    %v4502 = vpop.f32.mrb[0].mxu0
    %v4503 = vpop.f32.mrb[0].mxu0
    %v4504 = vadd.f32 %v4296, %v4503
    %v4505 = vpop.f32.mrb[0].mxu0
    %4506 = vmatprep.mubr.bf16.mxu0 %v2679
    %4507 = vmatmul.mubr.bf16.gmra.mrb[0].mxu0 %v2678
    %v4508 = vpop.f32.mrb[0].mxu0
    %v4509 = vadd.f32 %v4301, %v4508
    %v4510 = vpop.f32.mrb[0].mxu0
    %v4511 = vpop.f32.mrb[0].mxu0
    %v4512 = vadd.f32 %v4304, %v4511
    %v4513 = vpop.f32.mrb[0].mxu0
    %4514 = vmatprep.mubr.bf16.mxu0 %v2696
    %4515 = vmatmul.mubr.bf16.gmra.mrb[0].mxu0 %v2695
    %v4516 = vpop.f32.mrb[0].mxu0
    %v4517 = vadd.f32 %v4309, %v4516
    %v4518 = vpop.f32.mrb[0].mxu0
    %v4519 = vpop.f32.mrb[0].mxu0
    %v4520 = vadd.f32 %v4312, %v4519
    %v4521 = vpop.f32.mrb[0].mxu0
    %4522 = vmatprep.mubr.bf16.mxu0 %v2713
    %4523 = vmatmul.mubr.bf16.gmra.mrb[0].mxu0 %v2712
    %v4524 = vpop.f32.mrb[0].mxu0
    %v4525 = vadd.f32 %v4317, %v4524
    %v4526 = vpop.f32.mrb[0].mxu0
    %v4527 = vpop.f32.mrb[0].mxu0
    %v4528 = vadd.f32 %v4320, %v4527
    %v4529 = vpop.f32.mrb[0].mxu0
    %4530 = vmatprep.mubr.bf16.mxu0 %v2730
    %4531 = vmatmul.mubr.bf16.gmra.mrb[0].mxu0 %v2729
    %v4532 = vpop.f32.mrb[0].mxu0
    %v4533 = vadd.f32 %v4325, %v4532
    %v4534 = vpop.f32.mrb[0].mxu0
    %v4535 = vpop.f32.mrb[0].mxu0
    %v4536 = vadd.f32 %v4328, %v4535
    %v4537 = vpop.f32.mrb[0].mxu0
    %4538 = vmatprep.mubr.bf16.mxu0 %v2747
    %4539 = vmatmul.mubr.bf16.gmra.mrb[0].mxu0 %v2746
    %v4540 = vpop.f32.mrb[0].mxu0
    %v4541 = vadd.f32 %v4333, %v4540
    %v4542 = vpop.f32.mrb[0].mxu0
    %v4543 = vpop.f32.mrb[0].mxu0
    %v4544 = vadd.f32 %v4336, %v4543
    %v4545 = vpop.f32.mrb[0].mxu0
    %4546 = vmatprep.mubr.bf16.mxu0 %v2764
    %4547 = vmatmul.mubr.bf16.gmra.mrb[0].mxu0 %v2763
    %v4548 = vpop.f32.mrb[0].mxu0
    %v4549 = vadd.f32 %v4341, %v4548
    %v4550 = vpop.f32.mrb[0].mxu0
    %v4551 = vpop.f32.mrb[0].mxu0
    %v4552 = vadd.f32 %v4344, %v4551
    %v4553 = vpop.f32.mrb[0].mxu0
    %4554 = vmatprep.mubr.bf16.mxu0 %v2781
    %4555 = vmatmul.mubr.bf16.gmra.mrb[0].mxu0 %v2780
    %v4556 = vpop.f32.mrb[0].mxu0
    %v4557 = vadd.f32 %v4349, %v4556
    %v4558 = vpop.f32.mrb[0].mxu0
    %v4559 = vpop.f32.mrb[0].mxu0
    %v4560 = vadd.f32 %v4352, %v4559
    %v4561 = vpop.f32.mrb[0].mxu0
    %4562 = vmatprep.mubr.bf16.mxu0 %v2798
    %4563 = vmatmul.mubr.bf16.gmra.mrb[0].mxu0 %v2797
    %v4564 = vpop.f32.mrb[0].mxu0
    %v4565 = vadd.f32 %v4357, %v4564
    %v4566 = vpop.f32.mrb[0].mxu0
    %v4567 = vpop.f32.mrb[0].mxu0
    %v4568 = vadd.f32 %v4360, %v4567
    %v4569 = vpop.f32.mrb[0].mxu0
    %4570 = vmatprep.mubr.bf16.mxu0 %v2815
    %4571 = vmatmul.mubr.bf16.gmra.mrb[0].mxu0 %v2814
    %v4572 = vpop.f32.mrb[0].mxu0
    %v4573 = vadd.f32 %v4365, %v4572
    %v4574 = vpop.f32.mrb[0].mxu0
    %v4575 = vpop.f32.mrb[0].mxu0
    %v4576 = vadd.f32 %v4368, %v4575
    %v4577 = vpop.f32.mrb[0].mxu0
    %4578 = vmatprep.mubr.bf16.mxu0 %v2832
    %4579 = vmatmul.mubr.bf16.gmra.mrb[0].mxu0 %v2831
    %v4580 = vpop.f32.mrb[0].mxu0
    %v4581 = vadd.f32 %v4373, %v4580
    %v4582 = vpop.f32.mrb[0].mxu0
    %v4583 = vpop.f32.mrb[0].mxu0
    %v4584 = vadd.f32 %v4376, %v4583
    %v4585 = vpop.f32.mrb[0].mxu0
    %4586 = vmatprep.mubr.bf16.mxu0 %v2849
    %4587 = vmatmul.mubr.bf16.gmra.mrb[0].mxu0 %v2848
    %v4588 = vpop.f32.mrb[0].mxu0
    %v4589 = vadd.f32 %v4381, %v4588
    %v4590 = vpop.f32.mrb[0].mxu0
    %v4591 = vpop.f32.mrb[0].mxu0
    %v4592 = vadd.f32 %v4384, %v4591
    %v4593 = vpop.f32.mrb[0].mxu0
    %4594 = vmatprep.mubr.bf16.mxu0 %v2866
    %4595 = vmatmul.mubr.bf16.gmra.mrb[0].mxu0 %v2865
    %v4596 = vpop.f32.mrb[0].mxu0
    %v4597 = vadd.f32 %v4389, %v4596
    %v4598 = vpop.f32.mrb[0].mxu0
    %v4599 = vpop.f32.mrb[0].mxu0
    %v4600 = vadd.f32 %v4392, %v4599
    %v4601 = vpop.f32.mrb[0].mxu0
    %4602 = vmatprep.mubr.bf16.mxu0 %v2883
    %4603 = vmatmul.mubr.bf16.gmra.mrb[0].mxu0 %v2882
    %v4604 = vpop.f32.mrb[0].mxu0
    %v4605 = vadd.f32 %v4397, %v4604
    %v4606 = vpop.f32.mrb[0].mxu0
    %v4607 = vpop.f32.mrb[0].mxu0
    %v4608 = vadd.f32 %v4400, %v4607
    %v4609 = vpop.f32.mrb[0].mxu0
    %4610 = vmatprep.mubr.bf16.mxu0 %v2900
    %4611 = vmatmul.mubr.bf16.gmra.mrb[0].mxu0 %v2899
    %v4612 = vpop.f32.mrb[0].mxu0
    %v4613 = vadd.f32 %v4405, %v4612
    %v4614 = vpop.f32.mrb[0].mxu0
    %v4615 = vpop.f32.mrb[0].mxu0
    %v4616 = vadd.f32 %v4408, %v4615
    %v4617 = vpop.f32.mrb[0].mxu0
    %4618 = vmatprep.mubr.bf16.mxu0 %v2917
    %4619 = vmatmul.mubr.bf16.gmra.mrb[0].mxu0 %v2916
    %v4620 = vpop.f32.mrb[0].mxu0
    %v4621 = vadd.f32 %v4413, %v4620
    %v4622 = vpop.f32.mrb[0].mxu0
    %v4623 = vpop.f32.mrb[0].mxu0
    %v4624 = vadd.f32 %v4416, %v4623
    %v4625 = vpop.f32.mrb[0].mxu0
    %4626 = vmatprep.mubr.bf16.mxu0 %v2934
    %4627 = vmatmul.mubr.bf16.gmra.mrb[0].mxu0 %v2933
    %v4628 = vpop.f32.mrb[0].mxu0
    %v4629 = vadd.f32 %v4421, %v4628
    %v4630 = vpop.f32.mrb[0].mxu0
    %v4631 = vpop.f32.mrb[0].mxu0
    %v4632 = vadd.f32 %v4424, %v4631
    %v4633 = vpop.f32.mrb[0].mxu0
    %4634 = vmatprep.mubr.bf16.mxu0 %v2951
    %4635 = vmatmul.mubr.bf16.gmra.mrb[0].mxu0 %v2950
    %v4636 = vpop.f32.mrb[0].mxu0
    %v4637 = vadd.f32 %v4429, %v4636
    %v4638 = vpop.f32.mrb[0].mxu0
    %v4639 = vpop.f32.mrb[0].mxu0
    %v4640 = vadd.f32 %v4432, %v4639
    %v4641 = vpop.f32.mrb[0].mxu0
    %4642 = vmatprep.mubr.bf16.mxu0 %v2968
    %4643 = vmatmul.mubr.bf16.gmra.mrb[0].mxu0 %v2967
    %v4644 = vpop.f32.mrb[0].mxu0
    %v4645 = vadd.f32 %v4437, %v4644
    %v4646 = vpop.f32.mrb[0].mxu0
    %v4647 = vpop.f32.mrb[0].mxu0
    %v4648 = vadd.f32 %v4440, %v4647
    %v4649 = vpop.f32.mrb[0].mxu0
    %4650 = vmatprep.mubr.bf16.mxu0 %v2985
    %4651 = vmatmul.mubr.bf16.gmra.mrb[0].mxu0 %v2984
    %v4652 = vpop.f32.mrb[0].mxu0
    %v4653 = vadd.f32 %v4445, %v4652
    %v4654 = vpop.f32.mrb[0].mxu0
    %v4655 = vpop.f32.mrb[0].mxu0
    %v4656 = vpop.f32.mrb[0].mxu0
    %4657 = vdwg.mxu0
    %4658 = vmatprep.subr.bf16.mxu0 0
    %4659 = vmatpush1.bf16.msra.mxu0 %v1466
    %4660 = vmatprep.subr.bf16.mxu0 0
    %4661 = vmatpush1.bf16.msra.mxu0 %v1467
    %4662 = vmatprep.subr.bf16.mxu0 0
    %4663 = vmatpush1.bf16.msra.mxu0 %v1468
    %4664 = vmatprep.subr.bf16.mxu0 0
    %4665 = vmatpush1.bf16.msra.mxu0 %v1469
    %4666 = vmatprep.subr.bf16.mxu0 0
    %4667 = vmatpush1.bf16.msra.mxu0 %v1470
    %4668 = vmatprep.subr.bf16.mxu0 0
    %4669 = vmatpush1.bf16.msra.mxu0 %v1471
    %4670 = vmatprep.subr.bf16.mxu0 0
    %4671 = vmatpush1.bf16.msra.mxu0 %v1472
    %4672 = vmatprep.subr.bf16.mxu0 0
    %4673 = vmatpush1.bf16.msra.mxu0 %v1473
    %4674 = vmatprep.subr.bf16.mxu0 0
    %4675 = vmatpush1.bf16.msra.mxu0 %v1474
    %4676 = vmatprep.subr.bf16.mxu0 0
    %4677 = vmatpush1.bf16.msra.mxu0 %v1475
    %4678 = vmatprep.subr.bf16.mxu0 0
    %4679 = vmatpush1.bf16.msra.mxu0 %v1476
    %4680 = vmatprep.subr.bf16.mxu0 0
    %4681 = vmatpush1.bf16.msra.mxu0 %v1477
    %4682 = vmatprep.subr.bf16.mxu0 0
    %4683 = vmatpush1.bf16.msra.mxu0 %v1478
    %4684 = vmatprep.subr.bf16.mxu0 0
    %4685 = vmatpush1.bf16.msra.mxu0 %v1479
    %4686 = vmatprep.subr.bf16.mxu0 0
    %4687 = vmatpush1.bf16.msra.mxu0 %v1480
    %4688 = vmatprep.subr.bf16.mxu0 0
    %4689 = vmatpush1.bf16.msra.mxu0 %v1481
    %4690 = vmatprep.mubr.bf16.mxu0 %v2630
    %4691 = vmatmul.mubr.bf16.gmra.mrb[0].mxu0 %v2629
    %v4692 = vpop.f32.mrb[0].mxu0
    %v4693 = vadd.f32 %v4485, %v4692
    %v4694 = vpop.f32.mrb[0].mxu0
    %v4695 = vpop.f32.mrb[0].mxu0
    %v4696 = vadd.f32 %v4488, %v4695
    %v4697 = vpop.f32.mrb[0].mxu0
    %4698 = vmatprep.mubr.bf16.mxu0 %v2647
    %4699 = vmatmul.mubr.bf16.gmra.mrb[0].mxu0 %v2646
    %v4700 = vpop.f32.mrb[0].mxu0
    %v4701 = vadd.f32 %v4493, %v4700
    %v4702 = vpop.f32.mrb[0].mxu0
    %v4703 = vpop.f32.mrb[0].mxu0
    %v4704 = vadd.f32 %v4496, %v4703
    %v4705 = vpop.f32.mrb[0].mxu0
    %4706 = vmatprep.mubr.bf16.mxu0 %v2664
    %4707 = vmatmul.mubr.bf16.gmra.mrb[0].mxu0 %v2663
    %v4708 = vpop.f32.mrb[0].mxu0
    %v4709 = vadd.f32 %v4501, %v4708
    %v4710 = vpop.f32.mrb[0].mxu0
    %v4711 = vpop.f32.mrb[0].mxu0
    %v4712 = vadd.f32 %v4504, %v4711
    %v4713 = vpop.f32.mrb[0].mxu0
    %4714 = vmatprep.mubr.bf16.mxu0 %v2681
    %4715 = vmatmul.mubr.bf16.gmra.mrb[0].mxu0 %v2680
    %v4716 = vpop.f32.mrb[0].mxu0
    %v4717 = vadd.f32 %v4509, %v4716
    %v4718 = vpop.f32.mrb[0].mxu0
    %v4719 = vpop.f32.mrb[0].mxu0
    %v4720 = vadd.f32 %v4512, %v4719
    %v4721 = vpop.f32.mrb[0].mxu0
    %4722 = vmatprep.mubr.bf16.mxu0 %v2698
    %4723 = vmatmul.mubr.bf16.gmra.mrb[0].mxu0 %v2697
    %v4724 = vpop.f32.mrb[0].mxu0
    %v4725 = vadd.f32 %v4517, %v4724
    %v4726 = vpop.f32.mrb[0].mxu0
    %v4727 = vpop.f32.mrb[0].mxu0
    %v4728 = vadd.f32 %v4520, %v4727
    %v4729 = vpop.f32.mrb[0].mxu0
    %4730 = vmatprep.mubr.bf16.mxu0 %v2715
    %4731 = vmatmul.mubr.bf16.gmra.mrb[0].mxu0 %v2714
    %v4732 = vpop.f32.mrb[0].mxu0
    %v4733 = vadd.f32 %v4525, %v4732
    %v4734 = vpop.f32.mrb[0].mxu0
    %v4735 = vpop.f32.mrb[0].mxu0
    %v4736 = vadd.f32 %v4528, %v4735
    %v4737 = vpop.f32.mrb[0].mxu0
    %4738 = vmatprep.mubr.bf16.mxu0 %v2732
    %4739 = vmatmul.mubr.bf16.gmra.mrb[0].mxu0 %v2731
    %v4740 = vpop.f32.mrb[0].mxu0
    %v4741 = vadd.f32 %v4533, %v4740
    %v4742 = vpop.f32.mrb[0].mxu0
    %v4743 = vpop.f32.mrb[0].mxu0
    %v4744 = vadd.f32 %v4536, %v4743
    %v4745 = vpop.f32.mrb[0].mxu0
    %4746 = vmatprep.mubr.bf16.mxu0 %v2749
    %4747 = vmatmul.mubr.bf16.gmra.mrb[0].mxu0 %v2748
    %v4748 = vpop.f32.mrb[0].mxu0
    %v4749 = vadd.f32 %v4541, %v4748
    %v4750 = vpop.f32.mrb[0].mxu0
    %v4751 = vpop.f32.mrb[0].mxu0
    %v4752 = vadd.f32 %v4544, %v4751
    %v4753 = vpop.f32.mrb[0].mxu0
    %4754 = vmatprep.mubr.bf16.mxu0 %v2766
    %4755 = vmatmul.mubr.bf16.gmra.mrb[0].mxu0 %v2765
    %v4756 = vpop.f32.mrb[0].mxu0
    %v4757 = vadd.f32 %v4549, %v4756
    %v4758 = vpop.f32.mrb[0].mxu0
    %v4759 = vpop.f32.mrb[0].mxu0
    %v4760 = vadd.f32 %v4552, %v4759
    %v4761 = vpop.f32.mrb[0].mxu0
    %4762 = vmatprep.mubr.bf16.mxu0 %v2783
    %4763 = vmatmul.mubr.bf16.gmra.mrb[0].mxu0 %v2782
    %v4764 = vpop.f32.mrb[0].mxu0
    %v4765 = vadd.f32 %v4557, %v4764
    %v4766 = vpop.f32.mrb[0].mxu0
    %v4767 = vpop.f32.mrb[0].mxu0
    %v4768 = vadd.f32 %v4560, %v4767
    %v4769 = vpop.f32.mrb[0].mxu0
    %4770 = vmatprep.mubr.bf16.mxu0 %v2800
    %4771 = vmatmul.mubr.bf16.gmra.mrb[0].mxu0 %v2799
    %v4772 = vpop.f32.mrb[0].mxu0
    %v4773 = vadd.f32 %v4565, %v4772
    %v4774 = vpop.f32.mrb[0].mxu0
    %v4775 = vpop.f32.mrb[0].mxu0
    %v4776 = vadd.f32 %v4568, %v4775
    %v4777 = vpop.f32.mrb[0].mxu0
    %4778 = vmatprep.mubr.bf16.mxu0 %v2817
    %4779 = vmatmul.mubr.bf16.gmra.mrb[0].mxu0 %v2816
    %v4780 = vpop.f32.mrb[0].mxu0
    %v4781 = vadd.f32 %v4573, %v4780
    %v4782 = vpop.f32.mrb[0].mxu0
    %v4783 = vpop.f32.mrb[0].mxu0
    %v4784 = vadd.f32 %v4576, %v4783
    %v4785 = vpop.f32.mrb[0].mxu0
    %4786 = vmatprep.mubr.bf16.mxu0 %v2834
    %4787 = vmatmul.mubr.bf16.gmra.mrb[0].mxu0 %v2833
    %v4788 = vpop.f32.mrb[0].mxu0
    %v4789 = vadd.f32 %v4581, %v4788
    %v4790 = vpop.f32.mrb[0].mxu0
    %v4791 = vpop.f32.mrb[0].mxu0
    %v4792 = vadd.f32 %v4584, %v4791
    %v4793 = vpop.f32.mrb[0].mxu0
    %4794 = vmatprep.mubr.bf16.mxu0 %v2851
    %4795 = vmatmul.mubr.bf16.gmra.mrb[0].mxu0 %v2850
    %v4796 = vpop.f32.mrb[0].mxu0
    %v4797 = vadd.f32 %v4589, %v4796
    %v4798 = vpop.f32.mrb[0].mxu0
    %v4799 = vpop.f32.mrb[0].mxu0
    %v4800 = vadd.f32 %v4592, %v4799
    %v4801 = vpop.f32.mrb[0].mxu0
    %4802 = vmatprep.mubr.bf16.mxu0 %v2868
    %4803 = vmatmul.mubr.bf16.gmra.mrb[0].mxu0 %v2867
    %v4804 = vpop.f32.mrb[0].mxu0
    %v4805 = vadd.f32 %v4597, %v4804
    %v4806 = vpop.f32.mrb[0].mxu0
    %v4807 = vpop.f32.mrb[0].mxu0
    %v4808 = vadd.f32 %v4600, %v4807
    %v4809 = vpop.f32.mrb[0].mxu0
    %4810 = vmatprep.mubr.bf16.mxu0 %v2885
    %4811 = vmatmul.mubr.bf16.gmra.mrb[0].mxu0 %v2884
    %v4812 = vpop.f32.mrb[0].mxu0
    %v4813 = vadd.f32 %v4605, %v4812
    %v4814 = vpop.f32.mrb[0].mxu0
    %v4815 = vpop.f32.mrb[0].mxu0
    %v4816 = vadd.f32 %v4608, %v4815
    %v4817 = vpop.f32.mrb[0].mxu0
    %4818 = vmatprep.mubr.bf16.mxu0 %v2902
    %4819 = vmatmul.mubr.bf16.gmra.mrb[0].mxu0 %v2901
    %v4820 = vpop.f32.mrb[0].mxu0
    %v4821 = vadd.f32 %v4613, %v4820
    %v4822 = vpop.f32.mrb[0].mxu0
    %v4823 = vpop.f32.mrb[0].mxu0
    %v4824 = vadd.f32 %v4616, %v4823
    %v4825 = vpop.f32.mrb[0].mxu0
    %4826 = vmatprep.mubr.bf16.mxu0 %v2919
    %4827 = vmatmul.mubr.bf16.gmra.mrb[0].mxu0 %v2918
    %v4828 = vpop.f32.mrb[0].mxu0
    %v4829 = vadd.f32 %v4621, %v4828
    %v4830 = vpop.f32.mrb[0].mxu0
    %v4831 = vpop.f32.mrb[0].mxu0
    %v4832 = vadd.f32 %v4624, %v4831
    %v4833 = vpop.f32.mrb[0].mxu0
    %4834 = vmatprep.mubr.bf16.mxu0 %v2936
    %4835 = vmatmul.mubr.bf16.gmra.mrb[0].mxu0 %v2935
    %v4836 = vpop.f32.mrb[0].mxu0
    %v4837 = vadd.f32 %v4629, %v4836
    %v4838 = vpop.f32.mrb[0].mxu0
    %v4839 = vpop.f32.mrb[0].mxu0
    %v4840 = vadd.f32 %v4632, %v4839
    %v4841 = vpop.f32.mrb[0].mxu0
    %4842 = vmatprep.mubr.bf16.mxu0 %v2953
    %4843 = vmatmul.mubr.bf16.gmra.mrb[0].mxu0 %v2952
    %v4844 = vpop.f32.mrb[0].mxu0
    %v4845 = vadd.f32 %v4637, %v4844
    %v4846 = vpop.f32.mrb[0].mxu0
    %v4847 = vpop.f32.mrb[0].mxu0
    %v4848 = vadd.f32 %v4640, %v4847
    %v4849 = vpop.f32.mrb[0].mxu0
    %4850 = vmatprep.mubr.bf16.mxu0 %v2970
    %4851 = vmatmul.mubr.bf16.gmra.mrb[0].mxu0 %v2969
    %v4852 = vpop.f32.mrb[0].mxu0
    %v4853 = vadd.f32 %v4645, %v4852
    %v4854 = vpop.f32.mrb[0].mxu0
    %v4855 = vpop.f32.mrb[0].mxu0
    %v4856 = vadd.f32 %v4648, %v4855
    %v4857 = vpop.f32.mrb[0].mxu0
    %4858 = vmatprep.mubr.bf16.mxu0 %v2987
    %4859 = vmatmul.mubr.bf16.gmra.mrb[0].mxu0 %v2986
    %v4860 = vpop.f32.mrb[0].mxu0
    %v4861 = vadd.f32 %v4653, %v4860
    %v4862 = vpop.f32.mrb[0].mxu0
    %v4863 = vpop.f32.mrb[0].mxu0
    %v4864 = vpop.f32.mrb[0].mxu0
    %4865 = vdwg.mxu0
    %4866 = vmatprep.subr.bf16.mxu0 0
    %4867 = vmatpush1.bf16.msra.mxu0 %v1482
    %4868 = vmatprep.subr.bf16.mxu0 0
    %4869 = vmatpush1.bf16.msra.mxu0 %v1483
    %4870 = vmatprep.subr.bf16.mxu0 0
    %4871 = vmatpush1.bf16.msra.mxu0 %v1484
    %4872 = vmatprep.subr.bf16.mxu0 0
    %4873 = vmatpush1.bf16.msra.mxu0 %v1485
    %4874 = vmatprep.subr.bf16.mxu0 0
    %4875 = vmatpush1.bf16.msra.mxu0 %v1486
    %4876 = vmatprep.subr.bf16.mxu0 0
    %4877 = vmatpush1.bf16.msra.mxu0 %v1487
    %4878 = vmatprep.subr.bf16.mxu0 0
    %4879 = vmatpush1.bf16.msra.mxu0 %v1488
    %4880 = vmatprep.subr.bf16.mxu0 0
    %4881 = vmatpush1.bf16.msra.mxu0 %v1489
    %4882 = vmatprep.subr.bf16.mxu0 0
    %4883 = vmatpush1.bf16.msra.mxu0 %v1490
    %4884 = vmatprep.subr.bf16.mxu0 0
    %4885 = vmatpush1.bf16.msra.mxu0 %v1491
    %4886 = vmatprep.subr.bf16.mxu0 0
    %4887 = vmatpush1.bf16.msra.mxu0 %v1492
    %4888 = vmatprep.subr.bf16.mxu0 0
    %4889 = vmatpush1.bf16.msra.mxu0 %v1493
    %4890 = vmatprep.subr.bf16.mxu0 0
    %4891 = vmatpush1.bf16.msra.mxu0 %v1494
    %4892 = vmatprep.subr.bf16.mxu0 0
    %4893 = vmatpush1.bf16.msra.mxu0 %v1495
    %4894 = vmatprep.subr.bf16.mxu0 0
    %4895 = vmatpush1.bf16.msra.mxu0 %v1496
    %4896 = vmatprep.subr.bf16.mxu0 0
    %4897 = vmatpush1.bf16.msra.mxu0 %v1497
    %4898 = vmatprep.mubr.bf16.mxu0 %v2632
    %4899 = vmatmul.mubr.bf16.gmra.mrb[0].mxu0 %v2631
    %v4900 = vpop.f32.mrb[0].mxu0
    %v4901 = vadd.f32 %v4693, %v4900
    %v4902 = vpop.f32.mrb[0].mxu0
    %v4903 = vpop.f32.mrb[0].mxu0
    %v4904 = vadd.f32 %v4696, %v4903
    %v4905 = vpop.f32.mrb[0].mxu0
    %4906 = vmatprep.mubr.bf16.mxu0 %v2649
    %4907 = vmatmul.mubr.bf16.gmra.mrb[0].mxu0 %v2648
    %v4908 = vpop.f32.mrb[0].mxu0
    %v4909 = vadd.f32 %v4701, %v4908
    %v4910 = vpop.f32.mrb[0].mxu0
    %v4911 = vpop.f32.mrb[0].mxu0
    %v4912 = vadd.f32 %v4704, %v4911
    %v4913 = vpop.f32.mrb[0].mxu0
    %4914 = vmatprep.mubr.bf16.mxu0 %v2666
    %4915 = vmatmul.mubr.bf16.gmra.mrb[0].mxu0 %v2665
    %v4916 = vpop.f32.mrb[0].mxu0
    %v4917 = vadd.f32 %v4709, %v4916
    %v4918 = vpop.f32.mrb[0].mxu0
    %v4919 = vpop.f32.mrb[0].mxu0
    %v4920 = vadd.f32 %v4712, %v4919
    %v4921 = vpop.f32.mrb[0].mxu0
    %4922 = vmatprep.mubr.bf16.mxu0 %v2683
    %4923 = vmatmul.mubr.bf16.gmra.mrb[0].mxu0 %v2682
    %v4924 = vpop.f32.mrb[0].mxu0
    %v4925 = vadd.f32 %v4717, %v4924
    %v4926 = vpop.f32.mrb[0].mxu0
    %v4927 = vpop.f32.mrb[0].mxu0
    %v4928 = vadd.f32 %v4720, %v4927
    %v4929 = vpop.f32.mrb[0].mxu0
    %4930 = vmatprep.mubr.bf16.mxu0 %v2700
    %4931 = vmatmul.mubr.bf16.gmra.mrb[0].mxu0 %v2699
    %v4932 = vpop.f32.mrb[0].mxu0
    %v4933 = vadd.f32 %v4725, %v4932
    %v4934 = vpop.f32.mrb[0].mxu0
    %v4935 = vpop.f32.mrb[0].mxu0
    %v4936 = vadd.f32 %v4728, %v4935
    %v4937 = vpop.f32.mrb[0].mxu0
    %4938 = vmatprep.mubr.bf16.mxu0 %v2717
    %4939 = vmatmul.mubr.bf16.gmra.mrb[0].mxu0 %v2716
    %v4940 = vpop.f32.mrb[0].mxu0
    %v4941 = vadd.f32 %v4733, %v4940
    %v4942 = vpop.f32.mrb[0].mxu0
    %v4943 = vpop.f32.mrb[0].mxu0
    %v4944 = vadd.f32 %v4736, %v4943
    %v4945 = vpop.f32.mrb[0].mxu0
    %4946 = vmatprep.mubr.bf16.mxu0 %v2734
    %4947 = vmatmul.mubr.bf16.gmra.mrb[0].mxu0 %v2733
    %v4948 = vpop.f32.mrb[0].mxu0
    %v4949 = vadd.f32 %v4741, %v4948
    %v4950 = vpop.f32.mrb[0].mxu0
    %v4951 = vpop.f32.mrb[0].mxu0
    %v4952 = vadd.f32 %v4744, %v4951
    %v4953 = vpop.f32.mrb[0].mxu0
    %4954 = vmatprep.mubr.bf16.mxu0 %v2751
    %4955 = vmatmul.mubr.bf16.gmra.mrb[0].mxu0 %v2750
    %v4956 = vpop.f32.mrb[0].mxu0
    %v4957 = vadd.f32 %v4749, %v4956
    %v4958 = vpop.f32.mrb[0].mxu0
    %v4959 = vpop.f32.mrb[0].mxu0
    %v4960 = vadd.f32 %v4752, %v4959
    %v4961 = vpop.f32.mrb[0].mxu0
    %4962 = vmatprep.mubr.bf16.mxu0 %v2768
    %4963 = vmatmul.mubr.bf16.gmra.mrb[0].mxu0 %v2767
    %v4964 = vpop.f32.mrb[0].mxu0
    %v4965 = vadd.f32 %v4757, %v4964
    %v4966 = vpop.f32.mrb[0].mxu0
    %v4967 = vpop.f32.mrb[0].mxu0
    %v4968 = vadd.f32 %v4760, %v4967
    %v4969 = vpop.f32.mrb[0].mxu0
    %4970 = vmatprep.mubr.bf16.mxu0 %v2785
    %4971 = vmatmul.mubr.bf16.gmra.mrb[0].mxu0 %v2784
    %v4972 = vpop.f32.mrb[0].mxu0
    %v4973 = vadd.f32 %v4765, %v4972
    %v4974 = vpop.f32.mrb[0].mxu0
    %v4975 = vpop.f32.mrb[0].mxu0
    %v4976 = vadd.f32 %v4768, %v4975
    %v4977 = vpop.f32.mrb[0].mxu0
    %4978 = vmatprep.mubr.bf16.mxu0 %v2802
    %4979 = vmatmul.mubr.bf16.gmra.mrb[0].mxu0 %v2801
    %v4980 = vpop.f32.mrb[0].mxu0
    %v4981 = vadd.f32 %v4773, %v4980
    %v4982 = vpop.f32.mrb[0].mxu0
    %v4983 = vpop.f32.mrb[0].mxu0
    %v4984 = vadd.f32 %v4776, %v4983
    %v4985 = vpop.f32.mrb[0].mxu0
    %4986 = vmatprep.mubr.bf16.mxu0 %v2819
    %4987 = vmatmul.mubr.bf16.gmra.mrb[0].mxu0 %v2818
    %v4988 = vpop.f32.mrb[0].mxu0
    %v4989 = vadd.f32 %v4781, %v4988
    %v4990 = vpop.f32.mrb[0].mxu0
    %v4991 = vpop.f32.mrb[0].mxu0
    %v4992 = vadd.f32 %v4784, %v4991
    %v4993 = vpop.f32.mrb[0].mxu0
    %4994 = vmatprep.mubr.bf16.mxu0 %v2836
    %4995 = vmatmul.mubr.bf16.gmra.mrb[0].mxu0 %v2835
    %v4996 = vpop.f32.mrb[0].mxu0
    %v4997 = vadd.f32 %v4789, %v4996
    %v4998 = vpop.f32.mrb[0].mxu0
    %v4999 = vpop.f32.mrb[0].mxu0
    %v5000 = vadd.f32 %v4792, %v4999
    %v5001 = vpop.f32.mrb[0].mxu0
    %5002 = vmatprep.mubr.bf16.mxu0 %v2853
    %5003 = vmatmul.mubr.bf16.gmra.mrb[0].mxu0 %v2852
    %v5004 = vpop.f32.mrb[0].mxu0
    %v5005 = vadd.f32 %v4797, %v5004
    %v5006 = vpop.f32.mrb[0].mxu0
    %v5007 = vpop.f32.mrb[0].mxu0
    %v5008 = vadd.f32 %v4800, %v5007
    %v5009 = vpop.f32.mrb[0].mxu0
    %5010 = vmatprep.mubr.bf16.mxu0 %v2870
    %5011 = vmatmul.mubr.bf16.gmra.mrb[0].mxu0 %v2869
    %v5012 = vpop.f32.mrb[0].mxu0
    %v5013 = vadd.f32 %v4805, %v5012
    %v5014 = vpop.f32.mrb[0].mxu0
    %v5015 = vpop.f32.mrb[0].mxu0
    %v5016 = vadd.f32 %v4808, %v5015
    %v5017 = vpop.f32.mrb[0].mxu0
    %5018 = vmatprep.mubr.bf16.mxu0 %v2887
    %5019 = vmatmul.mubr.bf16.gmra.mrb[0].mxu0 %v2886
    %v5020 = vpop.f32.mrb[0].mxu0
    %v5021 = vadd.f32 %v4813, %v5020
    %v5022 = vpop.f32.mrb[0].mxu0
    %v5023 = vpop.f32.mrb[0].mxu0
    %v5024 = vadd.f32 %v4816, %v5023
    %v5025 = vpop.f32.mrb[0].mxu0
    %5026 = vmatprep.mubr.bf16.mxu0 %v2904
    %5027 = vmatmul.mubr.bf16.gmra.mrb[0].mxu0 %v2903
    %v5028 = vpop.f32.mrb[0].mxu0
    %v5029 = vadd.f32 %v4821, %v5028
    %v5030 = vpop.f32.mrb[0].mxu0
    %v5031 = vpop.f32.mrb[0].mxu0
    %v5032 = vadd.f32 %v4824, %v5031
    %v5033 = vpop.f32.mrb[0].mxu0
    %5034 = vmatprep.mubr.bf16.mxu0 %v2921
    %5035 = vmatmul.mubr.bf16.gmra.mrb[0].mxu0 %v2920
    %v5036 = vpop.f32.mrb[0].mxu0
    %v5037 = vadd.f32 %v4829, %v5036
    %v5038 = vpop.f32.mrb[0].mxu0
    %v5039 = vpop.f32.mrb[0].mxu0
    %v5040 = vadd.f32 %v4832, %v5039
    %v5041 = vpop.f32.mrb[0].mxu0
    %5042 = vmatprep.mubr.bf16.mxu0 %v2938
    %5043 = vmatmul.mubr.bf16.gmra.mrb[0].mxu0 %v2937
    %v5044 = vpop.f32.mrb[0].mxu0
    %v5045 = vadd.f32 %v4837, %v5044
    %v5046 = vpop.f32.mrb[0].mxu0
    %v5047 = vpop.f32.mrb[0].mxu0
    %v5048 = vadd.f32 %v4840, %v5047
    %v5049 = vpop.f32.mrb[0].mxu0
    %5050 = vmatprep.mubr.bf16.mxu0 %v2955
    %5051 = vmatmul.mubr.bf16.gmra.mrb[0].mxu0 %v2954
    %v5052 = vpop.f32.mrb[0].mxu0
    %v5053 = vadd.f32 %v4845, %v5052
    %v5054 = vpop.f32.mrb[0].mxu0
    %v5055 = vpop.f32.mrb[0].mxu0
    %v5056 = vadd.f32 %v4848, %v5055
    %v5057 = vpop.f32.mrb[0].mxu0
    %5058 = vmatprep.mubr.bf16.mxu0 %v2972
    %5059 = vmatmul.mubr.bf16.gmra.mrb[0].mxu0 %v2971
    %v5060 = vpop.f32.mrb[0].mxu0
    %v5061 = vadd.f32 %v4853, %v5060
    %v5062 = vpop.f32.mrb[0].mxu0
    %v5063 = vpop.f32.mrb[0].mxu0
    %v5064 = vadd.f32 %v4856, %v5063
    %v5065 = vpop.f32.mrb[0].mxu0
    %5066 = vmatprep.mubr.bf16.mxu0 %v2989
    %5067 = vmatmul.mubr.bf16.gmra.mrb[0].mxu0 %v2988
    %v5068 = vpop.f32.mrb[0].mxu0
    %v5069 = vadd.f32 %v4861, %v5068
    %v5070 = vpop.f32.mrb[0].mxu0
    %v5071 = vpop.f32.mrb[0].mxu0
    %v5072 = vpop.f32.mrb[0].mxu0
    %5073 = vdwg.mxu0
    %5074 = vmatprep.subr.bf16.mxu0 0
    %5075 = vmatpush1.bf16.msra.mxu0 %v1498
    %5076 = vmatprep.subr.bf16.mxu0 0
    %5077 = vmatpush1.bf16.msra.mxu0 0
    %5078 = vmatprep.subr.bf16.mxu0 0
    %5079 = vmatpush1.bf16.msra.mxu0 0
    %5080 = vmatprep.subr.bf16.mxu0 0
    %5081 = vmatpush1.bf16.msra.mxu0 0
    %5082 = vmatprep.subr.bf16.mxu0 0
    %5083 = vmatpush1.bf16.msra.mxu0 0
    %5084 = vmatprep.subr.bf16.mxu0 0
    %5085 = vmatpush1.bf16.msra.mxu0 0
    %5086 = vmatprep.subr.bf16.mxu0 0
    %5087 = vmatpush1.bf16.msra.mxu0 0
    %5088 = vmatprep.subr.bf16.mxu0 0
    %5089 = vmatpush1.bf16.msra.mxu0 0
    %5090 = vmatprep.subr.bf16.mxu0 0
    %5091 = vmatpush1.bf16.msra.mxu0 0
    %5092 = vmatprep.subr.bf16.mxu0 0
    %5093 = vmatpush1.bf16.msra.mxu0 0
    %5094 = vmatprep.subr.bf16.mxu0 0
    %5095 = vmatpush1.bf16.msra.mxu0 0
    %5096 = vmatprep.subr.bf16.mxu0 0
    %5097 = vmatpush1.bf16.msra.mxu0 0
    %5098 = vmatprep.subr.bf16.mxu0 0
    %5099 = vmatpush1.bf16.msra.mxu0 0
    %5100 = vmatprep.subr.bf16.mxu0 0
    %5101 = vmatpush1.bf16.msra.mxu0 0
    %5102 = vmatprep.subr.bf16.mxu0 0
    %5103 = vmatpush1.bf16.msra.mxu0 0
    %5104 = vmatprep.subr.bf16.mxu0 0
    %5105 = vmatpush1.bf16.msra.mxu0 0
    %5106 = vmatprep.mubr.bf16.mxu0 0
    %5107 = vmatmul.mubr.bf16.gmra.mrb[0].mxu0 %v3345
    %v5108 = vpop.f32.mrb[0].mxu0
    %v5109 = vadd.f32 %v4901, %v5108
    %v5110 = vpop.f32.mrb[0].mxu0
    %v5111 = vpop.f32.mrb[0].mxu0
    %v5112 = vadd.f32 %v4904, %v5111
    %v5113 = vpop.f32.mrb[0].mxu0
    %5114 = vmatprep.mubr.bf16.mxu0 0
    %5115 = vmatmul.mubr.bf16.gmra.mrb[0].mxu0 %v3348
    %v5116 = vpop.f32.mrb[0].mxu0
    %v5117 = vadd.f32 %v4909, %v5116
    %v5118 = vpop.f32.mrb[0].mxu0
    %v5119 = vpop.f32.mrb[0].mxu0
    %v5120 = vadd.f32 %v4912, %v5119
    %v5121 = vpop.f32.mrb[0].mxu0
    %5122 = vmatprep.mubr.bf16.mxu0 0
    %5123 = vmatmul.mubr.bf16.gmra.mrb[0].mxu0 %v3351
    %v5124 = vpop.f32.mrb[0].mxu0
    %v5125 = vadd.f32 %v4917, %v5124
    %v5126 = vpop.f32.mrb[0].mxu0
    %v5127 = vpop.f32.mrb[0].mxu0
    %v5128 = vadd.f32 %v4920, %v5127
    %v5129 = vpop.f32.mrb[0].mxu0
    %5130 = vmatprep.mubr.bf16.mxu0 0
    %5131 = vmatmul.mubr.bf16.gmra.mrb[0].mxu0 %v3354
    %v5132 = vpop.f32.mrb[0].mxu0
    %v5133 = vadd.f32 %v4925, %v5132
    %v5134 = vpop.f32.mrb[0].mxu0
    %v5135 = vpop.f32.mrb[0].mxu0
    %v5136 = vadd.f32 %v4928, %v5135
    %v5137 = vpop.f32.mrb[0].mxu0
    %5138 = vmatprep.mubr.bf16.mxu0 0
    %5139 = vmatmul.mubr.bf16.gmra.mrb[0].mxu0 %v3357
    %v5140 = vpop.f32.mrb[0].mxu0
    %v5141 = vadd.f32 %v4933, %v5140
    %v5142 = vpop.f32.mrb[0].mxu0
    %v5143 = vpop.f32.mrb[0].mxu0
    %v5144 = vadd.f32 %v4936, %v5143
    %v5145 = vpop.f32.mrb[0].mxu0
    %5146 = vmatprep.mubr.bf16.mxu0 0
    %5147 = vmatmul.mubr.bf16.gmra.mrb[0].mxu0 %v3360
    %v5148 = vpop.f32.mrb[0].mxu0
    %v5149 = vadd.f32 %v4941, %v5148
    %v5150 = vpop.f32.mrb[0].mxu0
    %v5151 = vpop.f32.mrb[0].mxu0
    %v5152 = vadd.f32 %v4944, %v5151
    %v5153 = vpop.f32.mrb[0].mxu0
    %5154 = vmatprep.mubr.bf16.mxu0 0
    %5155 = vmatmul.mubr.bf16.gmra.mrb[0].mxu0 %v3363
    %v5156 = vpop.f32.mrb[0].mxu0
    %v5157 = vadd.f32 %v4949, %v5156
    %v5158 = vpop.f32.mrb[0].mxu0
    %v5159 = vpop.f32.mrb[0].mxu0
    %v5160 = vadd.f32 %v4952, %v5159
    %v5161 = vpop.f32.mrb[0].mxu0
    %5162 = vmatprep.mubr.bf16.mxu0 0
    %5163 = vmatmul.mubr.bf16.gmra.mrb[0].mxu0 %v3366
    %v5164 = vpop.f32.mrb[0].mxu0
    %v5165 = vadd.f32 %v4957, %v5164
    %v5166 = vpop.f32.mrb[0].mxu0
    %v5167 = vpop.f32.mrb[0].mxu0
    %v5168 = vadd.f32 %v4960, %v5167
    %v5169 = vpop.f32.mrb[0].mxu0
    %5170 = vmatprep.mubr.bf16.mxu0 0
    %5171 = vmatmul.mubr.bf16.gmra.mrb[0].mxu0 %v3369
    %v5172 = vpop.f32.mrb[0].mxu0
    %v5173 = vadd.f32 %v4965, %v5172
    %v5174 = vpop.f32.mrb[0].mxu0
    %v5175 = vpop.f32.mrb[0].mxu0
    %v5176 = vadd.f32 %v4968, %v5175
    %v5177 = vpop.f32.mrb[0].mxu0
    %5178 = vmatprep.mubr.bf16.mxu0 0
    %5179 = vmatmul.mubr.bf16.gmra.mrb[0].mxu0 %v3372
    %v5180 = vpop.f32.mrb[0].mxu0
    %v5181 = vadd.f32 %v4973, %v5180
    %v5182 = vpop.f32.mrb[0].mxu0
    %v5183 = vpop.f32.mrb[0].mxu0
    %v5184 = vadd.f32 %v4976, %v5183
    %v5185 = vpop.f32.mrb[0].mxu0
    %5186 = vmatprep.mubr.bf16.mxu0 0
    %5187 = vmatmul.mubr.bf16.gmra.mrb[0].mxu0 %v3375
    %v5188 = vpop.f32.mrb[0].mxu0
    %v5189 = vadd.f32 %v4981, %v5188
    %v5190 = vpop.f32.mrb[0].mxu0
    %v5191 = vpop.f32.mrb[0].mxu0
    %v5192 = vadd.f32 %v4984, %v5191
    %v5193 = vpop.f32.mrb[0].mxu0
    %5194 = vmatprep.mubr.bf16.mxu0 0
    %5195 = vmatmul.mubr.bf16.gmra.mrb[0].mxu0 %v3378
    %v5196 = vpop.f32.mrb[0].mxu0
    %v5197 = vadd.f32 %v4989, %v5196
    %v5198 = vpop.f32.mrb[0].mxu0
    %v5199 = vpop.f32.mrb[0].mxu0
    %v5200 = vadd.f32 %v4992, %v5199
    %v5201 = vpop.f32.mrb[0].mxu0
    %5202 = vmatprep.mubr.bf16.mxu0 0
    %5203 = vmatmul.mubr.bf16.gmra.mrb[0].mxu0 %v3381
    %v5204 = vpop.f32.mrb[0].mxu0
    %v5205 = vadd.f32 %v4997, %v5204
    %v5206 = vpop.f32.mrb[0].mxu0
    %v5207 = vpop.f32.mrb[0].mxu0
    %v5208 = vadd.f32 %v5000, %v5207
    %v5209 = vpop.f32.mrb[0].mxu0
    %5210 = vmatprep.mubr.bf16.mxu0 0
    %5211 = vmatmul.mubr.bf16.gmra.mrb[0].mxu0 %v3384
    %v5212 = vpop.f32.mrb[0].mxu0
    %v5213 = vadd.f32 %v5005, %v5212
    %v5214 = vpop.f32.mrb[0].mxu0
    %v5215 = vpop.f32.mrb[0].mxu0
    %v5216 = vadd.f32 %v5008, %v5215
    %v5217 = vpop.f32.mrb[0].mxu0
    %5218 = vmatprep.mubr.bf16.mxu0 0
    %5219 = vmatmul.mubr.bf16.gmra.mrb[0].mxu0 %v3387
    %v5220 = vpop.f32.mrb[0].mxu0
    %v5221 = vadd.f32 %v5013, %v5220
    %v5222 = vpop.f32.mrb[0].mxu0
    %v5223 = vpop.f32.mrb[0].mxu0
    %v5224 = vadd.f32 %v5016, %v5223
    %v5225 = vpop.f32.mrb[0].mxu0
    %5226 = vmatprep.mubr.bf16.mxu0 0
    %5227 = vmatmul.mubr.bf16.gmra.mrb[0].mxu0 %v3390
    %v5228 = vpop.f32.mrb[0].mxu0
    %v5229 = vadd.f32 %v5021, %v5228
    %v5230 = vpop.f32.mrb[0].mxu0
    %v5231 = vpop.f32.mrb[0].mxu0
    %v5232 = vadd.f32 %v5024, %v5231
    %v5233 = vpop.f32.mrb[0].mxu0
    %5234 = vmatprep.mubr.bf16.mxu0 0
    %5235 = vmatmul.mubr.bf16.gmra.mrb[0].mxu0 %v3393
    %v5236 = vpop.f32.mrb[0].mxu0
    %v5237 = vadd.f32 %v5029, %v5236
    %v5238 = vpop.f32.mrb[0].mxu0
    %v5239 = vpop.f32.mrb[0].mxu0
    %v5240 = vadd.f32 %v5032, %v5239
    %v5241 = vpop.f32.mrb[0].mxu0
    %5242 = vmatprep.mubr.bf16.mxu0 0
    %5243 = vmatmul.mubr.bf16.gmra.mrb[0].mxu0 %v3396
    %v5244 = vpop.f32.mrb[0].mxu0
    %v5245 = vadd.f32 %v5037, %v5244
    %v5246 = vpop.f32.mrb[0].mxu0
    %v5247 = vpop.f32.mrb[0].mxu0
    %v5248 = vadd.f32 %v5040, %v5247
    %v5249 = vpop.f32.mrb[0].mxu0
    %5250 = vmatprep.mubr.bf16.mxu0 0
    %5251 = vmatmul.mubr.bf16.gmra.mrb[0].mxu0 %v3399
    %v5252 = vpop.f32.mrb[0].mxu0
    %v5253 = vadd.f32 %v5045, %v5252
    %v5254 = vpop.f32.mrb[0].mxu0
    %v5255 = vpop.f32.mrb[0].mxu0
    %v5256 = vadd.f32 %v5048, %v5255
    %v5257 = vpop.f32.mrb[0].mxu0
    %5258 = vmatprep.mubr.bf16.mxu0 0
    %5259 = vmatmul.mubr.bf16.gmra.mrb[0].mxu0 %v3402
    %v5260 = vpop.f32.mrb[0].mxu0
    %v5261 = vadd.f32 %v5053, %v5260
    %v5262 = vpop.f32.mrb[0].mxu0
    %v5263 = vpop.f32.mrb[0].mxu0
    %v5264 = vadd.f32 %v5056, %v5263
    %v5265 = vpop.f32.mrb[0].mxu0
    %5266 = vmatprep.mubr.bf16.mxu0 0
    %5267 = vmatmul.mubr.bf16.gmra.mrb[0].mxu0 %v3405
    %v5268 = vpop.f32.mrb[0].mxu0
    %v5269 = vadd.f32 %v5061, %v5268
    %v5270 = vpop.f32.mrb[0].mxu0
    %v5271 = vpop.f32.mrb[0].mxu0
    %v5272 = vadd.f32 %v5064, %v5271
    %v5273 = vpop.f32.mrb[0].mxu0
    %5274 = vmatprep.mubr.bf16.mxu0 0
    %5275 = vmatmul.mubr.bf16.gmra.mrb[0].mxu0 %v3408
    %v5276 = vpop.f32.mrb[0].mxu0
    %v5277 = vadd.f32 %v5069, %v5276
    %v5278 = vpop.f32.mrb[0].mxu0
    %v5279 = vpop.f32.mrb[0].mxu0
    %v5280 = vpop.f32.mrb[0].mxu0
    %5281 = vdwg.mxu0
    %vm5282 = vcmask 400384
    %5283 = vst.msk [vmem:[%s3] sm:$0xff] %vm5282, %v5109
    %5284 = vst.msk [vmem:[%s3 + $0x8] sm:$0xff] %vm5282, %v5112
    %5285 = vst.msk [vmem:[%s3 + $0x10] sm:$0xff] %vm5282, %v5117
    %5286 = vst.msk [vmem:[%s3 + $0x18] sm:$0xff] %vm5282, %v5120
    %5287 = vst.msk [vmem:[%s3 + $0x20] sm:$0xff] %vm5282, %v5125
    %5288 = vst.msk [vmem:[%s3 + $0x28] sm:$0xff] %vm5282, %v5128
    %5289 = vst.msk [vmem:[%s3 + $0x30] sm:$0xff] %vm5282, %v5133
    %5290 = vst.msk [vmem:[%s3 + $0x38] sm:$0xff] %vm5282, %v5136
    %5291 = vst.msk [vmem:[%s3 + $0x40] sm:$0xff] %vm5282, %v5141
    %5292 = vst.msk [vmem:[%s3 + $0x48] sm:$0xff] %vm5282, %v5144
    %5293 = vst.msk [vmem:[%s3 + $0x50] sm:$0xff] %vm5282, %v5149
    %5294 = vst.msk [vmem:[%s3 + $0x58] sm:$0xff] %vm5282, %v5152
    %5295 = vst.msk [vmem:[%s3 + $0x60] sm:$0xff] %vm5282, %v5157
    %5296 = vst.msk [vmem:[%s3 + $0x68] sm:$0xff] %vm5282, %v5160
    %5297 = vst.msk [vmem:[%s3 + $0x70] sm:$0xff] %vm5282, %v5165
    %5298 = vst.msk [vmem:[%s3 + $0x78] sm:$0xff] %vm5282, %v5168
    %5299 = vst.msk [vmem:[%s3 + $0x80] sm:$0xff] %vm5282, %v5173
    %5300 = vst.msk [vmem:[%s3 + $0x88] sm:$0xff] %vm5282, %v5176
    %5301 = vst.msk [vmem:[%s3 + $0x90] sm:$0xff] %vm5282, %v5181
    %5302 = vst.msk [vmem:[%s3 + $0x98] sm:$0xff] %vm5282, %v5184
    %5303 = vst.msk [vmem:[%s3 + $0xa0] sm:$0xff] %vm5282, %v5189
    %5304 = vst.msk [vmem:[%s3 + $0xa8] sm:$0xff] %vm5282, %v5192
    %5305 = vst.msk [vmem:[%s3 + $0xb0] sm:$0xff] %vm5282, %v5197
    %5306 = vst.msk [vmem:[%s3 + $0xb8] sm:$0xff] %vm5282, %v5200
    %5307 = vst.msk [vmem:[%s3 + $0xc0] sm:$0xff] %vm5282, %v5205
    %5308 = vst.msk [vmem:[%s3 + $0xc8] sm:$0xff] %vm5282, %v5208
    %5309 = vst.msk [vmem:[%s3 + $0xd0] sm:$0xff] %vm5282, %v5213
    %5310 = vst.msk [vmem:[%s3 + $0xd8] sm:$0xff] %vm5282, %v5216
    %5311 = vst.msk [vmem:[%s3 + $0xe0] sm:$0xff] %vm5282, %v5221
    %5312 = vst.msk [vmem:[%s3 + $0xe8] sm:$0xff] %vm5282, %v5224
    %5313 = vst.msk [vmem:[%s3 + $0xf0] sm:$0xff] %vm5282, %v5229
    %5314 = vst.msk [vmem:[%s3 + $0xf8] sm:$0xff] %vm5282, %v5232
    %5315 = vst.msk [vmem:[%s3 + $0x100] sm:$0xff] %vm5282, %v5237
    %5316 = vst.msk [vmem:[%s3 + $0x108] sm:$0xff] %vm5282, %v5240
    %5317 = vst.msk [vmem:[%s3 + $0x110] sm:$0xff] %vm5282, %v5245
    %5318 = vst.msk [vmem:[%s3 + $0x118] sm:$0xff] %vm5282, %v5248
    %5319 = vst.msk [vmem:[%s3 + $0x120] sm:$0xff] %vm5282, %v5253
    %5320 = vst.msk [vmem:[%s3 + $0x128] sm:$0xff] %vm5282, %v5256
    %5321 = vst.msk [vmem:[%s3 + $0x130] sm:$0xff] %vm5282, %v5261
    %5322 = vst.msk [vmem:[%s3 + $0x138] sm:$0xff] %vm5282, %v5264
    %5323 = vst.msk [vmem:[%s3 + $0x140] sm:$0xff] %vm5282, %v5269
    %5324 = vst.msk [vmem:[%s3 + $0x148] sm:$0xff] %vm5282, %v5272
    %5325 = vst.msk [vmem:[%s3 + $0x150] sm:$0xff] %vm5282, %v5277
    // Predicated region
    $region22: #{se_gate_pointwise_conv.1} parent=1 // pred_check
      _
    $region23: #{se_gate_pointwise_conv.1} parent=1 // pred_check_branch
      %5327 = sbr.rel (0) target = $region25
    $region24: #{se_gate_pointwise_conv.1} parent=1 // pred_region
      _
    $region25: #{se_gate_pointwise_conv.1} parent=1 // pred_fallthru
      _
    // Predicated region
    $region26: #{se_gate_pointwise_conv.1} parent=1 // pred_check
      _
    $region27: #{se_gate_pointwise_conv.1} parent=1 // pred_check_branch
      %5329 = sbr.rel (0) target = $region29
    $region28: #{se_gate_pointwise_conv.1} parent=1 // pred_region
      _
    $region29: #{se_gate_pointwise_conv.1} parent=1 // pred_fallthru
      _
    %5330 = vsyncpa [#allocation3], 1
    %5331 = vsyncpa [#allocation5], 1

</llo_original>
